<compile_context>
chip_gen: v6e
topology: v6e:2x2x1
jax: 0.10.0
libtpu: 0.0.40
codegen_flags: <defaults>
</compile_context>

<pallas_src>
import jax
import jax.numpy as jnp
from jax.experimental import pallas as pl
from jax.experimental.pallas import tpu as pltpu


_VMEM_LIMIT_BYTES = 32 * 1024 * 1024   # explicit; fits v5e/v6e/v7x scoped VMEM
_TM_TARGET = 512                       # keeps conv2 (K=400) blocks < ~4 MiB on v7x


def _compiler_params():
    return pltpu.CompilerParams(
        dimension_semantics=("parallel",),   # shard M-tiles across TCs (v7x)
        vmem_limit_bytes=_VMEM_LIMIT_BYTES,
    )


def _tile_m(M, target=_TM_TARGET):
    """Whole-array block if small (full-dim blocks are alignment-exempt),
    otherwise a fixed multiple-of-8 tile; Pallas masks the ragged last block."""
    return M if M <= target else target


# ---------------------------------------------------------------------------
# Pallas kernels
# ---------------------------------------------------------------------------
def _conv_relu_pool_kernel(p0_ref, p1_ref, p2_ref, p3_ref, w_ref, b_ref, o_ref):
    """Fused im2col-conv + bias + ReLU + 2x2/2 max-pool for one M-tile.

    p*_ref: (TM, K) bf16 patches; row r of every p* is the same pooled output
            pixel, the four refs are the four positions of its 2x2 window.
    w_ref : (K, O) bf16, b_ref: (1, O) f32, o_ref: (TM, O) bf16.
    The pool max is VPU work hidden under the MXU matmuls.
    """
    def conv(p_ref):
        acc = jnp.dot(p_ref[...], w_ref[...], preferred_element_type=jnp.float32)
        return jnp.maximum(acc + b_ref[...], 0.0)

    pooled = jnp.maximum(jnp.maximum(conv(p0_ref), conv(p1_ref)),
                         jnp.maximum(conv(p2_ref), conv(p3_ref)))
    o_ref[...] = pooled.astype(o_ref.dtype)


def _fc3_fused_kernel(x_ref, w1_ref, b1_ref, w2_ref, b2_ref, w3_ref, b3_ref,
                      o_ref):
    """Fused Linear(512,256) -> Linear(256,64) -> Linear(64,10 padded to 128).

    Intermediates stay in vregs/VMEM (no HBM round-trips, one launch); bf16
    MXU operands with f32 accumulation; the stored slab is 128 lanes wide.
    """
    h = jnp.dot(x_ref[...], w1_ref[...],
                preferred_element_type=jnp.float32) + b1_ref[...]
    h = jnp.dot(h.astype(w2_ref.dtype), w2_ref[...],
                preferred_element_type=jnp.float32) + b2_ref[...]
    h = jnp.dot(h.astype(w3_ref.dtype), w3_ref[...],
                preferred_element_type=jnp.float32) + b3_ref[...]
    o_ref[...] = h.astype(o_ref.dtype)


# ---------------------------------------------------------------------------
# Wrappers
# ---------------------------------------------------------------------------
def _im2col_pool_quadrants(x, kh, kw):
    """x: (B,H,W,C) NHWC 'valid' conv followed by 2x2/2 pool.

    Returns four patch matrices (one per pool-window position), each
    (B*Oh*Ow, K) with rows ordered (b, oh, ow) and columns ordered (kh, kw, C),
    K zero-padded up to a multiple of 8. Total bytes equal one full im2col;
    no post-conv strided slices are ever materialized."""
    B, H, W, C = x.shape
    Ho, Wo = H - kh + 1, W - kw + 1
    Oh, Ow = Ho // 2, Wo // 2
    n_taps = kh * kw
    pad_cols = (-(n_taps * C)) % 8
    assert pad_cols % C == 0
    pad_taps = pad_cols // C
    quads = []
    for dy in range(2):
        for dx in range(2):
            cols = []
            for i in range(kh):
                for j in range(kw):
                    cols.append(x[:, dy + i: dy + i + 2 * Oh: 2,
                                  dx + j: dx + j + 2 * Ow: 2, :])   # (B,Oh,Ow,C)
            for _ in range(pad_taps):
                cols.append(jnp.zeros_like(cols[0]))
            patches = jnp.stack(cols, axis=3)            # (B,Oh,Ow,taps+pad,C)
            quads.append(patches.reshape(B * Oh * Ow, (n_taps + pad_taps) * C))
    return quads, Oh, Ow, (n_taps + pad_taps) * C


def conv_relu_pool(x, w, b, *, kh=5, kw=5):
    """x: (B,H,W,C) bf16 -> (B,(H-kh+1)//2,(W-kw+1)//2,O) bf16, fused kernel."""
    B = x.shape[0]
    quads, Oh, Ow, K = _im2col_pool_quadrants(x, kh, kw)
    O = w.shape[1]
    M = B * Oh * Ow
    tm = _tile_m(M)
    out = pl.pallas_call(
        _conv_relu_pool_kernel,
        out_shape=jax.ShapeDtypeStruct((M, O), x.dtype),
        grid=(pl.cdiv(M, tm),),
        in_specs=[pl.BlockSpec((tm, K), lambda i: (i, 0))] * 4 + [
            pl.BlockSpec((K, O), lambda i: (0, 0)),     # weights: VMEM-resident
            pl.BlockSpec((1, O), lambda i: (0, 0)),
        ],
        out_specs=pl.BlockSpec((tm, O), lambda i: (i, 0)),
        compiler_params=_compiler_params(),
    )(*quads, w, b)
    return out.reshape(B, Oh, Ow, O)


def fc_stack(x, w1, b1, w2, b2, w3p, b3p, *, num_out):
    """x: (M, 512) bf16 -> logits (M, num_out) f32 via one fused 3-layer kernel."""
    M, K = x.shape
    tm = _tile_m(M)
    Np = w3p.shape[1]                                   # 128 (lane-dense store)
    out = pl.pallas_call(
        _fc3_fused_kernel,
        out_shape=jax.ShapeDtypeStruct((M, Np), jnp.float32),
        grid=(pl.cdiv(M, tm),),
        in_specs=[
            pl.BlockSpec((tm, K), lambda i: (i, 0)),
            pl.BlockSpec(w1.shape, lambda i: (0, 0)),
            pl.BlockSpec(b1.shape, lambda i: (0, 0)),
            pl.BlockSpec(w2.shape, lambda i: (0, 0)),
            pl.BlockSpec(b2.shape, lambda i: (0, 0)),
            pl.BlockSpec(w3p.shape, lambda i: (0, 0)),
            pl.BlockSpec(b3p.shape, lambda i: (0, 0)),
        ],
        out_specs=pl.BlockSpec((tm, Np), lambda i: (i, 0)),
        compiler_params=_compiler_params(),
    )(x, w1, b1, w2, b2, w3p, b3p)
    return out[:, :num_out]


# ---------------------------------------------------------------------------
# Parameters (synthetic, PyTorch shapes) and one-time re-layout
# ---------------------------------------------------------------------------
def init_params(key):
    ks = jax.random.split(key, 10)
    f32 = jnp.float32
    return {
        "conv1_w": 0.05 * jax.random.normal(ks[0], (16, 1, 5, 5), f32),
        "conv1_b": 0.05 * jax.random.normal(ks[1], (16,), f32),
        "conv2_w": 0.05 * jax.random.normal(ks[2], (32, 16, 5, 5), f32),
        "conv2_b": 0.05 * jax.random.normal(ks[3], (32,), f32),
        "fc1_w": 0.05 * jax.random.normal(ks[4], (256, 32 * 4 * 4), f32),
        "fc1_b": 0.05 * jax.random.normal(ks[5], (256,), f32),
        "fc2_w": 0.05 * jax.random.normal(ks[6], (64, 256), f32),
        "fc2_b": 0.05 * jax.random.normal(ks[7], (64,), f32),
        "fc3_w": 0.05 * jax.random.normal(ks[8], (10, 64), f32),
        "fc3_b": 0.05 * jax.random.normal(ks[9], (10,), f32),
    }


def prepare_params(p):
    """One-time (outside the jitted forward) weight re-layout: conv weights to
    (KH*KW*Cin, O) matmul layout with K zero-padded to x8; fc1 columns permuted
    from NCHW-flatten to NHWC-flatten order (removes the activation transpose);
    fc weights pre-transposed to (in,out) and cast to bf16; fc3 padded to 128
    output lanes; biases kept in f32 (added to the f32 MXU accumulator)."""
    bf16 = jnp.bfloat16

    def conv_w(w, k_pad):
        o, c, kh, kw = w.shape
        wm = w.transpose(2, 3, 1, 0).reshape(kh * kw * c, o)   # rows = (kh,kw,c)
        if k_pad > wm.shape[0]:
            wm = jnp.concatenate(
                [wm, jnp.zeros((k_pad - wm.shape[0], o), wm.dtype)], axis=0)
        return wm.astype(bf16)

    w1 = conv_w(p["conv1_w"], 32)      # K: 25 -> 32
    w2 = conv_w(p["conv2_w"], 400)     # K: 400 (already a multiple of 8)

    # fc1: reorder input features from PyTorch NCHW flatten (c,h,w) to our
    # NHWC flatten (h,w,c), then pre-transpose to (in, out).
    fw1 = p["fc1_w"].reshape(256, 32, 4, 4).transpose(0, 2, 3, 1).reshape(256, 512)
    fw1 = fw1.T.astype(bf16)                                    # (512, 256)
    fw2 = p["fc2_w"].T.astype(bf16)                             # (256, 64)
    fw3 = p["fc3_w"].T                                          # (64, 10)
    fw3 = jnp.concatenate([fw3, jnp.zeros((64, 118), fw3.dtype)],
                          axis=1).astype(bf16)                  # (64, 128)
    fb3 = jnp.concatenate([p["fc3_b"], jnp.zeros((118,), jnp.float32)])

    f32 = jnp.float32
    return {
        "conv1_w": w1, "conv1_b": p["conv1_b"].reshape(1, 16).astype(f32),
        "conv2_w": w2, "conv2_b": p["conv2_b"].reshape(1, 32).astype(f32),
        "fc1_w": fw1, "fc1_b": p["fc1_b"].reshape(1, 256).astype(f32),
        "fc2_w": fw2, "fc2_b": p["fc2_b"].reshape(1, 64).astype(f32),
        "fc3_w": fw3, "fc3_b": fb3.reshape(1, 128).astype(f32),
    }


# ---------------------------------------------------------------------------
# Forward pass
# ---------------------------------------------------------------------------
@jax.jit
def net_forward(x_nchw, prep):
    """x_nchw: (B, 1, 28, 28) f32 -> logits (B, 10) f32."""
    B = x_nchw.shape[0]
    x = jnp.transpose(x_nchw, (0, 2, 3, 1)).astype(jnp.bfloat16)  # NHWC bf16

    # Conv2d(1,16,5) + ReLU + MaxPool2d(2,2): one fused kernel -> (B,12,12,16)
    y = conv_relu_pool(x, prep["conv1_w"], prep["conv1_b"])

    # Conv2d(16,32,5) + ReLU + MaxPool2d(2,2): one fused kernel -> (B,4,4,32)
    y = conv_relu_pool(y, prep["conv2_w"], prep["conv2_b"])

    # Flatten: memory is already (b, h, w, c)-ordered -> pure view reshape
    # (fc1's columns were permuted once in prepare_params to match).
    feat = y.reshape(B, 4 * 4 * 32)

    # Linear(512,256) -> Linear(256,64) -> Linear(64,10): one fused kernel,
    # stored lane-dense as 128 columns and sliced to 10 here.
    return fc_stack(feat, prep["fc1_w"], prep["fc1_b"],
                    prep["fc2_w"], prep["fc2_b"],
                    prep["fc3_w"], prep["fc3_b"], num_out=10)


if __name__ == "__main__":
    key = jax.random.PRNGKey(0)
    k_x, k_p = jax.random.split(key)
    # Input must be 28x28 so Flatten yields 32*4*4 = 512 features (as in Net).
    x = jax.random.normal(k_x, (2, 1, 28, 28), jnp.float32)
    params = init_params(k_p)
    prep = prepare_params(params)          # one-time weight re-layout

    out = net_forward(x, prep)
    out = jax.block_until_ready(out)
    assert out.shape == (2, 10) and out.dtype == jnp.float32
    print("KERNEL_OK")
</pallas_src>

<mosaic_0001>
module attributes {stable_mosaic.version = 11 : i64} {
  func.func @_conv_relu_pool_kernel(%arg0: i32, %arg1: memref<288x32xbf16, #tpu.memory_space<vmem>>, %arg2: memref<288x32xbf16, #tpu.memory_space<vmem>>, %arg3: memref<288x32xbf16, #tpu.memory_space<vmem>>, %arg4: memref<288x32xbf16, #tpu.memory_space<vmem>>, %arg5: memref<32x16xbf16, #tpu.memory_space<vmem>>, %arg6: memref<1x16xf32, #tpu.memory_space<vmem>>, %arg7: memref<288x16xbf16, #tpu.memory_space<vmem>>) attributes {dimension_semantics = [#tpu.dimension_semantics<parallel>], iteration_bounds = array<i64: 1>, scalar_prefetch = 0 : i64, scratch_operands = 0 : i64, tpu.core_type = #tpu.core_type<tc>, window_params = [{transform_indices = @transform_0, window_bounds = array<i64: 288, 32>}, {transform_indices = @transform_1, window_bounds = array<i64: 288, 32>}, {transform_indices = @transform_2, window_bounds = array<i64: 288, 32>}, {transform_indices = @transform_3, window_bounds = array<i64: 288, 32>}, {pipeline_mode = #tpu.pipeline_mode<synchronous>, transform_indices = @transform_4, window_bounds = array<i64: 32, 16>}, {pipeline_mode = #tpu.pipeline_mode<synchronous>, transform_indices = @transform_5, window_bounds = array<i64: 1, 16>}, {transform_indices = @transform_6, window_bounds = array<i64: 288, 16>}]} {
    %c0 = arith.constant 0 : index
    %c0_0 = arith.constant 0 : index
    %0 = vector.load %arg1[%c0, %c0_0] : memref<288x32xbf16, #tpu.memory_space<vmem>>, vector<288x32xbf16>
    %c0_1 = arith.constant 0 : index
    %c0_2 = arith.constant 0 : index
    %1 = vector.load %arg5[%c0_1, %c0_2] : memref<32x16xbf16, #tpu.memory_space<vmem>>, vector<32x16xbf16>
    %cst = arith.constant dense<0.000000e+00> : vector<288x16xf32>
    %2 = tpu.matmul %0, %1, %cst {dimension_numbers = #tpu.dot_dimension_numbers<[1], [0], [0], [1], [0, 0, 1, 1], [], []>} : vector<288x32xbf16>, vector<32x16xbf16>, vector<288x16xf32> -> vector<288x16xf32>
    %c0_3 = arith.constant 0 : index
    %c0_4 = arith.constant 0 : index
    %3 = vector.load %arg6[%c0_3, %c0_4] : memref<1x16xf32, #tpu.memory_space<vmem>>, vector<1x16xf32>
    %4 = vector.broadcast %3 : vector<1x16xf32> to vector<288x16xf32>
    %5 = arith.addf %2, %4 : vector<288x16xf32>
    %cst_5 = arith.constant 0.000000e+00 : f32
    %6 = vector.broadcast %cst_5 : f32 to vector<288x16xf32>
    %7 = arith.maximumf %5, %6 : vector<288x16xf32>
    %c0_6 = arith.constant 0 : index
    %c0_7 = arith.constant 0 : index
    %8 = vector.load %arg2[%c0_6, %c0_7] : memref<288x32xbf16, #tpu.memory_space<vmem>>, vector<288x32xbf16>
    %c0_8 = arith.constant 0 : index
    %c0_9 = arith.constant 0 : index
    %9 = vector.load %arg5[%c0_8, %c0_9] : memref<32x16xbf16, #tpu.memory_space<vmem>>, vector<32x16xbf16>
    %cst_10 = arith.constant dense<0.000000e+00> : vector<288x16xf32>
    %10 = tpu.matmul %8, %9, %cst_10 {dimension_numbers = #tpu.dot_dimension_numbers<[1], [0], [0], [1], [0, 0, 1, 1], [], []>} : vector<288x32xbf16>, vector<32x16xbf16>, vector<288x16xf32> -> vector<288x16xf32>
    %c0_11 = arith.constant 0 : index
    %c0_12 = arith.constant 0 : index
    %11 = vector.load %arg6[%c0_11, %c0_12] : memref<1x16xf32, #tpu.memory_space<vmem>>, vector<1x16xf32>
    %12 = vector.broadcast %11 : vector<1x16xf32> to vector<288x16xf32>
    %13 = arith.addf %10, %12 : vector<288x16xf32>
    %cst_13 = arith.constant 0.000000e+00 : f32
    %14 = vector.broadcast %cst_13 : f32 to vector<288x16xf32>
    %15 = arith.maximumf %13, %14 : vector<288x16xf32>
    %16 = arith.maximumf %7, %15 : vector<288x16xf32>
    %c0_14 = arith.constant 0 : index
    %c0_15 = arith.constant 0 : index
    %17 = vector.load %arg3[%c0_14, %c0_15] : memref<288x32xbf16, #tpu.memory_space<vmem>>, vector<288x32xbf16>
    %c0_16 = arith.constant 0 : index
    %c0_17 = arith.constant 0 : index
    %18 = vector.load %arg5[%c0_16, %c0_17] : memref<32x16xbf16, #tpu.memory_space<vmem>>, vector<32x16xbf16>
    %cst_18 = arith.constant dense<0.000000e+00> : vector<288x16xf32>
    %19 = tpu.matmul %17, %18, %cst_18 {dimension_numbers = #tpu.dot_dimension_numbers<[1], [0], [0], [1], [0, 0, 1, 1], [], []>} : vector<288x32xbf16>, vector<32x16xbf16>, vector<288x16xf32> -> vector<288x16xf32>
    %c0_19 = arith.constant 0 : index
    %c0_20 = arith.constant 0 : index
    %20 = vector.load %arg6[%c0_19, %c0_20] : memref<1x16xf32, #tpu.memory_space<vmem>>, vector<1x16xf32>
    %21 = vector.broadcast %20 : vector<1x16xf32> to vector<288x16xf32>
    %22 = arith.addf %19, %21 : vector<288x16xf32>
    %cst_21 = arith.constant 0.000000e+00 : f32
    %23 = vector.broadcast %cst_21 : f32 to vector<288x16xf32>
    %24 = arith.maximumf %22, %23 : vector<288x16xf32>
    %c0_22 = arith.constant 0 : index
    %c0_23 = arith.constant 0 : index
    %25 = vector.load %arg4[%c0_22, %c0_23] : memref<288x32xbf16, #tpu.memory_space<vmem>>, vector<288x32xbf16>
    %c0_24 = arith.constant 0 : index
    %c0_25 = arith.constant 0 : index
    %26 = vector.load %arg5[%c0_24, %c0_25] : memref<32x16xbf16, #tpu.memory_space<vmem>>, vector<32x16xbf16>
    %cst_26 = arith.constant dense<0.000000e+00> : vector<288x16xf32>
    %27 = tpu.matmul %25, %26, %cst_26 {dimension_numbers = #tpu.dot_dimension_numbers<[1], [0], [0], [1], [0, 0, 1, 1], [], []>} : vector<288x32xbf16>, vector<32x16xbf16>, vector<288x16xf32> -> vector<288x16xf32>
    %c0_27 = arith.constant 0 : index
    %c0_28 = arith.constant 0 : index
    %28 = vector.load %arg6[%c0_27, %c0_28] : memref<1x16xf32, #tpu.memory_space<vmem>>, vector<1x16xf32>
    %29 = vector.broadcast %28 : vector<1x16xf32> to vector<288x16xf32>
    %30 = arith.addf %27, %29 : vector<288x16xf32>
    %cst_29 = arith.constant 0.000000e+00 : f32
    %31 = vector.broadcast %cst_29 : f32 to vector<288x16xf32>
    %32 = arith.maximumf %30, %31 : vector<288x16xf32>
    %33 = arith.maximumf %24, %32 : vector<288x16xf32>
    %34 = arith.maximumf %16, %33 : vector<288x16xf32>
    %35 = arith.truncf %34 : vector<288x16xf32> to vector<288x16xbf16>
    %c0_30 = arith.constant 0 : index
    %c0_31 = arith.constant 0 : index
    %36 = vector.load %arg7[%c0_30, %c0_31] : memref<288x16xbf16, #tpu.memory_space<vmem>>, vector<288x16xbf16>
    tpu.vector_store %arg7[%c0_30, %c0_31], %35 {strides = array<i32>} : memref<288x16xbf16, #tpu.memory_space<vmem>>, vector<288x16xbf16>,
    return
  }
  func.func @transform_0(%arg0: i32) -> (i32, i32) {
    %c0_i32 = arith.constant 0 : i32
    %c0_i32_0 = arith.constant 0 : i32
    return %arg0, %c0_i32 : i32, i32
  }
  func.func @transform_1(%arg0: i32) -> (i32, i32) {
    %c0_i32 = arith.constant 0 : i32
    %c0_i32_0 = arith.constant 0 : i32
    return %arg0, %c0_i32 : i32, i32
  }
  func.func @transform_2(%arg0: i32) -> (i32, i32) {
    %c0_i32 = arith.constant 0 : i32
    %c0_i32_0 = arith.constant 0 : i32
    return %arg0, %c0_i32 : i32, i32
  }
  func.func @transform_3(%arg0: i32) -> (i32, i32) {
    %c0_i32 = arith.constant 0 : i32
    %c0_i32_0 = arith.constant 0 : i32
    return %arg0, %c0_i32 : i32, i32
  }
  func.func @transform_4(%arg0: i32) -> (i32, i32) {
    %c0_i32 = arith.constant 0 : i32
    %c0_i32_0 = arith.constant 0 : i32
    %c0_i32_1 = arith.constant 0 : i32
    return %c0_i32, %c0_i32_0 : i32, i32
  }
  func.func @transform_5(%arg0: i32) -> (i32, i32) {
    %c0_i32 = arith.constant 0 : i32
    %c0_i32_0 = arith.constant 0 : i32
    %c0_i32_1 = arith.constant 0 : i32
    return %c0_i32, %c0_i32_0 : i32, i32
  }
  func.func @transform_6(%arg0: i32) -> (i32, i32) {
    %c0_i32 = arith.constant 0 : i32
    %c0_i32_0 = arith.constant 0 : i32
    return %arg0, %c0_i32 : i32, i32
  }
}

module attributes {stable_mosaic.version = 11 : i64} {
  func.func @_conv_relu_pool_kernel(%arg0: i32, %arg1: memref<32x400xbf16, #tpu.memory_space<vmem>>, %arg2: memref<32x400xbf16, #tpu.memory_space<vmem>>, %arg3: memref<32x400xbf16, #tpu.memory_space<vmem>>, %arg4: memref<32x400xbf16, #tpu.memory_space<vmem>>, %arg5: memref<400x32xbf16, #tpu.memory_space<vmem>>, %arg6: memref<1x32xf32, #tpu.memory_space<vmem>>, %arg7: memref<32x32xbf16, #tpu.memory_space<vmem>>) attributes {dimension_semantics = [#tpu.dimension_semantics<parallel>], iteration_bounds = array<i64: 1>, scalar_prefetch = 0 : i64, scratch_operands = 0 : i64, tpu.core_type = #tpu.core_type<tc>, window_params = [{transform_indices = @transform_0, window_bounds = array<i64: 32, 400>}, {transform_indices = @transform_1, window_bounds = array<i64: 32, 400>}, {transform_indices = @transform_2, window_bounds = array<i64: 32, 400>}, {transform_indices = @transform_3, window_bounds = array<i64: 32, 400>}, {pipeline_mode = #tpu.pipeline_mode<synchronous>, transform_indices = @transform_4, window_bounds = array<i64: 400, 32>}, {pipeline_mode = #tpu.pipeline_mode<synchronous>, transform_indices = @transform_5, window_bounds = array<i64: 1, 32>}, {transform_indices = @transform_6, window_bounds = array<i64: 32, 32>}]} {
    %c0 = arith.constant 0 : index
    %c0_0 = arith.constant 0 : index
    %0 = vector.load %arg1[%c0, %c0_0] : memref<32x400xbf16, #tpu.memory_space<vmem>>, vector<32x400xbf16>
    %c0_1 = arith.constant 0 : index
    %c0_2 = arith.constant 0 : index
    %1 = vector.load %arg5[%c0_1, %c0_2] : memref<400x32xbf16, #tpu.memory_space<vmem>>, vector<400x32xbf16>
    %cst = arith.constant dense<0.000000e+00> : vector<32x32xf32>
    %2 = tpu.matmul %0, %1, %cst {dimension_numbers = #tpu.dot_dimension_numbers<[1], [0], [0], [1], [0, 0, 1, 1], [], []>} : vector<32x400xbf16>, vector<400x32xbf16>, vector<32x32xf32> -> vector<32x32xf32>
    %c0_3 = arith.constant 0 : index
    %c0_4 = arith.constant 0 : index
    %3 = vector.load %arg6[%c0_3, %c0_4] : memref<1x32xf32, #tpu.memory_space<vmem>>, vector<1x32xf32>
    %4 = vector.broadcast %3 : vector<1x32xf32> to vector<32x32xf32>
    %5 = arith.addf %2, %4 : vector<32x32xf32>
    %cst_5 = arith.constant 0.000000e+00 : f32
    %6 = vector.broadcast %cst_5 : f32 to vector<32x32xf32>
    %7 = arith.maximumf %5, %6 : vector<32x32xf32>
    %c0_6 = arith.constant 0 : index
    %c0_7 = arith.constant 0 : index
    %8 = vector.load %arg2[%c0_6, %c0_7] : memref<32x400xbf16, #tpu.memory_space<vmem>>, vector<32x400xbf16>
    %c0_8 = arith.constant 0 : index
    %c0_9 = arith.constant 0 : index
    %9 = vector.load %arg5[%c0_8, %c0_9] : memref<400x32xbf16, #tpu.memory_space<vmem>>, vector<400x32xbf16>
    %cst_10 = arith.constant dense<0.000000e+00> : vector<32x32xf32>
    %10 = tpu.matmul %8, %9, %cst_10 {dimension_numbers = #tpu.dot_dimension_numbers<[1], [0], [0], [1], [0, 0, 1, 1], [], []>} : vector<32x400xbf16>, vector<400x32xbf16>, vector<32x32xf32> -> vector<32x32xf32>
    %c0_11 = arith.constant 0 : index
    %c0_12 = arith.constant 0 : index
    %11 = vector.load %arg6[%c0_11, %c0_12] : memref<1x32xf32, #tpu.memory_space<vmem>>, vector<1x32xf32>
    %12 = vector.broadcast %11 : vector<1x32xf32> to vector<32x32xf32>
    %13 = arith.addf %10, %12 : vector<32x32xf32>
    %cst_13 = arith.constant 0.000000e+00 : f32
    %14 = vector.broadcast %cst_13 : f32 to vector<32x32xf32>
    %15 = arith.maximumf %13, %14 : vector<32x32xf32>
    %16 = arith.maximumf %7, %15 : vector<32x32xf32>
    %c0_14 = arith.constant 0 : index
    %c0_15 = arith.constant 0 : index
    %17 = vector.load %arg3[%c0_14, %c0_15] : memref<32x400xbf16, #tpu.memory_space<vmem>>, vector<32x400xbf16>
    %c0_16 = arith.constant 0 : index
    %c0_17 = arith.constant 0 : index
    %18 = vector.load %arg5[%c0_16, %c0_17] : memref<400x32xbf16, #tpu.memory_space<vmem>>, vector<400x32xbf16>
    %cst_18 = arith.constant dense<0.000000e+00> : vector<32x32xf32>
    %19 = tpu.matmul %17, %18, %cst_18 {dimension_numbers = #tpu.dot_dimension_numbers<[1], [0], [0], [1], [0, 0, 1, 1], [], []>} : vector<32x400xbf16>, vector<400x32xbf16>, vector<32x32xf32> -> vector<32x32xf32>
    %c0_19 = arith.constant 0 : index
    %c0_20 = arith.constant 0 : index
    %20 = vector.load %arg6[%c0_19, %c0_20] : memref<1x32xf32, #tpu.memory_space<vmem>>, vector<1x32xf32>
    %21 = vector.broadcast %20 : vector<1x32xf32> to vector<32x32xf32>
    %22 = arith.addf %19, %21 : vector<32x32xf32>
    %cst_21 = arith.constant 0.000000e+00 : f32
    %23 = vector.broadcast %cst_21 : f32 to vector<32x32xf32>
    %24 = arith.maximumf %22, %23 : vector<32x32xf32>
    %c0_22 = arith.constant 0 : index
    %c0_23 = arith.constant 0 : index
    %25 = vector.load %arg4[%c0_22, %c0_23] : memref<32x400xbf16, #tpu.memory_space<vmem>>, vector<32x400xbf16>
    %c0_24 = arith.constant 0 : index
    %c0_25 = arith.constant 0 : index
    %26 = vector.load %arg5[%c0_24, %c0_25] : memref<400x32xbf16, #tpu.memory_space<vmem>>, vector<400x32xbf16>
    %cst_26 = arith.constant dense<0.000000e+00> : vector<32x32xf32>
    %27 = tpu.matmul %25, %26, %cst_26 {dimension_numbers = #tpu.dot_dimension_numbers<[1], [0], [0], [1], [0, 0, 1, 1], [], []>} : vector<32x400xbf16>, vector<400x32xbf16>, vector<32x32xf32> -> vector<32x32xf32>
    %c0_27 = arith.constant 0 : index
    %c0_28 = arith.constant 0 : index
    %28 = vector.load %arg6[%c0_27, %c0_28] : memref<1x32xf32, #tpu.memory_space<vmem>>, vector<1x32xf32>
    %29 = vector.broadcast %28 : vector<1x32xf32> to vector<32x32xf32>
    %30 = arith.addf %27, %29 : vector<32x32xf32>
    %cst_29 = arith.constant 0.000000e+00 : f32
    %31 = vector.broadcast %cst_29 : f32 to vector<32x32xf32>
    %32 = arith.maximumf %30, %31 : vector<32x32xf32>
    %33 = arith.maximumf %24, %32 : vector<32x32xf32>
    %34 = arith.maximumf %16, %33 : vector<32x32xf32>
    %35 = arith.truncf %34 : vector<32x32xf32> to vector<32x32xbf16>
    %c0_30 = arith.constant 0 : index
    %c0_31 = arith.constant 0 : index
    %36 = vector.load %arg7[%c0_30, %c0_31] : memref<32x32xbf16, #tpu.memory_space<vmem>>, vector<32x32xbf16>
    tpu.vector_store %arg7[%c0_30, %c0_31], %35 {strides = array<i32>} : memref<32x32xbf16, #tpu.memory_space<vmem>>, vector<32x32xbf16>,
    return
  }
  func.func @transform_0(%arg0: i32) -> (i32, i32) {
    %c0_i32 = arith.constant 0 : i32
    %c0_i32_0 = arith.constant 0 : i32
    return %arg0, %c0_i32 : i32, i32
  }
  func.func @transform_1(%arg0: i32) -> (i32, i32) {
    %c0_i32 = arith.constant 0 : i32
    %c0_i32_0 = arith.constant 0 : i32
    return %arg0, %c0_i32 : i32, i32
  }
  func.func @transform_2(%arg0: i32) -> (i32, i32) {
    %c0_i32 = arith.constant 0 : i32
    %c0_i32_0 = arith.constant 0 : i32
    return %arg0, %c0_i32 : i32, i32
  }
  func.func @transform_3(%arg0: i32) -> (i32, i32) {
    %c0_i32 = arith.constant 0 : i32
    %c0_i32_0 = arith.constant 0 : i32
    return %arg0, %c0_i32 : i32, i32
  }
  func.func @transform_4(%arg0: i32) -> (i32, i32) {
    %c0_i32 = arith.constant 0 : i32
    %c0_i32_0 = arith.constant 0 : i32
    %c0_i32_1 = arith.constant 0 : i32
    return %c0_i32, %c0_i32_0 : i32, i32
  }
  func.func @transform_5(%arg0: i32) -> (i32, i32) {
    %c0_i32 = arith.constant 0 : i32
    %c0_i32_0 = arith.constant 0 : i32
    %c0_i32_1 = arith.constant 0 : i32
    return %c0_i32, %c0_i32_0 : i32, i32
  }
  func.func @transform_6(%arg0: i32) -> (i32, i32) {
    %c0_i32 = arith.constant 0 : i32
    %c0_i32_0 = arith.constant 0 : i32
    return %arg0, %c0_i32 : i32, i32
  }
}

module attributes {stable_mosaic.version = 11 : i64} {
  func.func @_fc3_fused_kernel(%arg0: i32, %arg1: memref<2x512xbf16, #tpu.memory_space<vmem>>, %arg2: memref<512x256xbf16, #tpu.memory_space<vmem>>, %arg3: memref<1x256xf32, #tpu.memory_space<vmem>>, %arg4: memref<256x64xbf16, #tpu.memory_space<vmem>>, %arg5: memref<1x64xf32, #tpu.memory_space<vmem>>, %arg6: memref<64x128xbf16, #tpu.memory_space<vmem>>, %arg7: memref<1x128xf32, #tpu.memory_space<vmem>>, %arg8: memref<2x128xf32, #tpu.memory_space<vmem>>) attributes {dimension_semantics = [#tpu.dimension_semantics<parallel>], iteration_bounds = array<i64: 1>, scalar_prefetch = 0 : i64, scratch_operands = 0 : i64, tpu.core_type = #tpu.core_type<tc>, window_params = [{transform_indices = @transform_0, window_bounds = array<i64: 2, 512>}, {pipeline_mode = #tpu.pipeline_mode<synchronous>, transform_indices = @transform_1, window_bounds = array<i64: 512, 256>}, {pipeline_mode = #tpu.pipeline_mode<synchronous>, transform_indices = @transform_2, window_bounds = array<i64: 1, 256>}, {pipeline_mode = #tpu.pipeline_mode<synchronous>, transform_indices = @transform_3, window_bounds = array<i64: 256, 64>}, {pipeline_mode = #tpu.pipeline_mode<synchronous>, transform_indices = @transform_4, window_bounds = array<i64: 1, 64>}, {pipeline_mode = #tpu.pipeline_mode<synchronous>, transform_indices = @transform_5, window_bounds = array<i64: 64, 128>}, {pipeline_mode = #tpu.pipeline_mode<synchronous>, transform_indices = @transform_6, window_bounds = array<i64: 1, 128>}, {transform_indices = @transform_7, window_bounds = array<i64: 2, 128>}]} {
    %c0 = arith.constant 0 : index
    %c0_0 = arith.constant 0 : index
    %0 = vector.load %arg1[%c0, %c0_0] : memref<2x512xbf16, #tpu.memory_space<vmem>>, vector<2x512xbf16>
    %c0_1 = arith.constant 0 : index
    %c0_2 = arith.constant 0 : index
    %1 = vector.load %arg2[%c0_1, %c0_2] : memref<512x256xbf16, #tpu.memory_space<vmem>>, vector<512x256xbf16>
    %cst = arith.constant dense<0.000000e+00> : vector<2x256xf32>
    %2 = tpu.matmul %0, %1, %cst {dimension_numbers = #tpu.dot_dimension_numbers<[1], [0], [0], [1], [0, 0, 1, 1], [], []>} : vector<2x512xbf16>, vector<512x256xbf16>, vector<2x256xf32> -> vector<2x256xf32>
    %c0_3 = arith.constant 0 : index
    %c0_4 = arith.constant 0 : index
    %3 = vector.load %arg3[%c0_3, %c0_4] : memref<1x256xf32, #tpu.memory_space<vmem>>, vector<1x256xf32>
    %4 = vector.broadcast %3 : vector<1x256xf32> to vector<2x256xf32>
    %5 = arith.addf %2, %4 : vector<2x256xf32>
    %6 = arith.truncf %5 : vector<2x256xf32> to vector<2x256xbf16>
    %c0_5 = arith.constant 0 : index
    %c0_6 = arith.constant 0 : index
    %7 = vector.load %arg4[%c0_5, %c0_6] : memref<256x64xbf16, #tpu.memory_space<vmem>>, vector<256x64xbf16>
    %cst_7 = arith.constant dense<0.000000e+00> : vector<2x64xf32>
    %8 = tpu.matmul %6, %7, %cst_7 {dimension_numbers = #tpu.dot_dimension_numbers<[1], [0], [0], [1], [0, 0, 1, 1], [], []>} : vector<2x256xbf16>, vector<256x64xbf16>, vector<2x64xf32> -> vector<2x64xf32>
    %c0_8 = arith.constant 0 : index
    %c0_9 = arith.constant 0 : index
    %9 = vector.load %arg5[%c0_8, %c0_9] : memref<1x64xf32, #tpu.memory_space<vmem>>, vector<1x64xf32>
    %10 = vector.broadcast %9 : vector<1x64xf32> to vector<2x64xf32>
    %11 = arith.addf %8, %10 : vector<2x64xf32>
    %12 = arith.truncf %11 : vector<2x64xf32> to vector<2x64xbf16>
    %c0_10 = arith.constant 0 : index
    %c0_11 = arith.constant 0 : index
    %13 = vector.load %arg6[%c0_10, %c0_11] : memref<64x128xbf16, #tpu.memory_space<vmem>>, vector<64x128xbf16>
    %cst_12 = arith.constant dense<0.000000e+00> : vector<2x128xf32>
    %14 = tpu.matmul %12, %13, %cst_12 {dimension_numbers = #tpu.dot_dimension_numbers<[1], [0], [0], [1], [0, 0, 1, 1], [], []>} : vector<2x64xbf16>, vector<64x128xbf16>, vector<2x128xf32> -> vector<2x128xf32>
    %c0_13 = arith.constant 0 : index
    %c0_14 = arith.constant 0 : index
    %15 = vector.load %arg7[%c0_13, %c0_14] : memref<1x128xf32, #tpu.memory_space<vmem>>, vector<1x128xf32>
    %16 = vector.broadcast %15 : vector<1x128xf32> to vector<2x128xf32>
    %17 = arith.addf %14, %16 : vector<2x128xf32>
    %c0_15 = arith.constant 0 : index
    %c0_16 = arith.constant 0 : index
    %18 = vector.load %arg8[%c0_15, %c0_16] : memref<2x128xf32, #tpu.memory_space<vmem>>, vector<2x128xf32>
    tpu.vector_store %arg8[%c0_15, %c0_16], %17 {strides = array<i32>} : memref<2x128xf32, #tpu.memory_space<vmem>>, vector<2x128xf32>,
    return
  }
  func.func @transform_0(%arg0: i32) -> (i32, i32) {
    %c0_i32 = arith.constant 0 : i32
    %c0_i32_0 = arith.constant 0 : i32
    return %arg0, %c0_i32 : i32, i32
  }
  func.func @transform_1(%arg0: i32) -> (i32, i32) {
    %c0_i32 = arith.constant 0 : i32
    %c0_i32_0 = arith.constant 0 : i32
    %c0_i32_1 = arith.constant 0 : i32
    return %c0_i32, %c0_i32_0 : i32, i32
  }
  func.func @transform_2(%arg0: i32) -> (i32, i32) {
    %c0_i32 = arith.constant 0 : i32
    %c0_i32_0 = arith.constant 0 : i32
    %c0_i32_1 = arith.constant 0 : i32
    return %c0_i32, %c0_i32_0 : i32, i32
  }
  func.func @transform_3(%arg0: i32) -> (i32, i32) {
    %c0_i32 = arith.constant 0 : i32
    %c0_i32_0 = arith.constant 0 : i32
    %c0_i32_1 = arith.constant 0 : i32
    return %c0_i32, %c0_i32_0 : i32, i32
  }
  func.func @transform_4(%arg0: i32) -> (i32, i32) {
    %c0_i32 = arith.constant 0 : i32
    %c0_i32_0 = arith.constant 0 : i32
    %c0_i32_1 = arith.constant 0 : i32
    return %c0_i32, %c0_i32_0 : i32, i32
  }
  func.func @transform_5(%arg0: i32) -> (i32, i32) {
    %c0_i32 = arith.constant 0 : i32
    %c0_i32_0 = arith.constant 0 : i32
    %c0_i32_1 = arith.constant 0 : i32
    return %c0_i32, %c0_i32_0 : i32, i32
  }
  func.func @transform_6(%arg0: i32) -> (i32, i32) {
    %c0_i32 = arith.constant 0 : i32
    %c0_i32_0 = arith.constant 0 : i32
    %c0_i32_1 = arith.constant 0 : i32
    return %c0_i32, %c0_i32_0 : i32, i32
  }
  func.func @transform_7(%arg0: i32) -> (i32, i32) {
    %c0_i32 = arith.constant 0 : i32
    %c0_i32_0 = arith.constant 0 : i32
    return %arg0, %c0_i32 : i32, i32
  }
}

</mosaic_0001>

<llo_original>
// kernel: net_forward.3
$region0: #{net_forward.3}
  #allocation0 [shape = 'u32[]', space=smem, size = 0x4, offset = 0x4, fixed_abs, tag = 'smem constant byte address 0x4 - core index']
  #allocation1 [shape = 'u32[144,128]{1,0:T(1,128)}', space=vmem, size = 0x12000, scoped, tag = 'internal scratch']
  %s0 = inlined_call_operand.vmem [shape: bf16[288,32], index: 0, kind: input, shape index: {}]
  %s1 = inlined_call_operand.vmem [shape: bf16[288,32], index: 1, kind: input, shape index: {}]
  %s2 = inlined_call_operand.vmem [shape: bf16[288,32], index: 2, kind: input, shape index: {}]
  %s3 = inlined_call_operand.vmem [shape: bf16[288,32], index: 3, kind: input, shape index: {}]
  %s4 = inlined_call_operand.vmem [shape: bf16[32,16], index: 4, kind: input, shape index: {}]
  %s5 = inlined_call_operand.vmem [shape: f32[1,16], index: 5, kind: input, shape index: {}]
  %s6 = inlined_call_operand.vmem [shape: bf16[288,16], index: 6, kind: output, shape index: {}]
  %s7 = sld [smem:[#allocation0]]
  $region34: #{net_forward.3} parent=0
    _
  %s9 = ssub.s32 1, %s7
  %s10 = scalar_select 0, %s9, %s7
  // Predicated region
  $region2: #{net_forward.3} parent=0 // pred_check
    _
  $region3: #{net_forward.3} parent=0 // pred_check_branch
    %12 = sbr.rel (0) target = $region5
  $region4: #{net_forward.3} parent=0 // pred_region
    _
  $region5: #{net_forward.3} parent=0 // pred_fallthru
    _
  // Predicated region
  $region6: #{net_forward.3} parent=0 // pred_check
    _
  $region7: #{net_forward.3} parent=0 // pred_check_branch
    %14 = sbr.rel (0) target = $region9
  $region8: #{net_forward.3} parent=0 // pred_region
    _
  $region9: #{net_forward.3} parent=0 // pred_fallthru
    _
  // Predicated region
  $region10: #{net_forward.3} parent=0 // pred_check
    _
  $region11: #{net_forward.3} parent=0 // pred_check_branch
    %16 = sbr.rel (0) target = $region13
  $region12: #{net_forward.3} parent=0 // pred_region
    _
  $region13: #{net_forward.3} parent=0 // pred_fallthru
    _
  // Predicated region
  $region14: #{net_forward.3} parent=0 // pred_check
    _
  $region15: #{net_forward.3} parent=0 // pred_check_branch
    %18 = sbr.rel (0) target = $region17
  $region16: #{net_forward.3} parent=0 // pred_region
    _
  $region17: #{net_forward.3} parent=0 // pred_fallthru
    _
  // Predicated region
  $region18: #{net_forward.3} parent=0 // pred_check
    _
  $region19: #{net_forward.3} parent=0 // pred_check_branch
    %20 = sbr.rel (0) target = $region21
  $region20: #{net_forward.3} parent=0 // pred_region
    _
  $region21: #{net_forward.3} parent=0 // pred_fallthru
    _
  // Predicated region
  $region22: #{net_forward.3} parent=0 // pred_check
    _
  $region23: #{net_forward.3} parent=0 // pred_check_branch
    %22 = sbr.rel (0) target = $region25
  $region24: #{net_forward.3} parent=0 // pred_region
    _
  $region25: #{net_forward.3} parent=0 // pred_fallthru
    _
  %v24 = vld [vmem:[%s0] sm:$0xf]
  %v25 = vld [vmem:[%s0 + $0x4] sm:$0xf]
  %v26 = vld [vmem:[%s0 + $0x8] sm:$0xf]
  %v27 = vld [vmem:[%s0 + $0xc] sm:$0xf]
  %v28 = vld [vmem:[%s0 + $0x10] sm:$0xf]
  %v29 = vld [vmem:[%s0 + $0x14] sm:$0xf]
  %v30 = vld [vmem:[%s0 + $0x18] sm:$0xf]
  %v31 = vld [vmem:[%s0 + $0x1c] sm:$0xf]
  %v32 = vld [vmem:[%s0 + $0x20] sm:$0xf]
  %v33 = vld [vmem:[%s0 + $0x24] sm:$0xf]
  %v34 = vld [vmem:[%s0 + $0x28] sm:$0xf]
  %v35 = vld [vmem:[%s0 + $0x2c] sm:$0xf]
  %v36 = vld [vmem:[%s0 + $0x30] sm:$0xf]
  %v37 = vld [vmem:[%s0 + $0x34] sm:$0xf]
  %v38 = vld [vmem:[%s0 + $0x38] sm:$0xf]
  %v39 = vld [vmem:[%s0 + $0x3c] sm:$0xf]
  %v40 = vld [vmem:[%s0 + $0x40] sm:$0xf]
  %v41 = vld [vmem:[%s0 + $0x44] sm:$0xf]
  %v42 = vld [vmem:[%s0 + $0x48] sm:$0xf]
  %v43 = vld [vmem:[%s0 + $0x4c] sm:$0xf]
  %v44 = vld [vmem:[%s0 + $0x50] sm:$0xf]
  %v45 = vld [vmem:[%s0 + $0x54] sm:$0xf]
  %v46 = vld [vmem:[%s0 + $0x58] sm:$0xf]
  %v47 = vld [vmem:[%s0 + $0x5c] sm:$0xf]
  %v48 = vld [vmem:[%s0 + $0x60] sm:$0xf]
  %v49 = vld [vmem:[%s0 + $0x64] sm:$0xf]
  %v50 = vld [vmem:[%s0 + $0x68] sm:$0xf]
  %v51 = vld [vmem:[%s0 + $0x6c] sm:$0xf]
  %v52 = vld [vmem:[%s0 + $0x70] sm:$0xf]
  %v53 = vld [vmem:[%s0 + $0x74] sm:$0xf]
  %v54 = vld [vmem:[%s0 + $0x78] sm:$0xf]
  %v55 = vld [vmem:[%s0 + $0x7c] sm:$0xf]
  %v56 = vld [vmem:[%s0 + $0x80] sm:$0xf]
  %v57 = vld [vmem:[%s0 + $0x84] sm:$0xf]
  %v58 = vld [vmem:[%s0 + $0x88] sm:$0xf]
  %v59 = vld [vmem:[%s0 + $0x8c] sm:$0xf]
  %v60 = vld [vmem:[%s4] sm:$0xf]
  %v61 = vld [vmem:[%s4 + $0x4] sm:$0xf]
  %v62 = vld [vmem:[%s4 + $0x8] sm:$0xf]
  %v63 = vld [vmem:[%s4 + $0xc] sm:$0xf]
  %v64 = vld [vmem:[%s5] sm:$0x1]
  %v66 = vlaneseq
  %v67 = vshrl.u32 %v66, 7
  %v68 = vsub.s32 0, %v67
  %v69 = vrot.slane %v64, %v68
  %v107 = vunpack.c.l.b16 %v24
  %v108 = vunpack.c.l.b16 %v25
  %v109 = vunpack.c.l.b16 %v26
  %v110 = vunpack.c.l.b16 %v27
  %v111 = vunpack.c.l.b16 %v28
  %v112 = vunpack.c.l.b16 %v29
  %v113 = vunpack.c.l.b16 %v30
  %v114 = vunpack.c.l.b16 %v31
  %v115 = vunpack.c.l.b16 %v32
  %v116 = vunpack.c.l.b16 %v33
  %v117 = vunpack.c.l.b16 %v34
  %v118 = vunpack.c.l.b16 %v35
  %v119 = vunpack.c.l.b16 %v36
  %v120 = vunpack.c.l.b16 %v37
  %v121 = vunpack.c.l.b16 %v38
  %v122 = vunpack.c.l.b16 %v39
  %v123 = vunpack.c.l.b16 %v40
  %v124 = vunpack.c.l.b16 %v41
  %v125 = vunpack.c.l.b16 %v42
  %v126 = vunpack.c.l.b16 %v43
  %v127 = vunpack.c.l.b16 %v44
  %v128 = vunpack.c.l.b16 %v45
  %v129 = vunpack.c.l.b16 %v46
  %v130 = vunpack.c.l.b16 %v47
  %v131 = vunpack.c.l.b16 %v48
  %v132 = vunpack.c.l.b16 %v49
  %v133 = vunpack.c.l.b16 %v50
  %v134 = vunpack.c.l.b16 %v51
  %v135 = vunpack.c.l.b16 %v52
  %v136 = vunpack.c.l.b16 %v53
  %v137 = vunpack.c.l.b16 %v54
  %v138 = vunpack.c.l.b16 %v55
  %v139 = vunpack.c.l.b16 %v56
  %v140 = vunpack.c.l.b16 %v57
  %v141 = vunpack.c.l.b16 %v58
  %v142 = vunpack.c.l.b16 %v59
  %v143 = vpack.c.b16 %v108, %v107
  %v144 = vpack.c.b16 %v110, %v109
  %v145 = vpack.c.b16 %v112, %v111
  %v146 = vpack.c.b16 %v114, %v113
  %v147 = vpack.c.b16 %v116, %v115
  %v148 = vpack.c.b16 %v118, %v117
  %v149 = vpack.c.b16 %v120, %v119
  %v150 = vpack.c.b16 %v122, %v121
  %v151 = vpack.c.b16 %v124, %v123
  %v152 = vpack.c.b16 %v126, %v125
  %v153 = vpack.c.b16 %v128, %v127
  %v154 = vpack.c.b16 %v130, %v129
  %v155 = vpack.c.b16 %v132, %v131
  %v156 = vpack.c.b16 %v134, %v133
  %v157 = vpack.c.b16 %v136, %v135
  %v158 = vpack.c.b16 %v138, %v137
  %v159 = vpack.c.b16 %v140, %v139
  %v160 = vpack.c.b16 %v142, %v141
  %v165 = vunpack.c.l.b16 %v60
  %v166 = vunpack.c.l.b16 %v61
  %v167 = vunpack.c.l.b16 %v62
  %v168 = vunpack.c.l.b16 %v63
  %v169 = vpack.c.b16 %v166, %v165
  %v170 = vpack.c.b16 %v168, %v167
  %vm173 = vcmask 261120
  %v175 = vsel %vm173, %v143, 0
  %v178 = vsel %vm173, %v144, 0
  %v181 = vsel %vm173, %v145, 0
  %v184 = vsel %vm173, %v146, 0
  %v187 = vsel %vm173, %v147, 0
  %v190 = vsel %vm173, %v148, 0
  %v193 = vsel %vm173, %v149, 0
  %v196 = vsel %vm173, %v150, 0
  %v199 = vsel %vm173, %v151, 0
  %v202 = vsel %vm173, %v152, 0
  %v205 = vsel %vm173, %v153, 0
  %v208 = vsel %vm173, %v154, 0
  %v211 = vsel %vm173, %v155, 0
  %v214 = vsel %vm173, %v156, 0
  %v217 = vsel %vm173, %v157, 0
  %v220 = vsel %vm173, %v158, 0
  %v223 = vsel %vm173, %v159, 0
  %v226 = vsel %vm173, %v160, 0
  %228 = vmatprep.subr.bf16.mxu0 0
  %229 = vmatpush1.bf16.msra.mxu0 0
  %230 = vmatprep.subr.bf16.mxu0 0
  %231 = vmatpush1.bf16.msra.mxu0 0
  %232 = vmatprep.subr.bf16.mxu0 0
  %233 = vmatpush1.bf16.msra.mxu0 0
  %234 = vmatprep.subr.bf16.mxu0 0
  %235 = vmatpush1.bf16.msra.mxu0 0
  %236 = vmatprep.subr.bf16.mxu0 0
  %237 = vmatpush1.bf16.msra.mxu0 0
  %238 = vmatprep.subr.bf16.mxu0 0
  %239 = vmatpush1.bf16.msra.mxu0 0
  %240 = vmatprep.subr.bf16.mxu0 0
  %241 = vmatpush1.bf16.msra.mxu0 %v170
  %242 = vmatprep.subr.bf16.mxu0 0
  %243 = vmatpush1.bf16.msra.mxu0 %v169
  %244 = vmatprep.subr.bf16.mxu0 0
  %245 = vmatpush2.bf16.msra.mxu0 0
  %246 = vmatprep.subr.bf16.mxu0 0
  %247 = vmatpush2.bf16.msra.mxu0 0
  %248 = vmatprep.subr.bf16.mxu0 0
  %249 = vmatpush2.bf16.msra.mxu0 0
  %250 = vmatprep.subr.bf16.mxu0 0
  %251 = vmatpush2.bf16.msra.mxu0 0
  %252 = vmatprep.subr.bf16.mxu0 0
  %253 = vmatpush2.bf16.msra.mxu0 0
  %254 = vmatprep.subr.bf16.mxu0 0
  %255 = vmatpush2.bf16.msra.mxu0 0
  %256 = vmatprep.subr.bf16.mxu0 0
  %257 = vmatpush2.bf16.msra.mxu0 0
  %258 = vmatprep.subr.bf16.mxu0 0
  %259 = vmatpush2.bf16.msra.mxu0 0
  %260 = vmatprep.mubr.bf16.mxu0 0
  %261 = vmatmul.mubr.bf16.gmra.mxu0 %v175
  %v262 = vpop.f32.mrf.mxu0
  %v263 = vadd.f32 %v69, %v262
  %v264 = vpop.f32.mrf.mxu0
  %v265 = vpop.f32.mrf.mxu0
  %v266 = vadd.f32 %v69, %v265
  %v267 = vpop.f32.mrf.mxu0
  %268 = vmatprep.mubr.bf16.mxu0 0
  %269 = vmatmul.mubr.bf16.gmra.mxu0 %v178
  %v270 = vpop.f32.mrf.mxu0
  %v271 = vadd.f32 %v69, %v270
  %v272 = vpop.f32.mrf.mxu0
  %v273 = vpop.f32.mrf.mxu0
  %v274 = vadd.f32 %v69, %v273
  %v275 = vpop.f32.mrf.mxu0
  %276 = vmatprep.mubr.bf16.mxu0 0
  %277 = vmatmul.mubr.bf16.gmra.mxu0 %v181
  %v278 = vpop.f32.mrf.mxu0
  %v279 = vadd.f32 %v69, %v278
  %v280 = vpop.f32.mrf.mxu0
  %v281 = vpop.f32.mrf.mxu0
  %v282 = vadd.f32 %v69, %v281
  %v283 = vpop.f32.mrf.mxu0
  %284 = vmatprep.mubr.bf16.mxu0 0
  %285 = vmatmul.mubr.bf16.gmra.mxu0 %v184
  %v286 = vpop.f32.mrf.mxu0
  %v287 = vadd.f32 %v69, %v286
  %v288 = vpop.f32.mrf.mxu0
  %v289 = vpop.f32.mrf.mxu0
  %v290 = vadd.f32 %v69, %v289
  %v291 = vpop.f32.mrf.mxu0
  %292 = vmatprep.mubr.bf16.mxu0 0
  %293 = vmatmul.mubr.bf16.gmra.mxu0 %v187
  %v294 = vpop.f32.mrf.mxu0
  %v295 = vadd.f32 %v69, %v294
  %v296 = vpop.f32.mrf.mxu0
  %v297 = vpop.f32.mrf.mxu0
  %v298 = vadd.f32 %v69, %v297
  %v299 = vpop.f32.mrf.mxu0
  %300 = vmatprep.mubr.bf16.mxu0 0
  %301 = vmatmul.mubr.bf16.gmra.mxu0 %v190
  %v302 = vpop.f32.mrf.mxu0
  %v303 = vadd.f32 %v69, %v302
  %v304 = vpop.f32.mrf.mxu0
  %v305 = vpop.f32.mrf.mxu0
  %v306 = vadd.f32 %v69, %v305
  %v307 = vpop.f32.mrf.mxu0
  %308 = vmatprep.mubr.bf16.mxu0 0
  %309 = vmatmul.mubr.bf16.gmra.mxu0 %v193
  %v310 = vpop.f32.mrf.mxu0
  %v311 = vadd.f32 %v69, %v310
  %v312 = vpop.f32.mrf.mxu0
  %v313 = vpop.f32.mrf.mxu0
  %v314 = vadd.f32 %v69, %v313
  %v315 = vpop.f32.mrf.mxu0
  %316 = vmatprep.mubr.bf16.mxu0 0
  %317 = vmatmul.mubr.bf16.gmra.mxu0 %v196
  %v318 = vpop.f32.mrf.mxu0
  %v319 = vadd.f32 %v69, %v318
  %v320 = vpop.f32.mrf.mxu0
  %v321 = vpop.f32.mrf.mxu0
  %v322 = vadd.f32 %v69, %v321
  %v323 = vpop.f32.mrf.mxu0
  %324 = vmatprep.mubr.bf16.mxu0 0
  %325 = vmatmul.mubr.bf16.gmra.mxu0 %v199
  %v326 = vpop.f32.mrf.mxu0
  %v327 = vadd.f32 %v69, %v326
  %v328 = vpop.f32.mrf.mxu0
  %v329 = vpop.f32.mrf.mxu0
  %v330 = vadd.f32 %v69, %v329
  %v331 = vpop.f32.mrf.mxu0
  %332 = vmatprep.mubr.bf16.mxu0 0
  %333 = vmatmul.mubr.bf16.gmra.mxu0 %v202
  %v334 = vpop.f32.mrf.mxu0
  %v335 = vadd.f32 %v69, %v334
  %v336 = vpop.f32.mrf.mxu0
  %v337 = vpop.f32.mrf.mxu0
  %v338 = vadd.f32 %v69, %v337
  %v339 = vpop.f32.mrf.mxu0
  %340 = vmatprep.mubr.bf16.mxu0 0
  %341 = vmatmul.mubr.bf16.gmra.mxu0 %v205
  %v342 = vpop.f32.mrf.mxu0
  %v343 = vadd.f32 %v69, %v342
  %v344 = vpop.f32.mrf.mxu0
  %v345 = vpop.f32.mrf.mxu0
  %v346 = vadd.f32 %v69, %v345
  %v347 = vpop.f32.mrf.mxu0
  %348 = vmatprep.mubr.bf16.mxu0 0
  %349 = vmatmul.mubr.bf16.gmra.mxu0 %v208
  %v350 = vpop.f32.mrf.mxu0
  %v351 = vadd.f32 %v69, %v350
  %v352 = vpop.f32.mrf.mxu0
  %v353 = vpop.f32.mrf.mxu0
  %v354 = vadd.f32 %v69, %v353
  %v355 = vpop.f32.mrf.mxu0
  %356 = vmatprep.mubr.bf16.mxu0 0
  %357 = vmatmul.mubr.bf16.gmra.mxu0 %v211
  %v358 = vpop.f32.mrf.mxu0
  %v359 = vadd.f32 %v69, %v358
  %v360 = vpop.f32.mrf.mxu0
  %v361 = vpop.f32.mrf.mxu0
  %v362 = vadd.f32 %v69, %v361
  %v363 = vpop.f32.mrf.mxu0
  %364 = vmatprep.mubr.bf16.mxu0 0
  %365 = vmatmul.mubr.bf16.gmra.mxu0 %v214
  %v366 = vpop.f32.mrf.mxu0
  %v367 = vadd.f32 %v69, %v366
  %v368 = vpop.f32.mrf.mxu0
  %v369 = vpop.f32.mrf.mxu0
  %v370 = vadd.f32 %v69, %v369
  %v371 = vpop.f32.mrf.mxu0
  %372 = vmatprep.mubr.bf16.mxu0 0
  %373 = vmatmul.mubr.bf16.gmra.mxu0 %v217
  %v374 = vpop.f32.mrf.mxu0
  %v375 = vadd.f32 %v69, %v374
  %v376 = vpop.f32.mrf.mxu0
  %v377 = vpop.f32.mrf.mxu0
  %v378 = vadd.f32 %v69, %v377
  %v379 = vpop.f32.mrf.mxu0
  %380 = vmatprep.mubr.bf16.mxu0 0
  %381 = vmatmul.mubr.bf16.gmra.mxu0 %v220
  %v382 = vpop.f32.mrf.mxu0
  %v383 = vadd.f32 %v69, %v382
  %v384 = vpop.f32.mrf.mxu0
  %v385 = vpop.f32.mrf.mxu0
  %v386 = vadd.f32 %v69, %v385
  %v387 = vpop.f32.mrf.mxu0
  %388 = vmatprep.mubr.bf16.mxu0 0
  %389 = vmatmul.mubr.bf16.gmra.mxu0 %v223
  %v390 = vpop.f32.mrf.mxu0
  %v391 = vadd.f32 %v69, %v390
  %v392 = vpop.f32.mrf.mxu0
  %v393 = vpop.f32.mrf.mxu0
  %v394 = vadd.f32 %v69, %v393
  %v395 = vpop.f32.mrf.mxu0
  %396 = vmatprep.mubr.bf16.mxu0 0
  %397 = vmatmul.mubr.bf16.gmra.mxu0 %v226
  %v398 = vpop.f32.mrf.mxu0
  %v399 = vadd.f32 %v69, %v398
  %v400 = vpop.f32.mrf.mxu0
  %v401 = vpop.f32.mrf.mxu0
  %v402 = vadd.f32 %v69, %v401
  %v403 = vpop.f32.mrf.mxu0
  %404 = vdwg.mxu0
  %v405 = vmax.f32 %v263, 0.0
  %v406 = vmax.f32 %v266, 0.0
  %v407 = vmax.f32 %v271, 0.0
  %v408 = vmax.f32 %v274, 0.0
  %v409 = vmax.f32 %v279, 0.0
  %v410 = vmax.f32 %v282, 0.0
  %v411 = vmax.f32 %v287, 0.0
  %v412 = vmax.f32 %v290, 0.0
  %v413 = vmax.f32 %v295, 0.0
  %v414 = vmax.f32 %v298, 0.0
  %v415 = vmax.f32 %v303, 0.0
  %v416 = vmax.f32 %v306, 0.0
  %v417 = vmax.f32 %v311, 0.0
  %v418 = vmax.f32 %v314, 0.0
  %v419 = vmax.f32 %v319, 0.0
  %v420 = vmax.f32 %v322, 0.0
  %v421 = vmax.f32 %v327, 0.0
  %v422 = vmax.f32 %v330, 0.0
  %v423 = vmax.f32 %v335, 0.0
  %v424 = vmax.f32 %v338, 0.0
  %v425 = vmax.f32 %v343, 0.0
  %v426 = vmax.f32 %v346, 0.0
  %v427 = vmax.f32 %v351, 0.0
  %v428 = vmax.f32 %v354, 0.0
  %v429 = vmax.f32 %v359, 0.0
  %v430 = vmax.f32 %v362, 0.0
  %v431 = vmax.f32 %v367, 0.0
  %v432 = vmax.f32 %v370, 0.0
  %v433 = vmax.f32 %v375, 0.0
  %v434 = vmax.f32 %v378, 0.0
  %v435 = vmax.f32 %v383, 0.0
  %v436 = vmax.f32 %v386, 0.0
  %v437 = vmax.f32 %v391, 0.0
  %v438 = vmax.f32 %v394, 0.0
  %v439 = vmax.f32 %v399, 0.0
  %v440 = vmax.f32 %v402, 0.0
  %v441 = vld [vmem:[%s1] sm:$0xf]
  %v442 = vld [vmem:[%s1 + $0x4] sm:$0xf]
  %v443 = vld [vmem:[%s1 + $0x8] sm:$0xf]
  %v444 = vld [vmem:[%s1 + $0xc] sm:$0xf]
  %v445 = vld [vmem:[%s1 + $0x10] sm:$0xf]
  %v446 = vld [vmem:[%s1 + $0x14] sm:$0xf]
  %v447 = vld [vmem:[%s1 + $0x18] sm:$0xf]
  %v448 = vld [vmem:[%s1 + $0x1c] sm:$0xf]
  %v449 = vld [vmem:[%s1 + $0x20] sm:$0xf]
  %v450 = vld [vmem:[%s1 + $0x24] sm:$0xf]
  %v451 = vld [vmem:[%s1 + $0x28] sm:$0xf]
  %v452 = vld [vmem:[%s1 + $0x2c] sm:$0xf]
  %v453 = vld [vmem:[%s1 + $0x30] sm:$0xf]
  %v454 = vld [vmem:[%s1 + $0x34] sm:$0xf]
  %v455 = vld [vmem:[%s1 + $0x38] sm:$0xf]
  %v456 = vld [vmem:[%s1 + $0x3c] sm:$0xf]
  %v457 = vld [vmem:[%s1 + $0x40] sm:$0xf]
  %v458 = vld [vmem:[%s1 + $0x44] sm:$0xf]
  %v459 = vld [vmem:[%s1 + $0x48] sm:$0xf]
  %v460 = vld [vmem:[%s1 + $0x4c] sm:$0xf]
  %v461 = vld [vmem:[%s1 + $0x50] sm:$0xf]
  %v462 = vld [vmem:[%s1 + $0x54] sm:$0xf]
  %v463 = vld [vmem:[%s1 + $0x58] sm:$0xf]
  %v464 = vld [vmem:[%s1 + $0x5c] sm:$0xf]
  %v465 = vld [vmem:[%s1 + $0x60] sm:$0xf]
  %v466 = vld [vmem:[%s1 + $0x64] sm:$0xf]
  %v467 = vld [vmem:[%s1 + $0x68] sm:$0xf]
  %v468 = vld [vmem:[%s1 + $0x6c] sm:$0xf]
  %v469 = vld [vmem:[%s1 + $0x70] sm:$0xf]
  %v470 = vld [vmem:[%s1 + $0x74] sm:$0xf]
  %v471 = vld [vmem:[%s1 + $0x78] sm:$0xf]
  %v472 = vld [vmem:[%s1 + $0x7c] sm:$0xf]
  %v473 = vld [vmem:[%s1 + $0x80] sm:$0xf]
  %v474 = vld [vmem:[%s1 + $0x84] sm:$0xf]
  %v475 = vld [vmem:[%s1 + $0x88] sm:$0xf]
  %v476 = vld [vmem:[%s1 + $0x8c] sm:$0xf]
  %v513 = vunpack.c.l.b16 %v441
  %v514 = vunpack.c.l.b16 %v442
  %v515 = vunpack.c.l.b16 %v443
  %v516 = vunpack.c.l.b16 %v444
  %v517 = vunpack.c.l.b16 %v445
  %v518 = vunpack.c.l.b16 %v446
  %v519 = vunpack.c.l.b16 %v447
  %v520 = vunpack.c.l.b16 %v448
  %v521 = vunpack.c.l.b16 %v449
  %v522 = vunpack.c.l.b16 %v450
  %v523 = vunpack.c.l.b16 %v451
  %v524 = vunpack.c.l.b16 %v452
  %v525 = vunpack.c.l.b16 %v453
  %v526 = vunpack.c.l.b16 %v454
  %v527 = vunpack.c.l.b16 %v455
  %v528 = vunpack.c.l.b16 %v456
  %v529 = vunpack.c.l.b16 %v457
  %v530 = vunpack.c.l.b16 %v458
  %v531 = vunpack.c.l.b16 %v459
  %v532 = vunpack.c.l.b16 %v460
  %v533 = vunpack.c.l.b16 %v461
  %v534 = vunpack.c.l.b16 %v462
  %v535 = vunpack.c.l.b16 %v463
  %v536 = vunpack.c.l.b16 %v464
  %v537 = vunpack.c.l.b16 %v465
  %v538 = vunpack.c.l.b16 %v466
  %v539 = vunpack.c.l.b16 %v467
  %v540 = vunpack.c.l.b16 %v468
  %v541 = vunpack.c.l.b16 %v469
  %v542 = vunpack.c.l.b16 %v470
  %v543 = vunpack.c.l.b16 %v471
  %v544 = vunpack.c.l.b16 %v472
  %v545 = vunpack.c.l.b16 %v473
  %v546 = vunpack.c.l.b16 %v474
  %v547 = vunpack.c.l.b16 %v475
  %v548 = vunpack.c.l.b16 %v476
  %v549 = vpack.c.b16 %v514, %v513
  %v550 = vpack.c.b16 %v516, %v515
  %v551 = vpack.c.b16 %v518, %v517
  %v552 = vpack.c.b16 %v520, %v519
  %v553 = vpack.c.b16 %v522, %v521
  %v554 = vpack.c.b16 %v524, %v523
  %v555 = vpack.c.b16 %v526, %v525
  %v556 = vpack.c.b16 %v528, %v527
  %v557 = vpack.c.b16 %v530, %v529
  %v558 = vpack.c.b16 %v532, %v531
  %v559 = vpack.c.b16 %v534, %v533
  %v560 = vpack.c.b16 %v536, %v535
  %v561 = vpack.c.b16 %v538, %v537
  %v562 = vpack.c.b16 %v540, %v539
  %v563 = vpack.c.b16 %v542, %v541
  %v564 = vpack.c.b16 %v544, %v543
  %v565 = vpack.c.b16 %v546, %v545
  %v566 = vpack.c.b16 %v548, %v547
  %v568 = vsel %vm173, %v549, 0
  %v571 = vsel %vm173, %v550, 0
  %v574 = vsel %vm173, %v551, 0
  %v577 = vsel %vm173, %v552, 0
  %v580 = vsel %vm173, %v553, 0
  %v583 = vsel %vm173, %v554, 0
  %v586 = vsel %vm173, %v555, 0
  %v589 = vsel %vm173, %v556, 0
  %v592 = vsel %vm173, %v557, 0
  %v595 = vsel %vm173, %v558, 0
  %v598 = vsel %vm173, %v559, 0
  %v601 = vsel %vm173, %v560, 0
  %v604 = vsel %vm173, %v561, 0
  %v607 = vsel %vm173, %v562, 0
  %v610 = vsel %vm173, %v563, 0
  %v613 = vsel %vm173, %v564, 0
  %v616 = vsel %vm173, %v565, 0
  %v619 = vsel %vm173, %v566, 0
  %621 = vmatprep.subr.bf16.mxu0 0
  %622 = vmatpush1.bf16.msra.mxu0 0
  %623 = vmatprep.subr.bf16.mxu0 0
  %624 = vmatpush1.bf16.msra.mxu0 0
  %625 = vmatprep.subr.bf16.mxu0 0
  %626 = vmatpush1.bf16.msra.mxu0 0
  %627 = vmatprep.subr.bf16.mxu0 0
  %628 = vmatpush1.bf16.msra.mxu0 0
  %629 = vmatprep.subr.bf16.mxu0 0
  %630 = vmatpush1.bf16.msra.mxu0 0
  %631 = vmatprep.subr.bf16.mxu0 0
  %632 = vmatpush1.bf16.msra.mxu0 0
  %633 = vmatprep.subr.bf16.mxu0 0
  %634 = vmatpush1.bf16.msra.mxu0 %v170
  %635 = vmatprep.subr.bf16.mxu0 0
  %636 = vmatpush1.bf16.msra.mxu0 %v169
  %637 = vmatprep.subr.bf16.mxu0 0
  %638 = vmatpush2.bf16.msra.mxu0 0
  %639 = vmatprep.subr.bf16.mxu0 0
  %640 = vmatpush2.bf16.msra.mxu0 0
  %641 = vmatprep.subr.bf16.mxu0 0
  %642 = vmatpush2.bf16.msra.mxu0 0
  %643 = vmatprep.subr.bf16.mxu0 0
  %644 = vmatpush2.bf16.msra.mxu0 0
  %645 = vmatprep.subr.bf16.mxu0 0
  %646 = vmatpush2.bf16.msra.mxu0 0
  %647 = vmatprep.subr.bf16.mxu0 0
  %648 = vmatpush2.bf16.msra.mxu0 0
  %649 = vmatprep.subr.bf16.mxu0 0
  %650 = vmatpush2.bf16.msra.mxu0 0
  %651 = vmatprep.subr.bf16.mxu0 0
  %652 = vmatpush2.bf16.msra.mxu0 0
  %653 = vmatprep.mubr.bf16.mxu0 0
  %654 = vmatmul.mubr.bf16.gmra.mxu0 %v568
  %v655 = vpop.f32.mrf.mxu0
  %v656 = vadd.f32 %v69, %v655
  %v657 = vpop.f32.mrf.mxu0
  %v658 = vpop.f32.mrf.mxu0
  %v659 = vadd.f32 %v69, %v658
  %v660 = vpop.f32.mrf.mxu0
  %661 = vmatprep.mubr.bf16.mxu0 0
  %662 = vmatmul.mubr.bf16.gmra.mxu0 %v571
  %v663 = vpop.f32.mrf.mxu0
  %v664 = vadd.f32 %v69, %v663
  %v665 = vpop.f32.mrf.mxu0
  %v666 = vpop.f32.mrf.mxu0
  %v667 = vadd.f32 %v69, %v666
  %v668 = vpop.f32.mrf.mxu0
  %669 = vmatprep.mubr.bf16.mxu0 0
  %670 = vmatmul.mubr.bf16.gmra.mxu0 %v574
  %v671 = vpop.f32.mrf.mxu0
  %v672 = vadd.f32 %v69, %v671
  %v673 = vpop.f32.mrf.mxu0
  %v674 = vpop.f32.mrf.mxu0
  %v675 = vadd.f32 %v69, %v674
  %v676 = vpop.f32.mrf.mxu0
  %677 = vmatprep.mubr.bf16.mxu0 0
  %678 = vmatmul.mubr.bf16.gmra.mxu0 %v577
  %v679 = vpop.f32.mrf.mxu0
  %v680 = vadd.f32 %v69, %v679
  %v681 = vpop.f32.mrf.mxu0
  %v682 = vpop.f32.mrf.mxu0
  %v683 = vadd.f32 %v69, %v682
  %v684 = vpop.f32.mrf.mxu0
  %685 = vmatprep.mubr.bf16.mxu0 0
  %686 = vmatmul.mubr.bf16.gmra.mxu0 %v580
  %v687 = vpop.f32.mrf.mxu0
  %v688 = vadd.f32 %v69, %v687
  %v689 = vpop.f32.mrf.mxu0
  %v690 = vpop.f32.mrf.mxu0
  %v691 = vadd.f32 %v69, %v690
  %v692 = vpop.f32.mrf.mxu0
  %693 = vmatprep.mubr.bf16.mxu0 0
  %694 = vmatmul.mubr.bf16.gmra.mxu0 %v583
  %v695 = vpop.f32.mrf.mxu0
  %v696 = vadd.f32 %v69, %v695
  %v697 = vpop.f32.mrf.mxu0
  %v698 = vpop.f32.mrf.mxu0
  %v699 = vadd.f32 %v69, %v698
  %v700 = vpop.f32.mrf.mxu0
  %701 = vmatprep.mubr.bf16.mxu0 0
  %702 = vmatmul.mubr.bf16.gmra.mxu0 %v586
  %v703 = vpop.f32.mrf.mxu0
  %v704 = vadd.f32 %v69, %v703
  %v705 = vpop.f32.mrf.mxu0
  %v706 = vpop.f32.mrf.mxu0
  %v707 = vadd.f32 %v69, %v706
  %v708 = vpop.f32.mrf.mxu0
  %709 = vmatprep.mubr.bf16.mxu0 0
  %710 = vmatmul.mubr.bf16.gmra.mxu0 %v589
  %v711 = vpop.f32.mrf.mxu0
  %v712 = vadd.f32 %v69, %v711
  %v713 = vpop.f32.mrf.mxu0
  %v714 = vpop.f32.mrf.mxu0
  %v715 = vadd.f32 %v69, %v714
  %v716 = vpop.f32.mrf.mxu0
  %717 = vmatprep.mubr.bf16.mxu0 0
  %718 = vmatmul.mubr.bf16.gmra.mxu0 %v592
  %v719 = vpop.f32.mrf.mxu0
  %v720 = vadd.f32 %v69, %v719
  %v721 = vpop.f32.mrf.mxu0
  %v722 = vpop.f32.mrf.mxu0
  %v723 = vadd.f32 %v69, %v722
  %v724 = vpop.f32.mrf.mxu0
  %725 = vmatprep.mubr.bf16.mxu0 0
  %726 = vmatmul.mubr.bf16.gmra.mxu0 %v595
  %v727 = vpop.f32.mrf.mxu0
  %v728 = vadd.f32 %v69, %v727
  %v729 = vpop.f32.mrf.mxu0
  %v730 = vpop.f32.mrf.mxu0
  %v731 = vadd.f32 %v69, %v730
  %v732 = vpop.f32.mrf.mxu0
  %733 = vmatprep.mubr.bf16.mxu0 0
  %734 = vmatmul.mubr.bf16.gmra.mxu0 %v598
  %v735 = vpop.f32.mrf.mxu0
  %v736 = vadd.f32 %v69, %v735
  %v737 = vpop.f32.mrf.mxu0
  %v738 = vpop.f32.mrf.mxu0
  %v739 = vadd.f32 %v69, %v738
  %v740 = vpop.f32.mrf.mxu0
  %741 = vmatprep.mubr.bf16.mxu0 0
  %742 = vmatmul.mubr.bf16.gmra.mxu0 %v601
  %v743 = vpop.f32.mrf.mxu0
  %v744 = vadd.f32 %v69, %v743
  %v745 = vpop.f32.mrf.mxu0
  %v746 = vpop.f32.mrf.mxu0
  %v747 = vadd.f32 %v69, %v746
  %v748 = vpop.f32.mrf.mxu0
  %749 = vmatprep.mubr.bf16.mxu0 0
  %750 = vmatmul.mubr.bf16.gmra.mxu0 %v604
  %v751 = vpop.f32.mrf.mxu0
  %v752 = vadd.f32 %v69, %v751
  %v753 = vpop.f32.mrf.mxu0
  %v754 = vpop.f32.mrf.mxu0
  %v755 = vadd.f32 %v69, %v754
  %v756 = vpop.f32.mrf.mxu0
  %757 = vmatprep.mubr.bf16.mxu0 0
  %758 = vmatmul.mubr.bf16.gmra.mxu0 %v607
  %v759 = vpop.f32.mrf.mxu0
  %v760 = vadd.f32 %v69, %v759
  %v761 = vpop.f32.mrf.mxu0
  %v762 = vpop.f32.mrf.mxu0
  %v763 = vadd.f32 %v69, %v762
  %v764 = vpop.f32.mrf.mxu0
  %765 = vmatprep.mubr.bf16.mxu0 0
  %766 = vmatmul.mubr.bf16.gmra.mxu0 %v610
  %v767 = vpop.f32.mrf.mxu0
  %v768 = vadd.f32 %v69, %v767
  %v769 = vpop.f32.mrf.mxu0
  %v770 = vpop.f32.mrf.mxu0
  %v771 = vadd.f32 %v69, %v770
  %v772 = vpop.f32.mrf.mxu0
  %773 = vmatprep.mubr.bf16.mxu0 0
  %774 = vmatmul.mubr.bf16.gmra.mxu0 %v613
  %v775 = vpop.f32.mrf.mxu0
  %v776 = vadd.f32 %v69, %v775
  %v777 = vpop.f32.mrf.mxu0
  %v778 = vpop.f32.mrf.mxu0
  %v779 = vadd.f32 %v69, %v778
  %v780 = vpop.f32.mrf.mxu0
  %781 = vmatprep.mubr.bf16.mxu0 0
  %782 = vmatmul.mubr.bf16.gmra.mxu0 %v616
  %v783 = vpop.f32.mrf.mxu0
  %v784 = vadd.f32 %v69, %v783
  %v785 = vpop.f32.mrf.mxu0
  %v786 = vpop.f32.mrf.mxu0
  %v787 = vadd.f32 %v69, %v786
  %v788 = vpop.f32.mrf.mxu0
  %789 = vmatprep.mubr.bf16.mxu0 0
  %790 = vmatmul.mubr.bf16.gmra.mxu0 %v619
  %v791 = vpop.f32.mrf.mxu0
  %v792 = vadd.f32 %v69, %v791
  %v793 = vpop.f32.mrf.mxu0
  %v794 = vpop.f32.mrf.mxu0
  %v795 = vadd.f32 %v69, %v794
  %v796 = vpop.f32.mrf.mxu0
  %797 = vdwg.mxu0
  %v798 = vmax.f32 %v656, 0.0
  %v799 = vmax.f32 %v659, 0.0
  %v800 = vmax.f32 %v664, 0.0
  %v801 = vmax.f32 %v667, 0.0
  %v802 = vmax.f32 %v672, 0.0
  %v803 = vmax.f32 %v675, 0.0
  %v804 = vmax.f32 %v680, 0.0
  %v805 = vmax.f32 %v683, 0.0
  %v806 = vmax.f32 %v688, 0.0
  %v807 = vmax.f32 %v691, 0.0
  %v808 = vmax.f32 %v696, 0.0
  %v809 = vmax.f32 %v699, 0.0
  %v810 = vmax.f32 %v704, 0.0
  %v811 = vmax.f32 %v707, 0.0
  %v812 = vmax.f32 %v712, 0.0
  %v813 = vmax.f32 %v715, 0.0
  %v814 = vmax.f32 %v720, 0.0
  %v815 = vmax.f32 %v723, 0.0
  %v816 = vmax.f32 %v728, 0.0
  %v817 = vmax.f32 %v731, 0.0
  %v818 = vmax.f32 %v736, 0.0
  %v819 = vmax.f32 %v739, 0.0
  %v820 = vmax.f32 %v744, 0.0
  %v821 = vmax.f32 %v747, 0.0
  %v822 = vmax.f32 %v752, 0.0
  %v823 = vmax.f32 %v755, 0.0
  %v824 = vmax.f32 %v760, 0.0
  %v825 = vmax.f32 %v763, 0.0
  %v826 = vmax.f32 %v768, 0.0
  %v827 = vmax.f32 %v771, 0.0
  %v828 = vmax.f32 %v776, 0.0
  %v829 = vmax.f32 %v779, 0.0
  %v830 = vmax.f32 %v784, 0.0
  %v831 = vmax.f32 %v787, 0.0
  %v832 = vmax.f32 %v792, 0.0
  %v833 = vmax.f32 %v795, 0.0
  %v834 = vmax.f32 %v405, %v798
  %v835 = vmax.f32 %v406, %v799
  %v836 = vmax.f32 %v407, %v800
  %v837 = vmax.f32 %v408, %v801
  %v838 = vmax.f32 %v409, %v802
  %v839 = vmax.f32 %v410, %v803
  %v840 = vmax.f32 %v411, %v804
  %v841 = vmax.f32 %v412, %v805
  %v842 = vmax.f32 %v413, %v806
  %v843 = vmax.f32 %v414, %v807
  %v844 = vmax.f32 %v415, %v808
  %v845 = vmax.f32 %v416, %v809
  %v846 = vmax.f32 %v417, %v810
  %v847 = vmax.f32 %v418, %v811
  %v848 = vmax.f32 %v419, %v812
  %v849 = vmax.f32 %v420, %v813
  %v850 = vmax.f32 %v421, %v814
  %v851 = vmax.f32 %v422, %v815
  %v852 = vmax.f32 %v423, %v816
  %v853 = vmax.f32 %v424, %v817
  %v854 = vmax.f32 %v425, %v818
  %v855 = vmax.f32 %v426, %v819
  %v856 = vmax.f32 %v427, %v820
  %v857 = vmax.f32 %v428, %v821
  %v858 = vmax.f32 %v429, %v822
  %v859 = vmax.f32 %v430, %v823
  %v860 = vmax.f32 %v431, %v824
  %v861 = vmax.f32 %v432, %v825
  %v862 = vmax.f32 %v433, %v826
  %v863 = vmax.f32 %v434, %v827
  %v864 = vmax.f32 %v435, %v828
  %v865 = vmax.f32 %v436, %v829
  %v866 = vmax.f32 %v437, %v830
  %v867 = vmax.f32 %v438, %v831
  %v868 = vmax.f32 %v439, %v832
  %v869 = vmax.f32 %v440, %v833
  %v870 = vld [vmem:[%s2] sm:$0xf]
  %v871 = vld [vmem:[%s2 + $0x4] sm:$0xf]
  %v872 = vld [vmem:[%s2 + $0x8] sm:$0xf]
  %v873 = vld [vmem:[%s2 + $0xc] sm:$0xf]
  %v874 = vld [vmem:[%s2 + $0x10] sm:$0xf]
  %v875 = vld [vmem:[%s2 + $0x14] sm:$0xf]
  %v876 = vld [vmem:[%s2 + $0x18] sm:$0xf]
  %v877 = vld [vmem:[%s2 + $0x1c] sm:$0xf]
  %v878 = vld [vmem:[%s2 + $0x20] sm:$0xf]
  %v879 = vld [vmem:[%s2 + $0x24] sm:$0xf]
  %v880 = vld [vmem:[%s2 + $0x28] sm:$0xf]
  %v881 = vld [vmem:[%s2 + $0x2c] sm:$0xf]
  %v882 = vld [vmem:[%s2 + $0x30] sm:$0xf]
  %v883 = vld [vmem:[%s2 + $0x34] sm:$0xf]
  %v884 = vld [vmem:[%s2 + $0x38] sm:$0xf]
  %v885 = vld [vmem:[%s2 + $0x3c] sm:$0xf]
  %v886 = vld [vmem:[%s2 + $0x40] sm:$0xf]
  %v887 = vld [vmem:[%s2 + $0x44] sm:$0xf]
  %v888 = vld [vmem:[%s2 + $0x48] sm:$0xf]
  %v889 = vld [vmem:[%s2 + $0x4c] sm:$0xf]
  %v890 = vld [vmem:[%s2 + $0x50] sm:$0xf]
  %v891 = vld [vmem:[%s2 + $0x54] sm:$0xf]
  %v892 = vld [vmem:[%s2 + $0x58] sm:$0xf]
  %v893 = vld [vmem:[%s2 + $0x5c] sm:$0xf]
  %v894 = vld [vmem:[%s2 + $0x60] sm:$0xf]
  %v895 = vld [vmem:[%s2 + $0x64] sm:$0xf]
  %v896 = vld [vmem:[%s2 + $0x68] sm:$0xf]
  %v897 = vld [vmem:[%s2 + $0x6c] sm:$0xf]
  %v898 = vld [vmem:[%s2 + $0x70] sm:$0xf]
  %v899 = vld [vmem:[%s2 + $0x74] sm:$0xf]
  %v900 = vld [vmem:[%s2 + $0x78] sm:$0xf]
  %v901 = vld [vmem:[%s2 + $0x7c] sm:$0xf]
  %v902 = vld [vmem:[%s2 + $0x80] sm:$0xf]
  %v903 = vld [vmem:[%s2 + $0x84] sm:$0xf]
  %v904 = vld [vmem:[%s2 + $0x88] sm:$0xf]
  %v905 = vld [vmem:[%s2 + $0x8c] sm:$0xf]
  %v942 = vunpack.c.l.b16 %v870
  %v943 = vunpack.c.l.b16 %v871
  %v944 = vunpack.c.l.b16 %v872
  %v945 = vunpack.c.l.b16 %v873
  %v946 = vunpack.c.l.b16 %v874
  %v947 = vunpack.c.l.b16 %v875
  %v948 = vunpack.c.l.b16 %v876
  %v949 = vunpack.c.l.b16 %v877
  %v950 = vunpack.c.l.b16 %v878
  %v951 = vunpack.c.l.b16 %v879
  %v952 = vunpack.c.l.b16 %v880
  %v953 = vunpack.c.l.b16 %v881
  %v954 = vunpack.c.l.b16 %v882
  %v955 = vunpack.c.l.b16 %v883
  %v956 = vunpack.c.l.b16 %v884
  %v957 = vunpack.c.l.b16 %v885
  %v958 = vunpack.c.l.b16 %v886
  %v959 = vunpack.c.l.b16 %v887
  %v960 = vunpack.c.l.b16 %v888
  %v961 = vunpack.c.l.b16 %v889
  %v962 = vunpack.c.l.b16 %v890
  %v963 = vunpack.c.l.b16 %v891
  %v964 = vunpack.c.l.b16 %v892
  %v965 = vunpack.c.l.b16 %v893
  %v966 = vunpack.c.l.b16 %v894
  %v967 = vunpack.c.l.b16 %v895
  %v968 = vunpack.c.l.b16 %v896
  %v969 = vunpack.c.l.b16 %v897
  %v970 = vunpack.c.l.b16 %v898
  %v971 = vunpack.c.l.b16 %v899
  %v972 = vunpack.c.l.b16 %v900
  %v973 = vunpack.c.l.b16 %v901
  %v974 = vunpack.c.l.b16 %v902
  %v975 = vunpack.c.l.b16 %v903
  %v976 = vunpack.c.l.b16 %v904
  %v977 = vunpack.c.l.b16 %v905
  %v978 = vpack.c.b16 %v943, %v942
  %v979 = vpack.c.b16 %v945, %v944
  %v980 = vpack.c.b16 %v947, %v946
  %v981 = vpack.c.b16 %v949, %v948
  %v982 = vpack.c.b16 %v951, %v950
  %v983 = vpack.c.b16 %v953, %v952
  %v984 = vpack.c.b16 %v955, %v954
  %v985 = vpack.c.b16 %v957, %v956
  %v986 = vpack.c.b16 %v959, %v958
  %v987 = vpack.c.b16 %v961, %v960
  %v988 = vpack.c.b16 %v963, %v962
  %v989 = vpack.c.b16 %v965, %v964
  %v990 = vpack.c.b16 %v967, %v966
  %v991 = vpack.c.b16 %v969, %v968
  %v992 = vpack.c.b16 %v971, %v970
  %v993 = vpack.c.b16 %v973, %v972
  %v994 = vpack.c.b16 %v975, %v974
  %v995 = vpack.c.b16 %v977, %v976
  %v997 = vsel %vm173, %v978, 0
  %v1000 = vsel %vm173, %v979, 0
  %v1003 = vsel %vm173, %v980, 0
  %v1006 = vsel %vm173, %v981, 0
  %v1009 = vsel %vm173, %v982, 0
  %v1012 = vsel %vm173, %v983, 0
  %v1015 = vsel %vm173, %v984, 0
  %v1018 = vsel %vm173, %v985, 0
  %v1021 = vsel %vm173, %v986, 0
  %v1024 = vsel %vm173, %v987, 0
  %v1027 = vsel %vm173, %v988, 0
  %v1030 = vsel %vm173, %v989, 0
  %v1033 = vsel %vm173, %v990, 0
  %v1036 = vsel %vm173, %v991, 0
  %v1039 = vsel %vm173, %v992, 0
  %v1042 = vsel %vm173, %v993, 0
  %v1045 = vsel %vm173, %v994, 0
  %v1048 = vsel %vm173, %v995, 0
  %1050 = vmatprep.subr.bf16.mxu0 0
  %1051 = vmatpush1.bf16.msra.mxu0 0
  %1052 = vmatprep.subr.bf16.mxu0 0
  %1053 = vmatpush1.bf16.msra.mxu0 0
  %1054 = vmatprep.subr.bf16.mxu0 0
  %1055 = vmatpush1.bf16.msra.mxu0 0
  %1056 = vmatprep.subr.bf16.mxu0 0
  %1057 = vmatpush1.bf16.msra.mxu0 0
  %1058 = vmatprep.subr.bf16.mxu0 0
  %1059 = vmatpush1.bf16.msra.mxu0 0
  %1060 = vmatprep.subr.bf16.mxu0 0
  %1061 = vmatpush1.bf16.msra.mxu0 0
  %1062 = vmatprep.subr.bf16.mxu0 0
  %1063 = vmatpush1.bf16.msra.mxu0 %v170
  %1064 = vmatprep.subr.bf16.mxu0 0
  %1065 = vmatpush1.bf16.msra.mxu0 %v169
  %1066 = vmatprep.subr.bf16.mxu0 0
  %1067 = vmatpush2.bf16.msra.mxu0 0
  %1068 = vmatprep.subr.bf16.mxu0 0
  %1069 = vmatpush2.bf16.msra.mxu0 0
  %1070 = vmatprep.subr.bf16.mxu0 0
  %1071 = vmatpush2.bf16.msra.mxu0 0
  %1072 = vmatprep.subr.bf16.mxu0 0
  %1073 = vmatpush2.bf16.msra.mxu0 0
  %1074 = vmatprep.subr.bf16.mxu0 0
  %1075 = vmatpush2.bf16.msra.mxu0 0
  %1076 = vmatprep.subr.bf16.mxu0 0
  %1077 = vmatpush2.bf16.msra.mxu0 0
  %1078 = vmatprep.subr.bf16.mxu0 0
  %1079 = vmatpush2.bf16.msra.mxu0 0
  %1080 = vmatprep.subr.bf16.mxu0 0
  %1081 = vmatpush2.bf16.msra.mxu0 0
  %1082 = vmatprep.mubr.bf16.mxu0 0
  %1083 = vmatmul.mubr.bf16.gmra.mxu0 %v997
  %v1084 = vpop.f32.mrf.mxu0
  %v1085 = vadd.f32 %v69, %v1084
  %v1086 = vpop.f32.mrf.mxu0
  %v1087 = vpop.f32.mrf.mxu0
  %v1088 = vadd.f32 %v69, %v1087
  %v1089 = vpop.f32.mrf.mxu0
  %1090 = vmatprep.mubr.bf16.mxu0 0
  %1091 = vmatmul.mubr.bf16.gmra.mxu0 %v1000
  %v1092 = vpop.f32.mrf.mxu0
  %v1093 = vadd.f32 %v69, %v1092
  %v1094 = vpop.f32.mrf.mxu0
  %v1095 = vpop.f32.mrf.mxu0
  %v1096 = vadd.f32 %v69, %v1095
  %v1097 = vpop.f32.mrf.mxu0
  %1098 = vmatprep.mubr.bf16.mxu0 0
  %1099 = vmatmul.mubr.bf16.gmra.mxu0 %v1003
  %v1100 = vpop.f32.mrf.mxu0
  %v1101 = vadd.f32 %v69, %v1100
  %v1102 = vpop.f32.mrf.mxu0
  %v1103 = vpop.f32.mrf.mxu0
  %v1104 = vadd.f32 %v69, %v1103
  %v1105 = vpop.f32.mrf.mxu0
  %1106 = vmatprep.mubr.bf16.mxu0 0
  %1107 = vmatmul.mubr.bf16.gmra.mxu0 %v1006
  %v1108 = vpop.f32.mrf.mxu0
  %v1109 = vadd.f32 %v69, %v1108
  %v1110 = vpop.f32.mrf.mxu0
  %v1111 = vpop.f32.mrf.mxu0
  %v1112 = vadd.f32 %v69, %v1111
  %v1113 = vpop.f32.mrf.mxu0
  %1114 = vmatprep.mubr.bf16.mxu0 0
  %1115 = vmatmul.mubr.bf16.gmra.mxu0 %v1009
  %v1116 = vpop.f32.mrf.mxu0
  %v1117 = vadd.f32 %v69, %v1116
  %v1118 = vpop.f32.mrf.mxu0
  %v1119 = vpop.f32.mrf.mxu0
  %v1120 = vadd.f32 %v69, %v1119
  %v1121 = vpop.f32.mrf.mxu0
  %1122 = vmatprep.mubr.bf16.mxu0 0
  %1123 = vmatmul.mubr.bf16.gmra.mxu0 %v1012
  %v1124 = vpop.f32.mrf.mxu0
  %v1125 = vadd.f32 %v69, %v1124
  %v1126 = vpop.f32.mrf.mxu0
  %v1127 = vpop.f32.mrf.mxu0
  %v1128 = vadd.f32 %v69, %v1127
  %v1129 = vpop.f32.mrf.mxu0
  %1130 = vmatprep.mubr.bf16.mxu0 0
  %1131 = vmatmul.mubr.bf16.gmra.mxu0 %v1015
  %v1132 = vpop.f32.mrf.mxu0
  %v1133 = vadd.f32 %v69, %v1132
  %v1134 = vpop.f32.mrf.mxu0
  %v1135 = vpop.f32.mrf.mxu0
  %v1136 = vadd.f32 %v69, %v1135
  %v1137 = vpop.f32.mrf.mxu0
  %1138 = vmatprep.mubr.bf16.mxu0 0
  %1139 = vmatmul.mubr.bf16.gmra.mxu0 %v1018
  %v1140 = vpop.f32.mrf.mxu0
  %v1141 = vadd.f32 %v69, %v1140
  %v1142 = vpop.f32.mrf.mxu0
  %v1143 = vpop.f32.mrf.mxu0
  %v1144 = vadd.f32 %v69, %v1143
  %v1145 = vpop.f32.mrf.mxu0
  %1146 = vmatprep.mubr.bf16.mxu0 0
  %1147 = vmatmul.mubr.bf16.gmra.mxu0 %v1021
  %v1148 = vpop.f32.mrf.mxu0
  %v1149 = vadd.f32 %v69, %v1148
  %v1150 = vpop.f32.mrf.mxu0
  %v1151 = vpop.f32.mrf.mxu0
  %v1152 = vadd.f32 %v69, %v1151
  %v1153 = vpop.f32.mrf.mxu0
  %1154 = vmatprep.mubr.bf16.mxu0 0
  %1155 = vmatmul.mubr.bf16.gmra.mxu0 %v1024
  %v1156 = vpop.f32.mrf.mxu0
  %v1157 = vadd.f32 %v69, %v1156
  %v1158 = vpop.f32.mrf.mxu0
  %v1159 = vpop.f32.mrf.mxu0
  %v1160 = vadd.f32 %v69, %v1159
  %v1161 = vpop.f32.mrf.mxu0
  %1162 = vmatprep.mubr.bf16.mxu0 0
  %1163 = vmatmul.mubr.bf16.gmra.mxu0 %v1027
  %v1164 = vpop.f32.mrf.mxu0
  %v1165 = vadd.f32 %v69, %v1164
  %v1166 = vpop.f32.mrf.mxu0
  %v1167 = vpop.f32.mrf.mxu0
  %v1168 = vadd.f32 %v69, %v1167
  %v1169 = vpop.f32.mrf.mxu0
  %1170 = vmatprep.mubr.bf16.mxu0 0
  %1171 = vmatmul.mubr.bf16.gmra.mxu0 %v1030
  %v1172 = vpop.f32.mrf.mxu0
  %v1173 = vadd.f32 %v69, %v1172
  %v1174 = vpop.f32.mrf.mxu0
  %v1175 = vpop.f32.mrf.mxu0
  %v1176 = vadd.f32 %v69, %v1175
  %v1177 = vpop.f32.mrf.mxu0
  %1178 = vmatprep.mubr.bf16.mxu0 0
  %1179 = vmatmul.mubr.bf16.gmra.mxu0 %v1033
  %v1180 = vpop.f32.mrf.mxu0
  %v1181 = vadd.f32 %v69, %v1180
  %v1182 = vpop.f32.mrf.mxu0
  %v1183 = vpop.f32.mrf.mxu0
  %v1184 = vadd.f32 %v69, %v1183
  %v1185 = vpop.f32.mrf.mxu0
  %1186 = vmatprep.mubr.bf16.mxu0 0
  %1187 = vmatmul.mubr.bf16.gmra.mxu0 %v1036
  %v1188 = vpop.f32.mrf.mxu0
  %v1189 = vadd.f32 %v69, %v1188
  %v1190 = vpop.f32.mrf.mxu0
  %v1191 = vpop.f32.mrf.mxu0
  %v1192 = vadd.f32 %v69, %v1191
  %v1193 = vpop.f32.mrf.mxu0
  %1194 = vmatprep.mubr.bf16.mxu0 0
  %1195 = vmatmul.mubr.bf16.gmra.mxu0 %v1039
  %v1196 = vpop.f32.mrf.mxu0
  %v1197 = vadd.f32 %v69, %v1196
  %v1198 = vpop.f32.mrf.mxu0
  %v1199 = vpop.f32.mrf.mxu0
  %v1200 = vadd.f32 %v69, %v1199
  %v1201 = vpop.f32.mrf.mxu0
  %1202 = vmatprep.mubr.bf16.mxu0 0
  %1203 = vmatmul.mubr.bf16.gmra.mxu0 %v1042
  %v1204 = vpop.f32.mrf.mxu0
  %v1205 = vadd.f32 %v69, %v1204
  %v1206 = vpop.f32.mrf.mxu0
  %v1207 = vpop.f32.mrf.mxu0
  %v1208 = vadd.f32 %v69, %v1207
  %v1209 = vpop.f32.mrf.mxu0
  %1210 = vmatprep.mubr.bf16.mxu0 0
  %1211 = vmatmul.mubr.bf16.gmra.mxu0 %v1045
  %v1212 = vpop.f32.mrf.mxu0
  %v1213 = vadd.f32 %v69, %v1212
  %v1214 = vpop.f32.mrf.mxu0
  %v1215 = vpop.f32.mrf.mxu0
  %v1216 = vadd.f32 %v69, %v1215
  %v1217 = vpop.f32.mrf.mxu0
  %1218 = vmatprep.mubr.bf16.mxu0 0
  %1219 = vmatmul.mubr.bf16.gmra.mxu0 %v1048
  %v1220 = vpop.f32.mrf.mxu0
  %v1221 = vadd.f32 %v69, %v1220
  %v1222 = vpop.f32.mrf.mxu0
  %v1223 = vpop.f32.mrf.mxu0
  %v1224 = vadd.f32 %v69, %v1223
  %v1225 = vpop.f32.mrf.mxu0
  %1226 = vdwg.mxu0
  %v1227 = vmax.f32 %v1085, 0.0
  %v1228 = vmax.f32 %v1088, 0.0
  %v1229 = vmax.f32 %v1093, 0.0
  %v1230 = vmax.f32 %v1096, 0.0
  %v1231 = vmax.f32 %v1101, 0.0
  %v1232 = vmax.f32 %v1104, 0.0
  %v1233 = vmax.f32 %v1109, 0.0
  %v1234 = vmax.f32 %v1112, 0.0
  %v1235 = vmax.f32 %v1117, 0.0
  %v1236 = vmax.f32 %v1120, 0.0
  %v1237 = vmax.f32 %v1125, 0.0
  %v1238 = vmax.f32 %v1128, 0.0
  %v1239 = vmax.f32 %v1133, 0.0
  %v1240 = vmax.f32 %v1136, 0.0
  %v1241 = vmax.f32 %v1141, 0.0
  %v1242 = vmax.f32 %v1144, 0.0
  %v1243 = vmax.f32 %v1149, 0.0
  %v1244 = vmax.f32 %v1152, 0.0
  %v1245 = vmax.f32 %v1157, 0.0
  %v1246 = vmax.f32 %v1160, 0.0
  %v1247 = vmax.f32 %v1165, 0.0
  %v1248 = vmax.f32 %v1168, 0.0
  %v1249 = vmax.f32 %v1173, 0.0
  %v1250 = vmax.f32 %v1176, 0.0
  %v1251 = vmax.f32 %v1181, 0.0
  %v1252 = vmax.f32 %v1184, 0.0
  %v1253 = vmax.f32 %v1189, 0.0
  %v1254 = vmax.f32 %v1192, 0.0
  %v1255 = vmax.f32 %v1197, 0.0
  %v1256 = vmax.f32 %v1200, 0.0
  %v1257 = vmax.f32 %v1205, 0.0
  %v1258 = vmax.f32 %v1208, 0.0
  %v1259 = vmax.f32 %v1213, 0.0
  %v1260 = vmax.f32 %v1216, 0.0
  %v1261 = vmax.f32 %v1221, 0.0
  %v1262 = vmax.f32 %v1224, 0.0
  %v1263 = vld [vmem:[%s3] sm:$0xf]
  %v1264 = vld [vmem:[%s3 + $0x4] sm:$0xf]
  %v1265 = vld [vmem:[%s3 + $0x8] sm:$0xf]
  %v1266 = vld [vmem:[%s3 + $0xc] sm:$0xf]
  %v1267 = vld [vmem:[%s3 + $0x10] sm:$0xf]
  %v1268 = vld [vmem:[%s3 + $0x14] sm:$0xf]
  %v1269 = vld [vmem:[%s3 + $0x18] sm:$0xf]
  %v1270 = vld [vmem:[%s3 + $0x1c] sm:$0xf]
  %v1271 = vld [vmem:[%s3 + $0x20] sm:$0xf]
  %v1272 = vld [vmem:[%s3 + $0x24] sm:$0xf]
  %v1273 = vld [vmem:[%s3 + $0x28] sm:$0xf]
  %v1274 = vld [vmem:[%s3 + $0x2c] sm:$0xf]
  %v1275 = vld [vmem:[%s3 + $0x30] sm:$0xf]
  %v1276 = vld [vmem:[%s3 + $0x34] sm:$0xf]
  %v1277 = vld [vmem:[%s3 + $0x38] sm:$0xf]
  %v1278 = vld [vmem:[%s3 + $0x3c] sm:$0xf]
  %v1279 = vld [vmem:[%s3 + $0x40] sm:$0xf]
  %v1280 = vld [vmem:[%s3 + $0x44] sm:$0xf]
  %v1281 = vld [vmem:[%s3 + $0x48] sm:$0xf]
  %v1282 = vld [vmem:[%s3 + $0x4c] sm:$0xf]
  %v1283 = vld [vmem:[%s3 + $0x50] sm:$0xf]
  %v1284 = vld [vmem:[%s3 + $0x54] sm:$0xf]
  %v1285 = vld [vmem:[%s3 + $0x58] sm:$0xf]
  %v1286 = vld [vmem:[%s3 + $0x5c] sm:$0xf]
  %v1287 = vld [vmem:[%s3 + $0x60] sm:$0xf]
  %v1288 = vld [vmem:[%s3 + $0x64] sm:$0xf]
  %v1289 = vld [vmem:[%s3 + $0x68] sm:$0xf]
  %v1290 = vld [vmem:[%s3 + $0x6c] sm:$0xf]
  %v1291 = vld [vmem:[%s3 + $0x70] sm:$0xf]
  %v1292 = vld [vmem:[%s3 + $0x74] sm:$0xf]
  %v1293 = vld [vmem:[%s3 + $0x78] sm:$0xf]
  %v1294 = vld [vmem:[%s3 + $0x7c] sm:$0xf]
  %v1295 = vld [vmem:[%s3 + $0x80] sm:$0xf]
  %v1296 = vld [vmem:[%s3 + $0x84] sm:$0xf]
  %v1297 = vld [vmem:[%s3 + $0x88] sm:$0xf]
  %v1298 = vld [vmem:[%s3 + $0x8c] sm:$0xf]
  %v1335 = vunpack.c.l.b16 %v1263
  %v1336 = vunpack.c.l.b16 %v1264
  %v1337 = vunpack.c.l.b16 %v1265
  %v1338 = vunpack.c.l.b16 %v1266
  %v1339 = vunpack.c.l.b16 %v1267
  %v1340 = vunpack.c.l.b16 %v1268
  %v1341 = vunpack.c.l.b16 %v1269
  %v1342 = vunpack.c.l.b16 %v1270
  %v1343 = vunpack.c.l.b16 %v1271
  %v1344 = vunpack.c.l.b16 %v1272
  %v1345 = vunpack.c.l.b16 %v1273
  %v1346 = vunpack.c.l.b16 %v1274
  %v1347 = vunpack.c.l.b16 %v1275
  %v1348 = vunpack.c.l.b16 %v1276
  %v1349 = vunpack.c.l.b16 %v1277
  %v1350 = vunpack.c.l.b16 %v1278
  %v1351 = vunpack.c.l.b16 %v1279
  %v1352 = vunpack.c.l.b16 %v1280
  %v1353 = vunpack.c.l.b16 %v1281
  %v1354 = vunpack.c.l.b16 %v1282
  %v1355 = vunpack.c.l.b16 %v1283
  %v1356 = vunpack.c.l.b16 %v1284
  %v1357 = vunpack.c.l.b16 %v1285
  %v1358 = vunpack.c.l.b16 %v1286
  %v1359 = vunpack.c.l.b16 %v1287
  %v1360 = vunpack.c.l.b16 %v1288
  %v1361 = vunpack.c.l.b16 %v1289
  %v1362 = vunpack.c.l.b16 %v1290
  %v1363 = vunpack.c.l.b16 %v1291
  %v1364 = vunpack.c.l.b16 %v1292
  %v1365 = vunpack.c.l.b16 %v1293
  %v1366 = vunpack.c.l.b16 %v1294
  %v1367 = vunpack.c.l.b16 %v1295
  %v1368 = vunpack.c.l.b16 %v1296
  %v1369 = vunpack.c.l.b16 %v1297
  %v1370 = vunpack.c.l.b16 %v1298
  %v1371 = vpack.c.b16 %v1336, %v1335
  %v1372 = vpack.c.b16 %v1338, %v1337
  %v1373 = vpack.c.b16 %v1340, %v1339
  %v1374 = vpack.c.b16 %v1342, %v1341
  %v1375 = vpack.c.b16 %v1344, %v1343
  %v1376 = vpack.c.b16 %v1346, %v1345
  %v1377 = vpack.c.b16 %v1348, %v1347
  %v1378 = vpack.c.b16 %v1350, %v1349
  %v1379 = vpack.c.b16 %v1352, %v1351
  %v1380 = vpack.c.b16 %v1354, %v1353
  %v1381 = vpack.c.b16 %v1356, %v1355
  %v1382 = vpack.c.b16 %v1358, %v1357
  %v1383 = vpack.c.b16 %v1360, %v1359
  %v1384 = vpack.c.b16 %v1362, %v1361
  %v1385 = vpack.c.b16 %v1364, %v1363
  %v1386 = vpack.c.b16 %v1366, %v1365
  %v1387 = vpack.c.b16 %v1368, %v1367
  %v1388 = vpack.c.b16 %v1370, %v1369
  %v1390 = vsel %vm173, %v1371, 0
  %v1393 = vsel %vm173, %v1372, 0
  %v1396 = vsel %vm173, %v1373, 0
  %v1399 = vsel %vm173, %v1374, 0
  %v1402 = vsel %vm173, %v1375, 0
  %v1405 = vsel %vm173, %v1376, 0
  %v1408 = vsel %vm173, %v1377, 0
  %v1411 = vsel %vm173, %v1378, 0
  %v1414 = vsel %vm173, %v1379, 0
  %v1417 = vsel %vm173, %v1380, 0
  %v1420 = vsel %vm173, %v1381, 0
  %v1423 = vsel %vm173, %v1382, 0
  %v1426 = vsel %vm173, %v1383, 0
  %v1429 = vsel %vm173, %v1384, 0
  %v1432 = vsel %vm173, %v1385, 0
  %v1435 = vsel %vm173, %v1386, 0
  %v1438 = vsel %vm173, %v1387, 0
  %v1441 = vsel %vm173, %v1388, 0
  %1443 = vmatprep.subr.bf16.mxu0 0
  %1444 = vmatpush1.bf16.msra.mxu0 0
  %1445 = vmatprep.subr.bf16.mxu0 0
  %1446 = vmatpush1.bf16.msra.mxu0 0
  %1447 = vmatprep.subr.bf16.mxu0 0
  %1448 = vmatpush1.bf16.msra.mxu0 0
  %1449 = vmatprep.subr.bf16.mxu0 0
  %1450 = vmatpush1.bf16.msra.mxu0 0
  %1451 = vmatprep.subr.bf16.mxu0 0
  %1452 = vmatpush1.bf16.msra.mxu0 0
  %1453 = vmatprep.subr.bf16.mxu0 0
  %1454 = vmatpush1.bf16.msra.mxu0 0
  %1455 = vmatprep.subr.bf16.mxu0 0
  %1456 = vmatpush1.bf16.msra.mxu0 %v170
  %1457 = vmatprep.subr.bf16.mxu0 0
  %1458 = vmatpush1.bf16.msra.mxu0 %v169
  %1459 = vmatprep.subr.bf16.mxu0 0
  %1460 = vmatpush2.bf16.msra.mxu0 0
  %1461 = vmatprep.subr.bf16.mxu0 0
  %1462 = vmatpush2.bf16.msra.mxu0 0
  %1463 = vmatprep.subr.bf16.mxu0 0
  %1464 = vmatpush2.bf16.msra.mxu0 0
  %1465 = vmatprep.subr.bf16.mxu0 0
  %1466 = vmatpush2.bf16.msra.mxu0 0
  %1467 = vmatprep.subr.bf16.mxu0 0
  %1468 = vmatpush2.bf16.msra.mxu0 0
  %1469 = vmatprep.subr.bf16.mxu0 0
  %1470 = vmatpush2.bf16.msra.mxu0 0
  %1471 = vmatprep.subr.bf16.mxu0 0
  %1472 = vmatpush2.bf16.msra.mxu0 0
  %1473 = vmatprep.subr.bf16.mxu0 0
  %1474 = vmatpush2.bf16.msra.mxu0 0
  %1475 = vmatprep.mubr.bf16.mxu0 0
  %1476 = vmatmul.mubr.bf16.gmra.mxu0 %v1390
  %v1477 = vpop.f32.mrf.mxu0
  %v1478 = vadd.f32 %v69, %v1477
  %v1479 = vpop.f32.mrf.mxu0
  %v1480 = vpop.f32.mrf.mxu0
  %v1481 = vadd.f32 %v69, %v1480
  %v1482 = vpop.f32.mrf.mxu0
  %1483 = vmatprep.mubr.bf16.mxu0 0
  %1484 = vmatmul.mubr.bf16.gmra.mxu0 %v1393
  %v1485 = vpop.f32.mrf.mxu0
  %v1486 = vadd.f32 %v69, %v1485
  %v1487 = vpop.f32.mrf.mxu0
  %v1488 = vpop.f32.mrf.mxu0
  %v1489 = vadd.f32 %v69, %v1488
  %v1490 = vpop.f32.mrf.mxu0
  %1491 = vmatprep.mubr.bf16.mxu0 0
  %1492 = vmatmul.mubr.bf16.gmra.mxu0 %v1396
  %v1493 = vpop.f32.mrf.mxu0
  %v1494 = vadd.f32 %v69, %v1493
  %v1495 = vpop.f32.mrf.mxu0
  %v1496 = vpop.f32.mrf.mxu0
  %v1497 = vadd.f32 %v69, %v1496
  %v1498 = vpop.f32.mrf.mxu0
  %1499 = vmatprep.mubr.bf16.mxu0 0
  %1500 = vmatmul.mubr.bf16.gmra.mxu0 %v1399
  %v1501 = vpop.f32.mrf.mxu0
  %v1502 = vadd.f32 %v69, %v1501
  %v1503 = vpop.f32.mrf.mxu0
  %v1504 = vpop.f32.mrf.mxu0
  %v1505 = vadd.f32 %v69, %v1504
  %v1506 = vpop.f32.mrf.mxu0
  %1507 = vmatprep.mubr.bf16.mxu0 0
  %1508 = vmatmul.mubr.bf16.gmra.mxu0 %v1402
  %v1509 = vpop.f32.mrf.mxu0
  %v1510 = vadd.f32 %v69, %v1509
  %v1511 = vpop.f32.mrf.mxu0
  %v1512 = vpop.f32.mrf.mxu0
  %v1513 = vadd.f32 %v69, %v1512
  %v1514 = vpop.f32.mrf.mxu0
  %1515 = vmatprep.mubr.bf16.mxu0 0
  %1516 = vmatmul.mubr.bf16.gmra.mxu0 %v1405
  %v1517 = vpop.f32.mrf.mxu0
  %v1518 = vadd.f32 %v69, %v1517
  %v1519 = vpop.f32.mrf.mxu0
  %v1520 = vpop.f32.mrf.mxu0
  %v1521 = vadd.f32 %v69, %v1520
  %v1522 = vpop.f32.mrf.mxu0
  %1523 = vmatprep.mubr.bf16.mxu0 0
  %1524 = vmatmul.mubr.bf16.gmra.mxu0 %v1408
  %v1525 = vpop.f32.mrf.mxu0
  %v1526 = vadd.f32 %v69, %v1525
  %v1527 = vpop.f32.mrf.mxu0
  %v1528 = vpop.f32.mrf.mxu0
  %v1529 = vadd.f32 %v69, %v1528
  %v1530 = vpop.f32.mrf.mxu0
  %1531 = vmatprep.mubr.bf16.mxu0 0
  %1532 = vmatmul.mubr.bf16.gmra.mxu0 %v1411
  %v1533 = vpop.f32.mrf.mxu0
  %v1534 = vadd.f32 %v69, %v1533
  %v1535 = vpop.f32.mrf.mxu0
  %v1536 = vpop.f32.mrf.mxu0
  %v1537 = vadd.f32 %v69, %v1536
  %v1538 = vpop.f32.mrf.mxu0
  %1539 = vmatprep.mubr.bf16.mxu0 0
  %1540 = vmatmul.mubr.bf16.gmra.mxu0 %v1414
  %v1541 = vpop.f32.mrf.mxu0
  %v1542 = vadd.f32 %v69, %v1541
  %v1543 = vpop.f32.mrf.mxu0
  %v1544 = vpop.f32.mrf.mxu0
  %v1545 = vadd.f32 %v69, %v1544
  %v1546 = vpop.f32.mrf.mxu0
  %1547 = vmatprep.mubr.bf16.mxu0 0
  %1548 = vmatmul.mubr.bf16.gmra.mxu0 %v1417
  %v1549 = vpop.f32.mrf.mxu0
  %v1550 = vadd.f32 %v69, %v1549
  %v1551 = vpop.f32.mrf.mxu0
  %v1552 = vpop.f32.mrf.mxu0
  %v1553 = vadd.f32 %v69, %v1552
  %v1554 = vpop.f32.mrf.mxu0
  %1555 = vmatprep.mubr.bf16.mxu0 0
  %1556 = vmatmul.mubr.bf16.gmra.mxu0 %v1420
  %v1557 = vpop.f32.mrf.mxu0
  %v1558 = vadd.f32 %v69, %v1557
  %v1559 = vpop.f32.mrf.mxu0
  %v1560 = vpop.f32.mrf.mxu0
  %v1561 = vadd.f32 %v69, %v1560
  %v1562 = vpop.f32.mrf.mxu0
  %1563 = vmatprep.mubr.bf16.mxu0 0
  %1564 = vmatmul.mubr.bf16.gmra.mxu0 %v1423
  %v1565 = vpop.f32.mrf.mxu0
  %v1566 = vadd.f32 %v69, %v1565
  %v1567 = vpop.f32.mrf.mxu0
  %v1568 = vpop.f32.mrf.mxu0
  %v1569 = vadd.f32 %v69, %v1568
  %v1570 = vpop.f32.mrf.mxu0
  %1571 = vmatprep.mubr.bf16.mxu0 0
  %1572 = vmatmul.mubr.bf16.gmra.mxu0 %v1426
  %v1573 = vpop.f32.mrf.mxu0
  %v1574 = vadd.f32 %v69, %v1573
  %v1575 = vpop.f32.mrf.mxu0
  %v1576 = vpop.f32.mrf.mxu0
  %v1577 = vadd.f32 %v69, %v1576
  %v1578 = vpop.f32.mrf.mxu0
  %1579 = vmatprep.mubr.bf16.mxu0 0
  %1580 = vmatmul.mubr.bf16.gmra.mxu0 %v1429
  %v1581 = vpop.f32.mrf.mxu0
  %v1582 = vadd.f32 %v69, %v1581
  %v1583 = vpop.f32.mrf.mxu0
  %v1584 = vpop.f32.mrf.mxu0
  %v1585 = vadd.f32 %v69, %v1584
  %v1586 = vpop.f32.mrf.mxu0
  %1587 = vmatprep.mubr.bf16.mxu0 0
  %1588 = vmatmul.mubr.bf16.gmra.mxu0 %v1432
  %v1589 = vpop.f32.mrf.mxu0
  %v1590 = vadd.f32 %v69, %v1589
  %v1591 = vpop.f32.mrf.mxu0
  %v1592 = vpop.f32.mrf.mxu0
  %v1593 = vadd.f32 %v69, %v1592
  %v1594 = vpop.f32.mrf.mxu0
  %1595 = vmatprep.mubr.bf16.mxu0 0
  %1596 = vmatmul.mubr.bf16.gmra.mxu0 %v1435
  %v1597 = vpop.f32.mrf.mxu0
  %v1598 = vadd.f32 %v69, %v1597
  %v1599 = vpop.f32.mrf.mxu0
  %v1600 = vpop.f32.mrf.mxu0
  %v1601 = vadd.f32 %v69, %v1600
  %v1602 = vpop.f32.mrf.mxu0
  %1603 = vmatprep.mubr.bf16.mxu0 0
  %1604 = vmatmul.mubr.bf16.gmra.mxu0 %v1438
  %v1605 = vpop.f32.mrf.mxu0
  %v1606 = vadd.f32 %v69, %v1605
  %v1607 = vpop.f32.mrf.mxu0
  %v1608 = vpop.f32.mrf.mxu0
  %v1609 = vadd.f32 %v69, %v1608
  %v1610 = vpop.f32.mrf.mxu0
  %1611 = vmatprep.mubr.bf16.mxu0 0
  %1612 = vmatmul.mubr.bf16.gmra.mxu0 %v1441
  %v1613 = vpop.f32.mrf.mxu0
  %v1614 = vadd.f32 %v69, %v1613
  %v1615 = vpop.f32.mrf.mxu0
  %v1616 = vpop.f32.mrf.mxu0
  %v1617 = vadd.f32 %v69, %v1616
  %v1618 = vpop.f32.mrf.mxu0
  %1619 = vdwg.mxu0
  %v1620 = vmax.f32 %v1478, 0.0
  %v1621 = vmax.f32 %v1481, 0.0
  %v1622 = vmax.f32 %v1486, 0.0
  %v1623 = vmax.f32 %v1489, 0.0
  %v1624 = vmax.f32 %v1494, 0.0
  %v1625 = vmax.f32 %v1497, 0.0
  %v1626 = vmax.f32 %v1502, 0.0
  %v1627 = vmax.f32 %v1505, 0.0
  %v1628 = vmax.f32 %v1510, 0.0
  %v1629 = vmax.f32 %v1513, 0.0
  %v1630 = vmax.f32 %v1518, 0.0
  %v1631 = vmax.f32 %v1521, 0.0
  %v1632 = vmax.f32 %v1526, 0.0
  %v1633 = vmax.f32 %v1529, 0.0
  %v1634 = vmax.f32 %v1534, 0.0
  %v1635 = vmax.f32 %v1537, 0.0
  %v1636 = vmax.f32 %v1542, 0.0
  %v1637 = vmax.f32 %v1545, 0.0
  %v1638 = vmax.f32 %v1550, 0.0
  %v1639 = vmax.f32 %v1553, 0.0
  %v1640 = vmax.f32 %v1558, 0.0
  %v1641 = vmax.f32 %v1561, 0.0
  %v1642 = vmax.f32 %v1566, 0.0
  %v1643 = vmax.f32 %v1569, 0.0
  %v1644 = vmax.f32 %v1574, 0.0
  %v1645 = vmax.f32 %v1577, 0.0
  %v1646 = vmax.f32 %v1582, 0.0
  %v1647 = vmax.f32 %v1585, 0.0
  %v1648 = vmax.f32 %v1590, 0.0
  %v1649 = vmax.f32 %v1593, 0.0
  %v1650 = vmax.f32 %v1598, 0.0
  %v1651 = vmax.f32 %v1601, 0.0
  %v1652 = vmax.f32 %v1606, 0.0
  %v1653 = vmax.f32 %v1609, 0.0
  %v1654 = vmax.f32 %v1614, 0.0
  %v1655 = vmax.f32 %v1617, 0.0
  %v1656 = vmax.f32 %v1227, %v1620
  %v1657 = vmax.f32 %v1228, %v1621
  %v1658 = vmax.f32 %v1229, %v1622
  %v1659 = vmax.f32 %v1230, %v1623
  %v1660 = vmax.f32 %v1231, %v1624
  %v1661 = vmax.f32 %v1232, %v1625
  %v1662 = vmax.f32 %v1233, %v1626
  %v1663 = vmax.f32 %v1234, %v1627
  %v1664 = vmax.f32 %v1235, %v1628
  %v1665 = vmax.f32 %v1236, %v1629
  %v1666 = vmax.f32 %v1237, %v1630
  %v1667 = vmax.f32 %v1238, %v1631
  %v1668 = vmax.f32 %v1239, %v1632
  %v1669 = vmax.f32 %v1240, %v1633
  %v1670 = vmax.f32 %v1241, %v1634
  %v1671 = vmax.f32 %v1242, %v1635
  %v1672 = vmax.f32 %v1243, %v1636
  %v1673 = vmax.f32 %v1244, %v1637
  %v1674 = vmax.f32 %v1245, %v1638
  %v1675 = vmax.f32 %v1246, %v1639
  %v1676 = vmax.f32 %v1247, %v1640
  %v1677 = vmax.f32 %v1248, %v1641
  %v1678 = vmax.f32 %v1249, %v1642
  %v1679 = vmax.f32 %v1250, %v1643
  %v1680 = vmax.f32 %v1251, %v1644
  %v1681 = vmax.f32 %v1252, %v1645
  %v1682 = vmax.f32 %v1253, %v1646
  %v1683 = vmax.f32 %v1254, %v1647
  %v1684 = vmax.f32 %v1255, %v1648
  %v1685 = vmax.f32 %v1256, %v1649
  %v1686 = vmax.f32 %v1257, %v1650
  %v1687 = vmax.f32 %v1258, %v1651
  %v1688 = vmax.f32 %v1259, %v1652
  %v1689 = vmax.f32 %v1260, %v1653
  %v1690 = vmax.f32 %v1261, %v1654
  %v1691 = vmax.f32 %v1262, %v1655
  %v1692 = vmax.f32 %v834, %v1656
  %v1693 = vmax.f32 %v835, %v1657
  %v1694 = vmax.f32 %v836, %v1658
  %v1695 = vmax.f32 %v837, %v1659
  %v1696 = vmax.f32 %v838, %v1660
  %v1697 = vmax.f32 %v839, %v1661
  %v1698 = vmax.f32 %v840, %v1662
  %v1699 = vmax.f32 %v841, %v1663
  %v1700 = vmax.f32 %v842, %v1664
  %v1701 = vmax.f32 %v843, %v1665
  %v1702 = vmax.f32 %v844, %v1666
  %v1703 = vmax.f32 %v845, %v1667
  %v1704 = vmax.f32 %v846, %v1668
  %v1705 = vmax.f32 %v847, %v1669
  %v1706 = vmax.f32 %v848, %v1670
  %v1707 = vmax.f32 %v849, %v1671
  %v1708 = vmax.f32 %v850, %v1672
  %v1709 = vmax.f32 %v851, %v1673
  %v1710 = vmax.f32 %v852, %v1674
  %v1711 = vmax.f32 %v853, %v1675
  %v1712 = vmax.f32 %v854, %v1676
  %v1713 = vmax.f32 %v855, %v1677
  %v1714 = vmax.f32 %v856, %v1678
  %v1715 = vmax.f32 %v857, %v1679
  %v1716 = vmax.f32 %v858, %v1680
  %v1717 = vmax.f32 %v859, %v1681
  %v1718 = vmax.f32 %v860, %v1682
  %v1719 = vmax.f32 %v861, %v1683
  %v1720 = vmax.f32 %v862, %v1684
  %v1721 = vmax.f32 %v863, %v1685
  %v1722 = vmax.f32 %v864, %v1686
  %v1723 = vmax.f32 %v865, %v1687
  %v1724 = vmax.f32 %v866, %v1688
  %v1725 = vmax.f32 %v867, %v1689
  %v1726 = vmax.f32 %v868, %v1690
  %v1727 = vmax.f32 %v869, %v1691
  %v1728 = vpack.c.bf16 %v1693, %v1692
  %v1729 = vpack.c.bf16 %v1695, %v1694
  %v1730 = vpack.c.bf16 %v1697, %v1696
  %v1731 = vpack.c.bf16 %v1699, %v1698
  %v1732 = vpack.c.bf16 %v1701, %v1700
  %v1733 = vpack.c.bf16 %v1703, %v1702
  %v1734 = vpack.c.bf16 %v1705, %v1704
  %v1735 = vpack.c.bf16 %v1707, %v1706
  %v1736 = vpack.c.bf16 %v1709, %v1708
  %v1737 = vpack.c.bf16 %v1711, %v1710
  %v1738 = vpack.c.bf16 %v1713, %v1712
  %v1739 = vpack.c.bf16 %v1715, %v1714
  %v1740 = vpack.c.bf16 %v1717, %v1716
  %v1741 = vpack.c.bf16 %v1719, %v1718
  %v1742 = vpack.c.bf16 %v1721, %v1720
  %v1743 = vpack.c.bf16 %v1723, %v1722
  %v1744 = vpack.c.bf16 %v1725, %v1724
  %v1745 = vpack.c.bf16 %v1727, %v1726
  %v1764 = vunpack.c.l.b16 %v1728
  %v1765 = vunpack.c.h.b16 %v1728
  %v1766 = vunpack.c.l.b16 %v1729
  %v1767 = vunpack.c.h.b16 %v1729
  %v1768 = vunpack.c.l.b16 %v1730
  %v1769 = vunpack.c.h.b16 %v1730
  %v1770 = vunpack.c.l.b16 %v1731
  %v1771 = vunpack.c.h.b16 %v1731
  %v1772 = vunpack.c.l.b16 %v1732
  %v1773 = vunpack.c.h.b16 %v1732
  %v1774 = vunpack.c.l.b16 %v1733
  %v1775 = vunpack.c.h.b16 %v1733
  %v1776 = vunpack.c.l.b16 %v1734
  %v1777 = vunpack.c.h.b16 %v1734
  %v1778 = vunpack.c.l.b16 %v1735
  %v1779 = vunpack.c.h.b16 %v1735
  %v1780 = vunpack.c.l.b16 %v1736
  %v1781 = vunpack.c.h.b16 %v1736
  %v1782 = vunpack.c.l.b16 %v1737
  %v1783 = vunpack.c.h.b16 %v1737
  %v1784 = vunpack.c.l.b16 %v1738
  %v1785 = vunpack.c.h.b16 %v1738
  %v1786 = vunpack.c.l.b16 %v1739
  %v1787 = vunpack.c.h.b16 %v1739
  %v1788 = vunpack.c.l.b16 %v1740
  %v1789 = vunpack.c.h.b16 %v1740
  %v1790 = vunpack.c.l.b16 %v1741
  %v1791 = vunpack.c.h.b16 %v1741
  %v1792 = vunpack.c.l.b16 %v1742
  %v1793 = vunpack.c.h.b16 %v1742
  %v1794 = vunpack.c.l.b16 %v1743
  %v1795 = vunpack.c.h.b16 %v1743
  %v1796 = vunpack.c.l.b16 %v1744
  %v1797 = vunpack.c.h.b16 %v1744
  %v1798 = vunpack.c.l.b16 %v1745
  %v1799 = vunpack.c.h.b16 %v1745
  %v1800 = vpack.c.b16 %v1764, %v1764
  %v1801 = vpack.c.b16 %v1765, %v1765
  %v1802 = vpack.c.b16 %v1766, %v1766
  %v1803 = vpack.c.b16 %v1767, %v1767
  %v1804 = vpack.c.b16 %v1768, %v1768
  %v1805 = vpack.c.b16 %v1769, %v1769
  %v1806 = vpack.c.b16 %v1770, %v1770
  %v1807 = vpack.c.b16 %v1771, %v1771
  %v1808 = vpack.c.b16 %v1772, %v1772
  %v1809 = vpack.c.b16 %v1773, %v1773
  %v1810 = vpack.c.b16 %v1774, %v1774
  %v1811 = vpack.c.b16 %v1775, %v1775
  %v1812 = vpack.c.b16 %v1776, %v1776
  %v1813 = vpack.c.b16 %v1777, %v1777
  %v1814 = vpack.c.b16 %v1778, %v1778
  %v1815 = vpack.c.b16 %v1779, %v1779
  %v1816 = vpack.c.b16 %v1780, %v1780
  %v1817 = vpack.c.b16 %v1781, %v1781
  %v1818 = vpack.c.b16 %v1782, %v1782
  %v1819 = vpack.c.b16 %v1783, %v1783
  %v1820 = vpack.c.b16 %v1784, %v1784
  %v1821 = vpack.c.b16 %v1785, %v1785
  %v1822 = vpack.c.b16 %v1786, %v1786
  %v1823 = vpack.c.b16 %v1787, %v1787
  %v1824 = vpack.c.b16 %v1788, %v1788
  %v1825 = vpack.c.b16 %v1789, %v1789
  %v1826 = vpack.c.b16 %v1790, %v1790
  %v1827 = vpack.c.b16 %v1791, %v1791
  %v1828 = vpack.c.b16 %v1792, %v1792
  %v1829 = vpack.c.b16 %v1793, %v1793
  %v1830 = vpack.c.b16 %v1794, %v1794
  %v1831 = vpack.c.b16 %v1795, %v1795
  %v1832 = vpack.c.b16 %v1796, %v1796
  %v1833 = vpack.c.b16 %v1797, %v1797
  %v1834 = vpack.c.b16 %v1798, %v1798
  %v1835 = vpack.c.b16 %v1799, %v1799
  %vm1872 = vcmask 125952
  %1873 = vst.msk [vmem:[%s6] sm:$0xf] %vm1872, %v1800
  %1874 = vst.msk [vmem:[%s6 + $0x4] sm:$0xf] %vm1872, %v1801
  %1875 = vst.msk [vmem:[%s6 + $0x8] sm:$0xf] %vm1872, %v1802
  %1876 = vst.msk [vmem:[%s6 + $0xc] sm:$0xf] %vm1872, %v1803
  %1877 = vst.msk [vmem:[%s6 + $0x10] sm:$0xf] %vm1872, %v1804
  %1878 = vst.msk [vmem:[%s6 + $0x14] sm:$0xf] %vm1872, %v1805
  %1879 = vst.msk [vmem:[%s6 + $0x18] sm:$0xf] %vm1872, %v1806
  %1880 = vst.msk [vmem:[%s6 + $0x1c] sm:$0xf] %vm1872, %v1807
  %1881 = vst.msk [vmem:[%s6 + $0x20] sm:$0xf] %vm1872, %v1808
  %1882 = vst.msk [vmem:[%s6 + $0x24] sm:$0xf] %vm1872, %v1809
  %1883 = vst.msk [vmem:[%s6 + $0x28] sm:$0xf] %vm1872, %v1810
  %1884 = vst.msk [vmem:[%s6 + $0x2c] sm:$0xf] %vm1872, %v1811
  %1885 = vst.msk [vmem:[%s6 + $0x30] sm:$0xf] %vm1872, %v1812
  %1886 = vst.msk [vmem:[%s6 + $0x34] sm:$0xf] %vm1872, %v1813
  %1887 = vst.msk [vmem:[%s6 + $0x38] sm:$0xf] %vm1872, %v1814
  %1888 = vst.msk [vmem:[%s6 + $0x3c] sm:$0xf] %vm1872, %v1815
  %1889 = vst.msk [vmem:[%s6 + $0x40] sm:$0xf] %vm1872, %v1816
  %1890 = vst.msk [vmem:[%s6 + $0x44] sm:$0xf] %vm1872, %v1817
  %1891 = vst.msk [vmem:[%s6 + $0x48] sm:$0xf] %vm1872, %v1818
  %1892 = vst.msk [vmem:[%s6 + $0x4c] sm:$0xf] %vm1872, %v1819
  %1893 = vst.msk [vmem:[%s6 + $0x50] sm:$0xf] %vm1872, %v1820
  %1894 = vst.msk [vmem:[%s6 + $0x54] sm:$0xf] %vm1872, %v1821
  %1895 = vst.msk [vmem:[%s6 + $0x58] sm:$0xf] %vm1872, %v1822
  %1896 = vst.msk [vmem:[%s6 + $0x5c] sm:$0xf] %vm1872, %v1823
  %1897 = vst.msk [vmem:[%s6 + $0x60] sm:$0xf] %vm1872, %v1824
  %1898 = vst.msk [vmem:[%s6 + $0x64] sm:$0xf] %vm1872, %v1825
  %1899 = vst.msk [vmem:[%s6 + $0x68] sm:$0xf] %vm1872, %v1826
  %1900 = vst.msk [vmem:[%s6 + $0x6c] sm:$0xf] %vm1872, %v1827
  %1901 = vst.msk [vmem:[%s6 + $0x70] sm:$0xf] %vm1872, %v1828
  %1902 = vst.msk [vmem:[%s6 + $0x74] sm:$0xf] %vm1872, %v1829
  %1903 = vst.msk [vmem:[%s6 + $0x78] sm:$0xf] %vm1872, %v1830
  %1904 = vst.msk [vmem:[%s6 + $0x7c] sm:$0xf] %vm1872, %v1831
  %1905 = vst.msk [vmem:[%s6 + $0x80] sm:$0xf] %vm1872, %v1832
  %1906 = vst.msk [vmem:[%s6 + $0x84] sm:$0xf] %vm1872, %v1833
  %1907 = vst.msk [vmem:[%s6 + $0x88] sm:$0xf] %vm1872, %v1834
  %1908 = vst.msk [vmem:[%s6 + $0x8c] sm:$0xf] %vm1872, %v1835
  // Predicated region
  $region26: #{net_forward.3} parent=0 // pred_check
    _
  $region27: #{net_forward.3} parent=0 // pred_check_branch
    %1910 = sbr.rel (0) target = $region29
  $region28: #{net_forward.3} parent=0 // pred_region
    _
  $region29: #{net_forward.3} parent=0 // pred_fallthru
    _
  // Predicated region
  $region30: #{net_forward.3} parent=0 // pred_check
    _
  $region31: #{net_forward.3} parent=0 // pred_check_branch
    %1912 = sbr.rel (0) target = $region33
  $region32: #{net_forward.3} parent=0 // pred_region
    _
  $region33: #{net_forward.3} parent=0 // pred_fallthru
    _

// kernel: net_forward.4
$region0: #{net_forward.4}
  #allocation0 [shape = 'u32[]', space=smem, size = 0x4, offset = 0x4, fixed_abs, tag = 'smem constant byte address 0x4 - core index']
  #allocation1 [shape = 'u32[144,128]{1,0:T(1,128)}', space=vmem, size = 0x12000, scoped, tag = 'internal scratch']
  %s0 = inlined_call_operand.vmem [shape: bf16[32,400], index: 0, kind: input, shape index: {}]
  %s1 = inlined_call_operand.vmem [shape: bf16[32,400], index: 1, kind: input, shape index: {}]
  %s2 = inlined_call_operand.vmem [shape: bf16[32,400], index: 2, kind: input, shape index: {}]
  %s3 = inlined_call_operand.vmem [shape: bf16[32,400], index: 3, kind: input, shape index: {}]
  %s4 = inlined_call_operand.vmem [shape: bf16[400,32], index: 4, kind: input, shape index: {}]
  %s5 = inlined_call_operand.vmem [shape: f32[1,32], index: 5, kind: input, shape index: {}]
  %s6 = inlined_call_operand.vmem [shape: bf16[32,32], index: 6, kind: output, shape index: {}]
  %s7 = sld [smem:[#allocation0]]
  $region34: #{net_forward.4} parent=0
    _
  %s9 = ssub.s32 1, %s7
  %s10 = scalar_select 0, %s9, %s7
  // Predicated region
  $region2: #{net_forward.4} parent=0 // pred_check
    _
  $region3: #{net_forward.4} parent=0 // pred_check_branch
    %12 = sbr.rel (0) target = $region5
  $region4: #{net_forward.4} parent=0 // pred_region
    _
  $region5: #{net_forward.4} parent=0 // pred_fallthru
    _
  // Predicated region
  $region6: #{net_forward.4} parent=0 // pred_check
    _
  $region7: #{net_forward.4} parent=0 // pred_check_branch
    %14 = sbr.rel (0) target = $region9
  $region8: #{net_forward.4} parent=0 // pred_region
    _
  $region9: #{net_forward.4} parent=0 // pred_fallthru
    _
  // Predicated region
  $region10: #{net_forward.4} parent=0 // pred_check
    _
  $region11: #{net_forward.4} parent=0 // pred_check_branch
    %16 = sbr.rel (0) target = $region13
  $region12: #{net_forward.4} parent=0 // pred_region
    _
  $region13: #{net_forward.4} parent=0 // pred_fallthru
    _
  // Predicated region
  $region14: #{net_forward.4} parent=0 // pred_check
    _
  $region15: #{net_forward.4} parent=0 // pred_check_branch
    %18 = sbr.rel (0) target = $region17
  $region16: #{net_forward.4} parent=0 // pred_region
    _
  $region17: #{net_forward.4} parent=0 // pred_fallthru
    _
  // Predicated region
  $region18: #{net_forward.4} parent=0 // pred_check
    _
  $region19: #{net_forward.4} parent=0 // pred_check_branch
    %20 = sbr.rel (0) target = $region21
  $region20: #{net_forward.4} parent=0 // pred_region
    _
  $region21: #{net_forward.4} parent=0 // pred_fallthru
    _
  // Predicated region
  $region22: #{net_forward.4} parent=0 // pred_check
    _
  $region23: #{net_forward.4} parent=0 // pred_check_branch
    %22 = sbr.rel (0) target = $region25
  $region24: #{net_forward.4} parent=0 // pred_region
    _
  $region25: #{net_forward.4} parent=0 // pred_fallthru
    _
  %v24 = vld [vmem:[%s0] sm:$0xff]
  %v25 = vld [vmem:[%s0 + $0x8] sm:$0xff]
  %v26 = vld [vmem:[%s0 + $0x10] sm:$0xff]
  %v27 = vld [vmem:[%s0 + $0x18] sm:$0xff]
  %v28 = vld [vmem:[%s0 + $0x20] sm:$0xff]
  %v29 = vld [vmem:[%s0 + $0x28] sm:$0xff]
  %v30 = vld [vmem:[%s0 + $0x30] sm:$0xff]
  %v31 = vld [vmem:[%s0 + $0x38] sm:$0xff]
  %v32 = vld [vmem:[%s4] sm:$0xf]
  %v33 = vld [vmem:[%s4 + $0x4] sm:$0xf]
  %v34 = vld [vmem:[%s4 + $0x8] sm:$0xf]
  %v35 = vld [vmem:[%s4 + $0xc] sm:$0xf]
  %v36 = vld [vmem:[%s4 + $0x10] sm:$0xf]
  %v37 = vld [vmem:[%s4 + $0x14] sm:$0xf]
  %v38 = vld [vmem:[%s4 + $0x18] sm:$0xf]
  %v39 = vld [vmem:[%s4 + $0x1c] sm:$0xf]
  %v40 = vld [vmem:[%s4 + $0x20] sm:$0xf]
  %v41 = vld [vmem:[%s4 + $0x24] sm:$0xf]
  %v42 = vld [vmem:[%s4 + $0x28] sm:$0xf]
  %v43 = vld [vmem:[%s4 + $0x2c] sm:$0xf]
  %v44 = vld [vmem:[%s4 + $0x30] sm:$0xf]
  %v45 = vld [vmem:[%s4 + $0x34] sm:$0xf]
  %v46 = vld [vmem:[%s4 + $0x38] sm:$0xf]
  %v47 = vld [vmem:[%s4 + $0x3c] sm:$0xf]
  %v48 = vld [vmem:[%s4 + $0x40] sm:$0xf]
  %v49 = vld [vmem:[%s4 + $0x44] sm:$0xf]
  %v50 = vld [vmem:[%s4 + $0x48] sm:$0xf]
  %v51 = vld [vmem:[%s4 + $0x4c] sm:$0xf]
  %v52 = vld [vmem:[%s4 + $0x50] sm:$0xf]
  %v53 = vld [vmem:[%s4 + $0x54] sm:$0xf]
  %v54 = vld [vmem:[%s4 + $0x58] sm:$0xf]
  %v55 = vld [vmem:[%s4 + $0x5c] sm:$0xf]
  %v56 = vld [vmem:[%s4 + $0x60] sm:$0xf]
  %v57 = vld [vmem:[%s4 + $0x64] sm:$0xf]
  %v58 = vld [vmem:[%s4 + $0x68] sm:$0xf]
  %v59 = vld [vmem:[%s4 + $0x6c] sm:$0xf]
  %v60 = vld [vmem:[%s4 + $0x70] sm:$0xf]
  %v61 = vld [vmem:[%s4 + $0x74] sm:$0xf]
  %v62 = vld [vmem:[%s4 + $0x78] sm:$0xf]
  %v63 = vld [vmem:[%s4 + $0x7c] sm:$0xf]
  %v64 = vld [vmem:[%s4 + $0x80] sm:$0xf]
  %v65 = vld [vmem:[%s4 + $0x84] sm:$0xf]
  %v66 = vld [vmem:[%s4 + $0x88] sm:$0xf]
  %v67 = vld [vmem:[%s4 + $0x8c] sm:$0xf]
  %v68 = vld [vmem:[%s4 + $0x90] sm:$0xf]
  %v69 = vld [vmem:[%s4 + $0x94] sm:$0xf]
  %v70 = vld [vmem:[%s4 + $0x98] sm:$0xf]
  %v71 = vld [vmem:[%s4 + $0x9c] sm:$0xf]
  %v72 = vld [vmem:[%s4 + $0xa0] sm:$0xf]
  %v73 = vld [vmem:[%s4 + $0xa4] sm:$0xf]
  %v74 = vld [vmem:[%s4 + $0xa8] sm:$0xf]
  %v75 = vld [vmem:[%s4 + $0xac] sm:$0xf]
  %v76 = vld [vmem:[%s4 + $0xb0] sm:$0xf]
  %v77 = vld [vmem:[%s4 + $0xb4] sm:$0xf]
  %v78 = vld [vmem:[%s4 + $0xb8] sm:$0xf]
  %v79 = vld [vmem:[%s4 + $0xbc] sm:$0xf]
  %v80 = vld [vmem:[%s4 + $0xc0] sm:$0xf]
  %v81 = vld [vmem:[%s4 + $0xc4] sm:$0xf]
  %v82 = vld [vmem:[%s5] sm:$0x1]
  %v84 = vlaneseq
  %v85 = vshrl.u32 %v84, 7
  %v86 = vsub.s32 0, %v85
  %v87 = vrot.slane %v82, %v86
  %v97 = vunpack.c.l.b16 %v24
  %v98 = vunpack.c.h.b16 %v24
  %v99 = vunpack.c.l.b16 %v25
  %v100 = vunpack.c.h.b16 %v25
  %v101 = vunpack.c.l.b16 %v26
  %v102 = vunpack.c.h.b16 %v26
  %v103 = vunpack.c.l.b16 %v27
  %v104 = vunpack.c.h.b16 %v27
  %v105 = vunpack.c.l.b16 %v28
  %v106 = vunpack.c.h.b16 %v28
  %v107 = vunpack.c.l.b16 %v29
  %v108 = vunpack.c.h.b16 %v29
  %v109 = vunpack.c.l.b16 %v30
  %v110 = vunpack.c.h.b16 %v30
  %v111 = vunpack.c.l.b16 %v31
  %v112 = vunpack.c.h.b16 %v31
  %v113 = vpack.c.b16 %v101, %v97
  %v114 = vpack.c.b16 %v102, %v98
  %v115 = vpack.c.b16 %v103, %v99
  %v116 = vpack.c.b16 %v104, %v100
  %v117 = vpack.c.b16 %v109, %v105
  %v118 = vpack.c.b16 %v110, %v106
  %v119 = vpack.c.b16 %v111, %v107
  %v120 = vpack.c.b16 %v112, %v108
  %v177 = vunpack.c.l.b16 %v32
  %v178 = vunpack.c.l.b16 %v33
  %v179 = vunpack.c.l.b16 %v34
  %v180 = vunpack.c.l.b16 %v35
  %v181 = vunpack.c.l.b16 %v36
  %v182 = vunpack.c.l.b16 %v37
  %v183 = vunpack.c.l.b16 %v38
  %v184 = vunpack.c.l.b16 %v39
  %v185 = vunpack.c.l.b16 %v40
  %v186 = vunpack.c.l.b16 %v41
  %v187 = vunpack.c.l.b16 %v42
  %v188 = vunpack.c.l.b16 %v43
  %v189 = vunpack.c.l.b16 %v44
  %v190 = vunpack.c.l.b16 %v45
  %v191 = vunpack.c.l.b16 %v46
  %v192 = vunpack.c.l.b16 %v47
  %v193 = vunpack.c.l.b16 %v48
  %v194 = vunpack.c.l.b16 %v49
  %v195 = vunpack.c.l.b16 %v50
  %v196 = vunpack.c.l.b16 %v51
  %v197 = vunpack.c.l.b16 %v52
  %v198 = vunpack.c.l.b16 %v53
  %v199 = vunpack.c.l.b16 %v54
  %v200 = vunpack.c.l.b16 %v55
  %v201 = vunpack.c.l.b16 %v56
  %v202 = vunpack.c.l.b16 %v57
  %v203 = vunpack.c.l.b16 %v58
  %v204 = vunpack.c.l.b16 %v59
  %v205 = vunpack.c.l.b16 %v60
  %v206 = vunpack.c.l.b16 %v61
  %v207 = vunpack.c.l.b16 %v62
  %v208 = vunpack.c.l.b16 %v63
  %v209 = vunpack.c.l.b16 %v64
  %v210 = vunpack.c.l.b16 %v65
  %v211 = vunpack.c.l.b16 %v66
  %v212 = vunpack.c.l.b16 %v67
  %v213 = vunpack.c.l.b16 %v68
  %v214 = vunpack.c.l.b16 %v69
  %v215 = vunpack.c.l.b16 %v70
  %v216 = vunpack.c.l.b16 %v71
  %v217 = vunpack.c.l.b16 %v72
  %v218 = vunpack.c.l.b16 %v73
  %v219 = vunpack.c.l.b16 %v74
  %v220 = vunpack.c.l.b16 %v75
  %v221 = vunpack.c.l.b16 %v76
  %v222 = vunpack.c.l.b16 %v77
  %v223 = vunpack.c.l.b16 %v78
  %v224 = vunpack.c.l.b16 %v79
  %v225 = vunpack.c.l.b16 %v80
  %v226 = vunpack.c.l.b16 %v81
  %v227 = vpack.c.b16 %v178, %v177
  %v228 = vpack.c.b16 %v180, %v179
  %v229 = vpack.c.b16 %v182, %v181
  %v230 = vpack.c.b16 %v184, %v183
  %v231 = vpack.c.b16 %v186, %v185
  %v232 = vpack.c.b16 %v188, %v187
  %v233 = vpack.c.b16 %v190, %v189
  %v234 = vpack.c.b16 %v192, %v191
  %v235 = vpack.c.b16 %v194, %v193
  %v236 = vpack.c.b16 %v196, %v195
  %v237 = vpack.c.b16 %v198, %v197
  %v238 = vpack.c.b16 %v200, %v199
  %v239 = vpack.c.b16 %v202, %v201
  %v240 = vpack.c.b16 %v204, %v203
  %v241 = vpack.c.b16 %v206, %v205
  %v242 = vpack.c.b16 %v208, %v207
  %v243 = vpack.c.b16 %v210, %v209
  %v244 = vpack.c.b16 %v212, %v211
  %v245 = vpack.c.b16 %v214, %v213
  %v246 = vpack.c.b16 %v216, %v215
  %v247 = vpack.c.b16 %v218, %v217
  %v248 = vpack.c.b16 %v220, %v219
  %v249 = vpack.c.b16 %v222, %v221
  %v250 = vpack.c.b16 %v224, %v223
  %v251 = vpack.c.b16 %v226, %v225
  %vm277 = vcmask 130048
  %v279 = vsel %vm277, %v116, 0
  %v282 = vsel %vm277, %v120, 0
  %284 = vmatprep.subr.bf16.mxu0 0
  %285 = vmatpush1.bf16.msra.mxu0 %v234
  %286 = vmatprep.subr.bf16.mxu0 0
  %287 = vmatpush1.bf16.msra.mxu0 %v233
  %288 = vmatprep.subr.bf16.mxu0 0
  %289 = vmatpush1.bf16.msra.mxu0 %v232
  %290 = vmatprep.subr.bf16.mxu0 0
  %291 = vmatpush1.bf16.msra.mxu0 %v231
  %292 = vmatprep.subr.bf16.mxu0 0
  %293 = vmatpush1.bf16.msra.mxu0 %v230
  %294 = vmatprep.subr.bf16.mxu0 0
  %295 = vmatpush1.bf16.msra.mxu0 %v229
  %296 = vmatprep.subr.bf16.mxu0 0
  %297 = vmatpush1.bf16.msra.mxu0 %v228
  %298 = vmatprep.subr.bf16.mxu0 0
  %299 = vmatpush1.bf16.msra.mxu0 %v227
  %300 = vmatprep.subr.bf16.mxu0 0
  %301 = vmatpush2.bf16.msra.mxu0 %v242
  %302 = vmatprep.subr.bf16.mxu0 0
  %303 = vmatpush2.bf16.msra.mxu0 %v241
  %304 = vmatprep.subr.bf16.mxu0 0
  %305 = vmatpush2.bf16.msra.mxu0 %v240
  %306 = vmatprep.subr.bf16.mxu0 0
  %307 = vmatpush2.bf16.msra.mxu0 %v239
  %308 = vmatprep.subr.bf16.mxu0 0
  %309 = vmatpush2.bf16.msra.mxu0 %v238
  %310 = vmatprep.subr.bf16.mxu0 0
  %311 = vmatpush2.bf16.msra.mxu0 %v237
  %312 = vmatprep.subr.bf16.mxu0 0
  %313 = vmatpush2.bf16.msra.mxu0 %v236
  %314 = vmatprep.subr.bf16.mxu0 0
  %315 = vmatpush2.bf16.msra.mxu0 %v235
  %316 = vmatprep.mubr.bf16.mxu0 %v114
  %317 = vmatmul.mubr.bf16.gmra.mxu0 %v113
  %v318 = vpop.f32.mrf.mxu0
  %v319 = vadd.f32 %v87, %v318
  %v320 = vpop.f32.mrf.mxu0
  %v321 = vpop.f32.mrf.mxu0
  %v322 = vadd.f32 %v87, %v321
  %v323 = vpop.f32.mrf.mxu0
  %324 = vmatprep.mubr.bf16.mxu0 %v118
  %325 = vmatmul.mubr.bf16.gmra.mxu0 %v117
  %v326 = vpop.f32.mrf.mxu0
  %v327 = vadd.f32 %v87, %v326
  %v328 = vpop.f32.mrf.mxu0
  %v329 = vpop.f32.mrf.mxu0
  %v330 = vadd.f32 %v87, %v329
  %v331 = vpop.f32.mrf.mxu0
  %332 = vdwg.mxu0
  %333 = vmatprep.subr.bf16.mxu0 0
  %334 = vmatpush1.bf16.msra.mxu0 %v250
  %335 = vmatprep.subr.bf16.mxu0 0
  %336 = vmatpush1.bf16.msra.mxu0 %v249
  %337 = vmatprep.subr.bf16.mxu0 0
  %338 = vmatpush1.bf16.msra.mxu0 %v248
  %339 = vmatprep.subr.bf16.mxu0 0
  %340 = vmatpush1.bf16.msra.mxu0 %v247
  %341 = vmatprep.subr.bf16.mxu0 0
  %342 = vmatpush1.bf16.msra.mxu0 %v246
  %343 = vmatprep.subr.bf16.mxu0 0
  %344 = vmatpush1.bf16.msra.mxu0 %v245
  %345 = vmatprep.subr.bf16.mxu0 0
  %346 = vmatpush1.bf16.msra.mxu0 %v244
  %347 = vmatprep.subr.bf16.mxu0 0
  %348 = vmatpush1.bf16.msra.mxu0 %v243
  %349 = vmatprep.subr.bf16.mxu0 0
  %350 = vmatpush2.bf16.msra.mxu0 0
  %351 = vmatprep.subr.bf16.mxu0 0
  %352 = vmatpush2.bf16.msra.mxu0 0
  %353 = vmatprep.subr.bf16.mxu0 0
  %354 = vmatpush2.bf16.msra.mxu0 0
  %355 = vmatprep.subr.bf16.mxu0 0
  %356 = vmatpush2.bf16.msra.mxu0 0
  %357 = vmatprep.subr.bf16.mxu0 0
  %358 = vmatpush2.bf16.msra.mxu0 0
  %359 = vmatprep.subr.bf16.mxu0 0
  %360 = vmatpush2.bf16.msra.mxu0 0
  %361 = vmatprep.subr.bf16.mxu0 0
  %362 = vmatpush2.bf16.msra.mxu0 0
  %363 = vmatprep.subr.bf16.mxu0 0
  %364 = vmatpush2.bf16.msra.mxu0 %v251
  %365 = vmatprep.mubr.bf16.mxu0 %v279
  %366 = vmatmul.mubr.bf16.gmra.mxu0 %v115
  %v367 = vpop.f32.mrf.mxu0
  %v368 = vadd.f32 %v319, %v367
  %v369 = vpop.f32.mrf.mxu0
  %v370 = vpop.f32.mrf.mxu0
  %v371 = vadd.f32 %v322, %v370
  %v372 = vpop.f32.mrf.mxu0
  %373 = vmatprep.mubr.bf16.mxu0 %v282
  %374 = vmatmul.mubr.bf16.gmra.mxu0 %v119
  %v375 = vpop.f32.mrf.mxu0
  %v376 = vadd.f32 %v327, %v375
  %v377 = vpop.f32.mrf.mxu0
  %v378 = vpop.f32.mrf.mxu0
  %v379 = vadd.f32 %v330, %v378
  %v380 = vpop.f32.mrf.mxu0
  %381 = vdwg.mxu0
  %v382 = vmax.f32 %v368, 0.0
  %v383 = vmax.f32 %v371, 0.0
  %v384 = vmax.f32 %v376, 0.0
  %v385 = vmax.f32 %v379, 0.0
  %v386 = vld [vmem:[%s1] sm:$0xff]
  %v387 = vld [vmem:[%s1 + $0x8] sm:$0xff]
  %v388 = vld [vmem:[%s1 + $0x10] sm:$0xff]
  %v389 = vld [vmem:[%s1 + $0x18] sm:$0xff]
  %v390 = vld [vmem:[%s1 + $0x20] sm:$0xff]
  %v391 = vld [vmem:[%s1 + $0x28] sm:$0xff]
  %v392 = vld [vmem:[%s1 + $0x30] sm:$0xff]
  %v393 = vld [vmem:[%s1 + $0x38] sm:$0xff]
  %v402 = vunpack.c.l.b16 %v386
  %v403 = vunpack.c.h.b16 %v386
  %v404 = vunpack.c.l.b16 %v387
  %v405 = vunpack.c.h.b16 %v387
  %v406 = vunpack.c.l.b16 %v388
  %v407 = vunpack.c.h.b16 %v388
  %v408 = vunpack.c.l.b16 %v389
  %v409 = vunpack.c.h.b16 %v389
  %v410 = vunpack.c.l.b16 %v390
  %v411 = vunpack.c.h.b16 %v390
  %v412 = vunpack.c.l.b16 %v391
  %v413 = vunpack.c.h.b16 %v391
  %v414 = vunpack.c.l.b16 %v392
  %v415 = vunpack.c.h.b16 %v392
  %v416 = vunpack.c.l.b16 %v393
  %v417 = vunpack.c.h.b16 %v393
  %v418 = vpack.c.b16 %v406, %v402
  %v419 = vpack.c.b16 %v407, %v403
  %v420 = vpack.c.b16 %v408, %v404
  %v421 = vpack.c.b16 %v409, %v405
  %v422 = vpack.c.b16 %v414, %v410
  %v423 = vpack.c.b16 %v415, %v411
  %v424 = vpack.c.b16 %v416, %v412
  %v425 = vpack.c.b16 %v417, %v413
  %v433 = vsel %vm277, %v421, 0
  %v436 = vsel %vm277, %v425, 0
  %438 = vmatprep.subr.bf16.mxu0 0
  %439 = vmatpush1.bf16.msra.mxu0 %v234
  %440 = vmatprep.subr.bf16.mxu0 0
  %441 = vmatpush1.bf16.msra.mxu0 %v233
  %442 = vmatprep.subr.bf16.mxu0 0
  %443 = vmatpush1.bf16.msra.mxu0 %v232
  %444 = vmatprep.subr.bf16.mxu0 0
  %445 = vmatpush1.bf16.msra.mxu0 %v231
  %446 = vmatprep.subr.bf16.mxu0 0
  %447 = vmatpush1.bf16.msra.mxu0 %v230
  %448 = vmatprep.subr.bf16.mxu0 0
  %449 = vmatpush1.bf16.msra.mxu0 %v229
  %450 = vmatprep.subr.bf16.mxu0 0
  %451 = vmatpush1.bf16.msra.mxu0 %v228
  %452 = vmatprep.subr.bf16.mxu0 0
  %453 = vmatpush1.bf16.msra.mxu0 %v227
  %454 = vmatprep.subr.bf16.mxu0 0
  %455 = vmatpush2.bf16.msra.mxu0 %v242
  %456 = vmatprep.subr.bf16.mxu0 0
  %457 = vmatpush2.bf16.msra.mxu0 %v241
  %458 = vmatprep.subr.bf16.mxu0 0
  %459 = vmatpush2.bf16.msra.mxu0 %v240
  %460 = vmatprep.subr.bf16.mxu0 0
  %461 = vmatpush2.bf16.msra.mxu0 %v239
  %462 = vmatprep.subr.bf16.mxu0 0
  %463 = vmatpush2.bf16.msra.mxu0 %v238
  %464 = vmatprep.subr.bf16.mxu0 0
  %465 = vmatpush2.bf16.msra.mxu0 %v237
  %466 = vmatprep.subr.bf16.mxu0 0
  %467 = vmatpush2.bf16.msra.mxu0 %v236
  %468 = vmatprep.subr.bf16.mxu0 0
  %469 = vmatpush2.bf16.msra.mxu0 %v235
  %470 = vmatprep.mubr.bf16.mxu0 %v419
  %471 = vmatmul.mubr.bf16.gmra.mxu0 %v418
  %v472 = vpop.f32.mrf.mxu0
  %v473 = vadd.f32 %v87, %v472
  %v474 = vpop.f32.mrf.mxu0
  %v475 = vpop.f32.mrf.mxu0
  %v476 = vadd.f32 %v87, %v475
  %v477 = vpop.f32.mrf.mxu0
  %478 = vmatprep.mubr.bf16.mxu0 %v423
  %479 = vmatmul.mubr.bf16.gmra.mxu0 %v422
  %v480 = vpop.f32.mrf.mxu0
  %v481 = vadd.f32 %v87, %v480
  %v482 = vpop.f32.mrf.mxu0
  %v483 = vpop.f32.mrf.mxu0
  %v484 = vadd.f32 %v87, %v483
  %v485 = vpop.f32.mrf.mxu0
  %486 = vdwg.mxu0
  %487 = vmatprep.subr.bf16.mxu0 0
  %488 = vmatpush1.bf16.msra.mxu0 %v250
  %489 = vmatprep.subr.bf16.mxu0 0
  %490 = vmatpush1.bf16.msra.mxu0 %v249
  %491 = vmatprep.subr.bf16.mxu0 0
  %492 = vmatpush1.bf16.msra.mxu0 %v248
  %493 = vmatprep.subr.bf16.mxu0 0
  %494 = vmatpush1.bf16.msra.mxu0 %v247
  %495 = vmatprep.subr.bf16.mxu0 0
  %496 = vmatpush1.bf16.msra.mxu0 %v246
  %497 = vmatprep.subr.bf16.mxu0 0
  %498 = vmatpush1.bf16.msra.mxu0 %v245
  %499 = vmatprep.subr.bf16.mxu0 0
  %500 = vmatpush1.bf16.msra.mxu0 %v244
  %501 = vmatprep.subr.bf16.mxu0 0
  %502 = vmatpush1.bf16.msra.mxu0 %v243
  %503 = vmatprep.subr.bf16.mxu0 0
  %504 = vmatpush2.bf16.msra.mxu0 0
  %505 = vmatprep.subr.bf16.mxu0 0
  %506 = vmatpush2.bf16.msra.mxu0 0
  %507 = vmatprep.subr.bf16.mxu0 0
  %508 = vmatpush2.bf16.msra.mxu0 0
  %509 = vmatprep.subr.bf16.mxu0 0
  %510 = vmatpush2.bf16.msra.mxu0 0
  %511 = vmatprep.subr.bf16.mxu0 0
  %512 = vmatpush2.bf16.msra.mxu0 0
  %513 = vmatprep.subr.bf16.mxu0 0
  %514 = vmatpush2.bf16.msra.mxu0 0
  %515 = vmatprep.subr.bf16.mxu0 0
  %516 = vmatpush2.bf16.msra.mxu0 0
  %517 = vmatprep.subr.bf16.mxu0 0
  %518 = vmatpush2.bf16.msra.mxu0 %v251
  %519 = vmatprep.mubr.bf16.mxu0 %v433
  %520 = vmatmul.mubr.bf16.gmra.mxu0 %v420
  %v521 = vpop.f32.mrf.mxu0
  %v522 = vadd.f32 %v473, %v521
  %v523 = vpop.f32.mrf.mxu0
  %v524 = vpop.f32.mrf.mxu0
  %v525 = vadd.f32 %v476, %v524
  %v526 = vpop.f32.mrf.mxu0
  %527 = vmatprep.mubr.bf16.mxu0 %v436
  %528 = vmatmul.mubr.bf16.gmra.mxu0 %v424
  %v529 = vpop.f32.mrf.mxu0
  %v530 = vadd.f32 %v481, %v529
  %v531 = vpop.f32.mrf.mxu0
  %v532 = vpop.f32.mrf.mxu0
  %v533 = vadd.f32 %v484, %v532
  %v534 = vpop.f32.mrf.mxu0
  %535 = vdwg.mxu0
  %v536 = vmax.f32 %v522, 0.0
  %v537 = vmax.f32 %v525, 0.0
  %v538 = vmax.f32 %v530, 0.0
  %v539 = vmax.f32 %v533, 0.0
  %v540 = vmax.f32 %v382, %v536
  %v541 = vmax.f32 %v383, %v537
  %v542 = vmax.f32 %v384, %v538
  %v543 = vmax.f32 %v385, %v539
  %v544 = vld [vmem:[%s2] sm:$0xff]
  %v545 = vld [vmem:[%s2 + $0x8] sm:$0xff]
  %v546 = vld [vmem:[%s2 + $0x10] sm:$0xff]
  %v547 = vld [vmem:[%s2 + $0x18] sm:$0xff]
  %v548 = vld [vmem:[%s2 + $0x20] sm:$0xff]
  %v549 = vld [vmem:[%s2 + $0x28] sm:$0xff]
  %v550 = vld [vmem:[%s2 + $0x30] sm:$0xff]
  %v551 = vld [vmem:[%s2 + $0x38] sm:$0xff]
  %v560 = vunpack.c.l.b16 %v544
  %v561 = vunpack.c.h.b16 %v544
  %v562 = vunpack.c.l.b16 %v545
  %v563 = vunpack.c.h.b16 %v545
  %v564 = vunpack.c.l.b16 %v546
  %v565 = vunpack.c.h.b16 %v546
  %v566 = vunpack.c.l.b16 %v547
  %v567 = vunpack.c.h.b16 %v547
  %v568 = vunpack.c.l.b16 %v548
  %v569 = vunpack.c.h.b16 %v548
  %v570 = vunpack.c.l.b16 %v549
  %v571 = vunpack.c.h.b16 %v549
  %v572 = vunpack.c.l.b16 %v550
  %v573 = vunpack.c.h.b16 %v550
  %v574 = vunpack.c.l.b16 %v551
  %v575 = vunpack.c.h.b16 %v551
  %v576 = vpack.c.b16 %v564, %v560
  %v577 = vpack.c.b16 %v565, %v561
  %v578 = vpack.c.b16 %v566, %v562
  %v579 = vpack.c.b16 %v567, %v563
  %v580 = vpack.c.b16 %v572, %v568
  %v581 = vpack.c.b16 %v573, %v569
  %v582 = vpack.c.b16 %v574, %v570
  %v583 = vpack.c.b16 %v575, %v571
  %v591 = vsel %vm277, %v579, 0
  %v594 = vsel %vm277, %v583, 0
  %596 = vmatprep.subr.bf16.mxu0 0
  %597 = vmatpush1.bf16.msra.mxu0 %v234
  %598 = vmatprep.subr.bf16.mxu0 0
  %599 = vmatpush1.bf16.msra.mxu0 %v233
  %600 = vmatprep.subr.bf16.mxu0 0
  %601 = vmatpush1.bf16.msra.mxu0 %v232
  %602 = vmatprep.subr.bf16.mxu0 0
  %603 = vmatpush1.bf16.msra.mxu0 %v231
  %604 = vmatprep.subr.bf16.mxu0 0
  %605 = vmatpush1.bf16.msra.mxu0 %v230
  %606 = vmatprep.subr.bf16.mxu0 0
  %607 = vmatpush1.bf16.msra.mxu0 %v229
  %608 = vmatprep.subr.bf16.mxu0 0
  %609 = vmatpush1.bf16.msra.mxu0 %v228
  %610 = vmatprep.subr.bf16.mxu0 0
  %611 = vmatpush1.bf16.msra.mxu0 %v227
  %612 = vmatprep.subr.bf16.mxu0 0
  %613 = vmatpush2.bf16.msra.mxu0 %v242
  %614 = vmatprep.subr.bf16.mxu0 0
  %615 = vmatpush2.bf16.msra.mxu0 %v241
  %616 = vmatprep.subr.bf16.mxu0 0
  %617 = vmatpush2.bf16.msra.mxu0 %v240
  %618 = vmatprep.subr.bf16.mxu0 0
  %619 = vmatpush2.bf16.msra.mxu0 %v239
  %620 = vmatprep.subr.bf16.mxu0 0
  %621 = vmatpush2.bf16.msra.mxu0 %v238
  %622 = vmatprep.subr.bf16.mxu0 0
  %623 = vmatpush2.bf16.msra.mxu0 %v237
  %624 = vmatprep.subr.bf16.mxu0 0
  %625 = vmatpush2.bf16.msra.mxu0 %v236
  %626 = vmatprep.subr.bf16.mxu0 0
  %627 = vmatpush2.bf16.msra.mxu0 %v235
  %628 = vmatprep.mubr.bf16.mxu0 %v577
  %629 = vmatmul.mubr.bf16.gmra.mxu0 %v576
  %v630 = vpop.f32.mrf.mxu0
  %v631 = vadd.f32 %v87, %v630
  %v632 = vpop.f32.mrf.mxu0
  %v633 = vpop.f32.mrf.mxu0
  %v634 = vadd.f32 %v87, %v633
  %v635 = vpop.f32.mrf.mxu0
  %636 = vmatprep.mubr.bf16.mxu0 %v581
  %637 = vmatmul.mubr.bf16.gmra.mxu0 %v580
  %v638 = vpop.f32.mrf.mxu0
  %v639 = vadd.f32 %v87, %v638
  %v640 = vpop.f32.mrf.mxu0
  %v641 = vpop.f32.mrf.mxu0
  %v642 = vadd.f32 %v87, %v641
  %v643 = vpop.f32.mrf.mxu0
  %644 = vdwg.mxu0
  %645 = vmatprep.subr.bf16.mxu0 0
  %646 = vmatpush1.bf16.msra.mxu0 %v250
  %647 = vmatprep.subr.bf16.mxu0 0
  %648 = vmatpush1.bf16.msra.mxu0 %v249
  %649 = vmatprep.subr.bf16.mxu0 0
  %650 = vmatpush1.bf16.msra.mxu0 %v248
  %651 = vmatprep.subr.bf16.mxu0 0
  %652 = vmatpush1.bf16.msra.mxu0 %v247
  %653 = vmatprep.subr.bf16.mxu0 0
  %654 = vmatpush1.bf16.msra.mxu0 %v246
  %655 = vmatprep.subr.bf16.mxu0 0
  %656 = vmatpush1.bf16.msra.mxu0 %v245
  %657 = vmatprep.subr.bf16.mxu0 0
  %658 = vmatpush1.bf16.msra.mxu0 %v244
  %659 = vmatprep.subr.bf16.mxu0 0
  %660 = vmatpush1.bf16.msra.mxu0 %v243
  %661 = vmatprep.subr.bf16.mxu0 0
  %662 = vmatpush2.bf16.msra.mxu0 0
  %663 = vmatprep.subr.bf16.mxu0 0
  %664 = vmatpush2.bf16.msra.mxu0 0
  %665 = vmatprep.subr.bf16.mxu0 0
  %666 = vmatpush2.bf16.msra.mxu0 0
  %667 = vmatprep.subr.bf16.mxu0 0
  %668 = vmatpush2.bf16.msra.mxu0 0
  %669 = vmatprep.subr.bf16.mxu0 0
  %670 = vmatpush2.bf16.msra.mxu0 0
  %671 = vmatprep.subr.bf16.mxu0 0
  %672 = vmatpush2.bf16.msra.mxu0 0
  %673 = vmatprep.subr.bf16.mxu0 0
  %674 = vmatpush2.bf16.msra.mxu0 0
  %675 = vmatprep.subr.bf16.mxu0 0
  %676 = vmatpush2.bf16.msra.mxu0 %v251
  %677 = vmatprep.mubr.bf16.mxu0 %v591
  %678 = vmatmul.mubr.bf16.gmra.mxu0 %v578
  %v679 = vpop.f32.mrf.mxu0
  %v680 = vadd.f32 %v631, %v679
  %v681 = vpop.f32.mrf.mxu0
  %v682 = vpop.f32.mrf.mxu0
  %v683 = vadd.f32 %v634, %v682
  %v684 = vpop.f32.mrf.mxu0
  %685 = vmatprep.mubr.bf16.mxu0 %v594
  %686 = vmatmul.mubr.bf16.gmra.mxu0 %v582
  %v687 = vpop.f32.mrf.mxu0
  %v688 = vadd.f32 %v639, %v687
  %v689 = vpop.f32.mrf.mxu0
  %v690 = vpop.f32.mrf.mxu0
  %v691 = vadd.f32 %v642, %v690
  %v692 = vpop.f32.mrf.mxu0
  %693 = vdwg.mxu0
  %v694 = vmax.f32 %v680, 0.0
  %v695 = vmax.f32 %v683, 0.0
  %v696 = vmax.f32 %v688, 0.0
  %v697 = vmax.f32 %v691, 0.0
  %v698 = vld [vmem:[%s3] sm:$0xff]
  %v699 = vld [vmem:[%s3 + $0x8] sm:$0xff]
  %v700 = vld [vmem:[%s3 + $0x10] sm:$0xff]
  %v701 = vld [vmem:[%s3 + $0x18] sm:$0xff]
  %v702 = vld [vmem:[%s3 + $0x20] sm:$0xff]
  %v703 = vld [vmem:[%s3 + $0x28] sm:$0xff]
  %v704 = vld [vmem:[%s3 + $0x30] sm:$0xff]
  %v705 = vld [vmem:[%s3 + $0x38] sm:$0xff]
  %v714 = vunpack.c.l.b16 %v698
  %v715 = vunpack.c.h.b16 %v698
  %v716 = vunpack.c.l.b16 %v699
  %v717 = vunpack.c.h.b16 %v699
  %v718 = vunpack.c.l.b16 %v700
  %v719 = vunpack.c.h.b16 %v700
  %v720 = vunpack.c.l.b16 %v701
  %v721 = vunpack.c.h.b16 %v701
  %v722 = vunpack.c.l.b16 %v702
  %v723 = vunpack.c.h.b16 %v702
  %v724 = vunpack.c.l.b16 %v703
  %v725 = vunpack.c.h.b16 %v703
  %v726 = vunpack.c.l.b16 %v704
  %v727 = vunpack.c.h.b16 %v704
  %v728 = vunpack.c.l.b16 %v705
  %v729 = vunpack.c.h.b16 %v705
  %v730 = vpack.c.b16 %v718, %v714
  %v731 = vpack.c.b16 %v719, %v715
  %v732 = vpack.c.b16 %v720, %v716
  %v733 = vpack.c.b16 %v721, %v717
  %v734 = vpack.c.b16 %v726, %v722
  %v735 = vpack.c.b16 %v727, %v723
  %v736 = vpack.c.b16 %v728, %v724
  %v737 = vpack.c.b16 %v729, %v725
  %v745 = vsel %vm277, %v733, 0
  %v748 = vsel %vm277, %v737, 0
  %750 = vmatprep.subr.bf16.mxu0 0
  %751 = vmatpush1.bf16.msra.mxu0 %v234
  %752 = vmatprep.subr.bf16.mxu0 0
  %753 = vmatpush1.bf16.msra.mxu0 %v233
  %754 = vmatprep.subr.bf16.mxu0 0
  %755 = vmatpush1.bf16.msra.mxu0 %v232
  %756 = vmatprep.subr.bf16.mxu0 0
  %757 = vmatpush1.bf16.msra.mxu0 %v231
  %758 = vmatprep.subr.bf16.mxu0 0
  %759 = vmatpush1.bf16.msra.mxu0 %v230
  %760 = vmatprep.subr.bf16.mxu0 0
  %761 = vmatpush1.bf16.msra.mxu0 %v229
  %762 = vmatprep.subr.bf16.mxu0 0
  %763 = vmatpush1.bf16.msra.mxu0 %v228
  %764 = vmatprep.subr.bf16.mxu0 0
  %765 = vmatpush1.bf16.msra.mxu0 %v227
  %766 = vmatprep.subr.bf16.mxu0 0
  %767 = vmatpush2.bf16.msra.mxu0 %v242
  %768 = vmatprep.subr.bf16.mxu0 0
  %769 = vmatpush2.bf16.msra.mxu0 %v241
  %770 = vmatprep.subr.bf16.mxu0 0
  %771 = vmatpush2.bf16.msra.mxu0 %v240
  %772 = vmatprep.subr.bf16.mxu0 0
  %773 = vmatpush2.bf16.msra.mxu0 %v239
  %774 = vmatprep.subr.bf16.mxu0 0
  %775 = vmatpush2.bf16.msra.mxu0 %v238
  %776 = vmatprep.subr.bf16.mxu0 0
  %777 = vmatpush2.bf16.msra.mxu0 %v237
  %778 = vmatprep.subr.bf16.mxu0 0
  %779 = vmatpush2.bf16.msra.mxu0 %v236
  %780 = vmatprep.subr.bf16.mxu0 0
  %781 = vmatpush2.bf16.msra.mxu0 %v235
  %782 = vmatprep.mubr.bf16.mxu0 %v731
  %783 = vmatmul.mubr.bf16.gmra.mxu0 %v730
  %v784 = vpop.f32.mrf.mxu0
  %v785 = vadd.f32 %v87, %v784
  %v786 = vpop.f32.mrf.mxu0
  %v787 = vpop.f32.mrf.mxu0
  %v788 = vadd.f32 %v87, %v787
  %v789 = vpop.f32.mrf.mxu0
  %790 = vmatprep.mubr.bf16.mxu0 %v735
  %791 = vmatmul.mubr.bf16.gmra.mxu0 %v734
  %v792 = vpop.f32.mrf.mxu0
  %v793 = vadd.f32 %v87, %v792
  %v794 = vpop.f32.mrf.mxu0
  %v795 = vpop.f32.mrf.mxu0
  %v796 = vadd.f32 %v87, %v795
  %v797 = vpop.f32.mrf.mxu0
  %798 = vdwg.mxu0
  %799 = vmatprep.subr.bf16.mxu0 0
  %800 = vmatpush1.bf16.msra.mxu0 %v250
  %801 = vmatprep.subr.bf16.mxu0 0
  %802 = vmatpush1.bf16.msra.mxu0 %v249
  %803 = vmatprep.subr.bf16.mxu0 0
  %804 = vmatpush1.bf16.msra.mxu0 %v248
  %805 = vmatprep.subr.bf16.mxu0 0
  %806 = vmatpush1.bf16.msra.mxu0 %v247
  %807 = vmatprep.subr.bf16.mxu0 0
  %808 = vmatpush1.bf16.msra.mxu0 %v246
  %809 = vmatprep.subr.bf16.mxu0 0
  %810 = vmatpush1.bf16.msra.mxu0 %v245
  %811 = vmatprep.subr.bf16.mxu0 0
  %812 = vmatpush1.bf16.msra.mxu0 %v244
  %813 = vmatprep.subr.bf16.mxu0 0
  %814 = vmatpush1.bf16.msra.mxu0 %v243
  %815 = vmatprep.subr.bf16.mxu0 0
  %816 = vmatpush2.bf16.msra.mxu0 0
  %817 = vmatprep.subr.bf16.mxu0 0
  %818 = vmatpush2.bf16.msra.mxu0 0
  %819 = vmatprep.subr.bf16.mxu0 0
  %820 = vmatpush2.bf16.msra.mxu0 0
  %821 = vmatprep.subr.bf16.mxu0 0
  %822 = vmatpush2.bf16.msra.mxu0 0
  %823 = vmatprep.subr.bf16.mxu0 0
  %824 = vmatpush2.bf16.msra.mxu0 0
  %825 = vmatprep.subr.bf16.mxu0 0
  %826 = vmatpush2.bf16.msra.mxu0 0
  %827 = vmatprep.subr.bf16.mxu0 0
  %828 = vmatpush2.bf16.msra.mxu0 0
  %829 = vmatprep.subr.bf16.mxu0 0
  %830 = vmatpush2.bf16.msra.mxu0 %v251
  %831 = vmatprep.mubr.bf16.mxu0 %v745
  %832 = vmatmul.mubr.bf16.gmra.mxu0 %v732
  %v833 = vpop.f32.mrf.mxu0
  %v834 = vadd.f32 %v785, %v833
  %v835 = vpop.f32.mrf.mxu0
  %v836 = vpop.f32.mrf.mxu0
  %v837 = vadd.f32 %v788, %v836
  %v838 = vpop.f32.mrf.mxu0
  %839 = vmatprep.mubr.bf16.mxu0 %v748
  %840 = vmatmul.mubr.bf16.gmra.mxu0 %v736
  %v841 = vpop.f32.mrf.mxu0
  %v842 = vadd.f32 %v793, %v841
  %v843 = vpop.f32.mrf.mxu0
  %v844 = vpop.f32.mrf.mxu0
  %v845 = vadd.f32 %v796, %v844
  %v846 = vpop.f32.mrf.mxu0
  %847 = vdwg.mxu0
  %v848 = vmax.f32 %v834, 0.0
  %v849 = vmax.f32 %v837, 0.0
  %v850 = vmax.f32 %v842, 0.0
  %v851 = vmax.f32 %v845, 0.0
  %v852 = vmax.f32 %v694, %v848
  %v853 = vmax.f32 %v695, %v849
  %v854 = vmax.f32 %v696, %v850
  %v855 = vmax.f32 %v697, %v851
  %v856 = vmax.f32 %v540, %v852
  %v857 = vmax.f32 %v541, %v853
  %v858 = vmax.f32 %v542, %v854
  %v859 = vmax.f32 %v543, %v855
  %v860 = vpack.c.bf16 %v857, %v856
  %v861 = vpack.c.bf16 %v859, %v858
  %v864 = vunpack.c.l.b16 %v860
  %v865 = vunpack.c.h.b16 %v860
  %v866 = vunpack.c.l.b16 %v861
  %v867 = vunpack.c.h.b16 %v861
  %v868 = vpack.c.b16 %v864, %v864
  %v869 = vpack.c.b16 %v865, %v865
  %v870 = vpack.c.b16 %v866, %v866
  %v871 = vpack.c.b16 %v867, %v867
  %vm876 = vcmask 257024
  %877 = vst.msk [vmem:[%s6] sm:$0xf] %vm876, %v868
  %878 = vst.msk [vmem:[%s6 + $0x4] sm:$0xf] %vm876, %v869
  %879 = vst.msk [vmem:[%s6 + $0x8] sm:$0xf] %vm876, %v870
  %880 = vst.msk [vmem:[%s6 + $0xc] sm:$0xf] %vm876, %v871
  // Predicated region
  $region26: #{net_forward.4} parent=0 // pred_check
    _
  $region27: #{net_forward.4} parent=0 // pred_check_branch
    %882 = sbr.rel (0) target = $region29
  $region28: #{net_forward.4} parent=0 // pred_region
    _
  $region29: #{net_forward.4} parent=0 // pred_fallthru
    _
  // Predicated region
  $region30: #{net_forward.4} parent=0 // pred_check
    _
  $region31: #{net_forward.4} parent=0 // pred_check_branch
    %884 = sbr.rel (0) target = $region33
  $region32: #{net_forward.4} parent=0 // pred_region
    _
  $region33: #{net_forward.4} parent=0 // pred_fallthru
    _

// kernel: net_forward.5
$region0: #{net_forward.5}
  #allocation0 [shape = 'u32[]', space=smem, size = 0x4, offset = 0x4, fixed_abs, tag = 'smem constant byte address 0x4 - core index']
  #allocation1 [shape = 'u32[144,128]{1,0:T(1,128)}', space=vmem, size = 0x12000, scoped, tag = 'internal scratch']
  %s0 = inlined_call_operand.vmem [shape: bf16[2,512], index: 0, kind: input, shape index: {}]
  %s1 = inlined_call_operand.vmem [shape: bf16[512,256], index: 1, kind: input, shape index: {}]
  %s2 = inlined_call_operand.vmem [shape: f32[1,256], index: 2, kind: input, shape index: {}]
  %s3 = inlined_call_operand.vmem [shape: bf16[256,64], index: 3, kind: input, shape index: {}]
  %s4 = inlined_call_operand.vmem [shape: f32[1,64], index: 4, kind: input, shape index: {}]
  %s5 = inlined_call_operand.vmem [shape: bf16[64,128], index: 5, kind: input, shape index: {}]
  %s6 = inlined_call_operand.vmem [shape: f32[1,128], index: 6, kind: input, shape index: {}]
  %s7 = inlined_call_operand.hbm [shape: f32[2,128], index: 7, kind: output, shape index: {}]
  %s8 = sld [smem:[#allocation0]]
  $region38: #{net_forward.5} parent=0
    _
  %s10 = ssub.s32 1, %s8
  %s11 = scalar_select 0, %s10, %s8
  $region1: #{net_forward.5} parent=0
    #allocation2 [shape = 'u8[1024]{0}', space=vmem, size = 0x400, scoped, tag = 'output window, operand 0, single buffered']
    #allocation3 [shape = 's32[1]{0}', space=sflag, size = 0x4, scoped, tag = 'scoped memory for net_forward.5']
    %12 = vsyncpa [#allocation3], 0
    // Predicated region
    $region2: #{net_forward.5} parent=1 // pred_check
      _
    $region3: #{net_forward.5} parent=1 // pred_check_branch
      %14 = sbr.rel (0) target = $region5
    $region4: #{net_forward.5} parent=1 // pred_region
      _
    $region5: #{net_forward.5} parent=1 // pred_fallthru
      _
    // Predicated region
    $region6: #{net_forward.5} parent=1 // pred_check
      _
    $region7: #{net_forward.5} parent=1 // pred_check_branch
      %16 = sbr.rel (0) target = $region9
    $region8: #{net_forward.5} parent=1 // pred_region
      _
    $region9: #{net_forward.5} parent=1 // pred_fallthru
      _
    // Predicated region
    $region10: #{net_forward.5} parent=1 // pred_check
      _
    $region11: #{net_forward.5} parent=1 // pred_check_branch
      %18 = sbr.rel (0) target = $region13
    $region12: #{net_forward.5} parent=1 // pred_region
      _
    $region13: #{net_forward.5} parent=1 // pred_fallthru
      _
    // Predicated region
    $region14: #{net_forward.5} parent=1 // pred_check
      _
    $region15: #{net_forward.5} parent=1 // pred_check_branch
      %20 = sbr.rel (0) target = $region17
    $region16: #{net_forward.5} parent=1 // pred_region
      _
    $region17: #{net_forward.5} parent=1 // pred_fallthru
      _
    // Predicated region
    $region18: #{net_forward.5} parent=1 // pred_check
      _
    $region19: #{net_forward.5} parent=1 // pred_check_branch
      %22 = sbr.rel (0) target = $region21
    $region20: #{net_forward.5} parent=1 // pred_region
      _
    $region21: #{net_forward.5} parent=1 // pred_fallthru
      _
    // Predicated region
    $region22: #{net_forward.5} parent=1 // pred_check
      _
    $region23: #{net_forward.5} parent=1 // pred_check_branch
      %24 = sbr.rel (0) target = $region25
    $region24: #{net_forward.5} parent=1 // pred_region
      _
    $region25: #{net_forward.5} parent=1 // pred_fallthru
      _
    // Predicated region
    $region26: #{net_forward.5} parent=1 // pred_check
      _
    $region27: #{net_forward.5} parent=1 // pred_check_branch
      %26 = sbr.rel (0) target = $region29
    $region28: #{net_forward.5} parent=1 // pred_region
      _
    $region29: #{net_forward.5} parent=1 // pred_fallthru
      _
    %v28 = vld [vmem:[%s0] sm:$0xf]
    %v29 = vld [vmem:[%s1] sm:$0xff]
    %v30 = vld [vmem:[%s1 + $0x8] sm:$0xff]
    %v31 = vld [vmem:[%s1 + $0x10] sm:$0xff]
    %v32 = vld [vmem:[%s1 + $0x18] sm:$0xff]
    %v33 = vld [vmem:[%s1 + $0x20] sm:$0xff]
    %v34 = vld [vmem:[%s1 + $0x28] sm:$0xff]
    %v35 = vld [vmem:[%s1 + $0x30] sm:$0xff]
    %v36 = vld [vmem:[%s1 + $0x38] sm:$0xff]
    %v37 = vld [vmem:[%s1 + $0x40] sm:$0xff]
    %v38 = vld [vmem:[%s1 + $0x48] sm:$0xff]
    %v39 = vld [vmem:[%s1 + $0x50] sm:$0xff]
    %v40 = vld [vmem:[%s1 + $0x58] sm:$0xff]
    %v41 = vld [vmem:[%s1 + $0x60] sm:$0xff]
    %v42 = vld [vmem:[%s1 + $0x68] sm:$0xff]
    %v43 = vld [vmem:[%s1 + $0x70] sm:$0xff]
    %v44 = vld [vmem:[%s1 + $0x78] sm:$0xff]
    %v45 = vld [vmem:[%s1 + $0x80] sm:$0xff]
    %v46 = vld [vmem:[%s1 + $0x88] sm:$0xff]
    %v47 = vld [vmem:[%s1 + $0x90] sm:$0xff]
    %v48 = vld [vmem:[%s1 + $0x98] sm:$0xff]
    %v49 = vld [vmem:[%s1 + $0xa0] sm:$0xff]
    %v50 = vld [vmem:[%s1 + $0xa8] sm:$0xff]
    %v51 = vld [vmem:[%s1 + $0xb0] sm:$0xff]
    %v52 = vld [vmem:[%s1 + $0xb8] sm:$0xff]
    %v53 = vld [vmem:[%s1 + $0xc0] sm:$0xff]
    %v54 = vld [vmem:[%s1 + $0xc8] sm:$0xff]
    %v55 = vld [vmem:[%s1 + $0xd0] sm:$0xff]
    %v56 = vld [vmem:[%s1 + $0xd8] sm:$0xff]
    %v57 = vld [vmem:[%s1 + $0xe0] sm:$0xff]
    %v58 = vld [vmem:[%s1 + $0xe8] sm:$0xff]
    %v59 = vld [vmem:[%s1 + $0xf0] sm:$0xff]
    %v60 = vld [vmem:[%s1 + $0xf8] sm:$0xff]
    %v61 = vld [vmem:[%s1 + $0x100] sm:$0xff]
    %v62 = vld [vmem:[%s1 + $0x108] sm:$0xff]
    %v63 = vld [vmem:[%s1 + $0x110] sm:$0xff]
    %v64 = vld [vmem:[%s1 + $0x118] sm:$0xff]
    %v65 = vld [vmem:[%s1 + $0x120] sm:$0xff]
    %v66 = vld [vmem:[%s1 + $0x128] sm:$0xff]
    %v67 = vld [vmem:[%s1 + $0x130] sm:$0xff]
    %v68 = vld [vmem:[%s1 + $0x138] sm:$0xff]
    %v69 = vld [vmem:[%s1 + $0x140] sm:$0xff]
    %v70 = vld [vmem:[%s1 + $0x148] sm:$0xff]
    %v71 = vld [vmem:[%s1 + $0x150] sm:$0xff]
    %v72 = vld [vmem:[%s1 + $0x158] sm:$0xff]
    %v73 = vld [vmem:[%s1 + $0x160] sm:$0xff]
    %v74 = vld [vmem:[%s1 + $0x168] sm:$0xff]
    %v75 = vld [vmem:[%s1 + $0x170] sm:$0xff]
    %v76 = vld [vmem:[%s1 + $0x178] sm:$0xff]
    %v77 = vld [vmem:[%s1 + $0x180] sm:$0xff]
    %v78 = vld [vmem:[%s1 + $0x188] sm:$0xff]
    %v79 = vld [vmem:[%s1 + $0x190] sm:$0xff]
    %v80 = vld [vmem:[%s1 + $0x198] sm:$0xff]
    %v81 = vld [vmem:[%s1 + $0x1a0] sm:$0xff]
    %v82 = vld [vmem:[%s1 + $0x1a8] sm:$0xff]
    %v83 = vld [vmem:[%s1 + $0x1b0] sm:$0xff]
    %v84 = vld [vmem:[%s1 + $0x1b8] sm:$0xff]
    %v85 = vld [vmem:[%s1 + $0x1c0] sm:$0xff]
    %v86 = vld [vmem:[%s1 + $0x1c8] sm:$0xff]
    %v87 = vld [vmem:[%s1 + $0x1d0] sm:$0xff]
    %v88 = vld [vmem:[%s1 + $0x1d8] sm:$0xff]
    %v89 = vld [vmem:[%s1 + $0x1e0] sm:$0xff]
    %v90 = vld [vmem:[%s1 + $0x1e8] sm:$0xff]
    %v91 = vld [vmem:[%s1 + $0x1f0] sm:$0xff]
    %v92 = vld [vmem:[%s1 + $0x1f8] sm:$0xff]
    %v93 = vld [vmem:[%s2] sm:$0x3]
    %v95 = vlaneseq
    %v96 = vshrl.u32 %v95, 7
    %v97 = vsub.s32 0, %v96
    %v98 = vrot.slane %v93, %v97
    %v99 = vlaneseq
    %v100 = vshrl.u32 %v99, 7
    %v101 = vsub.s32 1, %v100
    %v102 = vrot.slane %v93, %v101
    %v107 = vunpack.c.l.s4 1966171168
    %v108 = vunpack.c.0.s8 %v107
    %v109 = vlaneseq
    %v110 = vshrl.u32 %v109, 7
    %v111 = vsub.s32 %v108, %v110
    %v112 = vrot.slane %v28, %v111
    %v113 = vcombine.high %v112, %v112
    %v115 = vunpack.c.l.s4 1966171168
    %v116 = vunpack.c.0.s8 %v115
    %v117 = vlaneseq
    %v118 = vshrl.u32 %v117, 7
    %v119 = vsub.s32 %v116, %v118
    %v120 = vrot.slane %v112, %v119
    %v122 = vunpack.c.l.s4 1966171168
    %v123 = vunpack.c.0.s8 %v122
    %v124 = vlaneseq
    %v125 = vshrl.u32 %v124, 7
    %v126 = vsub.s32 %v123, %v125
    %v127 = vrot.slane %v113, %v126
    %v128 = vcombine.high %v120, %v120
    %v129 = vcombine.high %v127, %v127
    %v198 = vunpack.c.l.b16 %v29
    %v199 = vunpack.c.h.b16 %v29
    %v200 = vunpack.c.l.b16 %v30
    %v201 = vunpack.c.h.b16 %v30
    %v202 = vunpack.c.l.b16 %v31
    %v203 = vunpack.c.h.b16 %v31
    %v204 = vunpack.c.l.b16 %v32
    %v205 = vunpack.c.h.b16 %v32
    %v206 = vunpack.c.l.b16 %v33
    %v207 = vunpack.c.h.b16 %v33
    %v208 = vunpack.c.l.b16 %v34
    %v209 = vunpack.c.h.b16 %v34
    %v210 = vunpack.c.l.b16 %v35
    %v211 = vunpack.c.h.b16 %v35
    %v212 = vunpack.c.l.b16 %v36
    %v213 = vunpack.c.h.b16 %v36
    %v214 = vunpack.c.l.b16 %v37
    %v215 = vunpack.c.h.b16 %v37
    %v216 = vunpack.c.l.b16 %v38
    %v217 = vunpack.c.h.b16 %v38
    %v218 = vunpack.c.l.b16 %v39
    %v219 = vunpack.c.h.b16 %v39
    %v220 = vunpack.c.l.b16 %v40
    %v221 = vunpack.c.h.b16 %v40
    %v222 = vunpack.c.l.b16 %v41
    %v223 = vunpack.c.h.b16 %v41
    %v224 = vunpack.c.l.b16 %v42
    %v225 = vunpack.c.h.b16 %v42
    %v226 = vunpack.c.l.b16 %v43
    %v227 = vunpack.c.h.b16 %v43
    %v228 = vunpack.c.l.b16 %v44
    %v229 = vunpack.c.h.b16 %v44
    %v230 = vunpack.c.l.b16 %v45
    %v231 = vunpack.c.h.b16 %v45
    %v232 = vunpack.c.l.b16 %v46
    %v233 = vunpack.c.h.b16 %v46
    %v234 = vunpack.c.l.b16 %v47
    %v235 = vunpack.c.h.b16 %v47
    %v236 = vunpack.c.l.b16 %v48
    %v237 = vunpack.c.h.b16 %v48
    %v238 = vunpack.c.l.b16 %v49
    %v239 = vunpack.c.h.b16 %v49
    %v240 = vunpack.c.l.b16 %v50
    %v241 = vunpack.c.h.b16 %v50
    %v242 = vunpack.c.l.b16 %v51
    %v243 = vunpack.c.h.b16 %v51
    %v244 = vunpack.c.l.b16 %v52
    %v245 = vunpack.c.h.b16 %v52
    %v246 = vunpack.c.l.b16 %v53
    %v247 = vunpack.c.h.b16 %v53
    %v248 = vunpack.c.l.b16 %v54
    %v249 = vunpack.c.h.b16 %v54
    %v250 = vunpack.c.l.b16 %v55
    %v251 = vunpack.c.h.b16 %v55
    %v252 = vunpack.c.l.b16 %v56
    %v253 = vunpack.c.h.b16 %v56
    %v254 = vunpack.c.l.b16 %v57
    %v255 = vunpack.c.h.b16 %v57
    %v256 = vunpack.c.l.b16 %v58
    %v257 = vunpack.c.h.b16 %v58
    %v258 = vunpack.c.l.b16 %v59
    %v259 = vunpack.c.h.b16 %v59
    %v260 = vunpack.c.l.b16 %v60
    %v261 = vunpack.c.h.b16 %v60
    %v262 = vunpack.c.l.b16 %v61
    %v263 = vunpack.c.h.b16 %v61
    %v264 = vunpack.c.l.b16 %v62
    %v265 = vunpack.c.h.b16 %v62
    %v266 = vunpack.c.l.b16 %v63
    %v267 = vunpack.c.h.b16 %v63
    %v268 = vunpack.c.l.b16 %v64
    %v269 = vunpack.c.h.b16 %v64
    %v270 = vunpack.c.l.b16 %v65
    %v271 = vunpack.c.h.b16 %v65
    %v272 = vunpack.c.l.b16 %v66
    %v273 = vunpack.c.h.b16 %v66
    %v274 = vunpack.c.l.b16 %v67
    %v275 = vunpack.c.h.b16 %v67
    %v276 = vunpack.c.l.b16 %v68
    %v277 = vunpack.c.h.b16 %v68
    %v278 = vunpack.c.l.b16 %v69
    %v279 = vunpack.c.h.b16 %v69
    %v280 = vunpack.c.l.b16 %v70
    %v281 = vunpack.c.h.b16 %v70
    %v282 = vunpack.c.l.b16 %v71
    %v283 = vunpack.c.h.b16 %v71
    %v284 = vunpack.c.l.b16 %v72
    %v285 = vunpack.c.h.b16 %v72
    %v286 = vunpack.c.l.b16 %v73
    %v287 = vunpack.c.h.b16 %v73
    %v288 = vunpack.c.l.b16 %v74
    %v289 = vunpack.c.h.b16 %v74
    %v290 = vunpack.c.l.b16 %v75
    %v291 = vunpack.c.h.b16 %v75
    %v292 = vunpack.c.l.b16 %v76
    %v293 = vunpack.c.h.b16 %v76
    %v294 = vunpack.c.l.b16 %v77
    %v295 = vunpack.c.h.b16 %v77
    %v296 = vunpack.c.l.b16 %v78
    %v297 = vunpack.c.h.b16 %v78
    %v298 = vunpack.c.l.b16 %v79
    %v299 = vunpack.c.h.b16 %v79
    %v300 = vunpack.c.l.b16 %v80
    %v301 = vunpack.c.h.b16 %v80
    %v302 = vunpack.c.l.b16 %v81
    %v303 = vunpack.c.h.b16 %v81
    %v304 = vunpack.c.l.b16 %v82
    %v305 = vunpack.c.h.b16 %v82
    %v306 = vunpack.c.l.b16 %v83
    %v307 = vunpack.c.h.b16 %v83
    %v308 = vunpack.c.l.b16 %v84
    %v309 = vunpack.c.h.b16 %v84
    %v310 = vunpack.c.l.b16 %v85
    %v311 = vunpack.c.h.b16 %v85
    %v312 = vunpack.c.l.b16 %v86
    %v313 = vunpack.c.h.b16 %v86
    %v314 = vunpack.c.l.b16 %v87
    %v315 = vunpack.c.h.b16 %v87
    %v316 = vunpack.c.l.b16 %v88
    %v317 = vunpack.c.h.b16 %v88
    %v318 = vunpack.c.l.b16 %v89
    %v319 = vunpack.c.h.b16 %v89
    %v320 = vunpack.c.l.b16 %v90
    %v321 = vunpack.c.h.b16 %v90
    %v322 = vunpack.c.l.b16 %v91
    %v323 = vunpack.c.h.b16 %v91
    %v324 = vunpack.c.l.b16 %v92
    %v325 = vunpack.c.h.b16 %v92
    %v326 = vpack.c.b16 %v200, %v198
    %v327 = vpack.c.b16 %v201, %v199
    %v328 = vpack.c.b16 %v204, %v202
    %v329 = vpack.c.b16 %v205, %v203
    %v330 = vpack.c.b16 %v208, %v206
    %v331 = vpack.c.b16 %v209, %v207
    %v332 = vpack.c.b16 %v212, %v210
    %v333 = vpack.c.b16 %v213, %v211
    %v334 = vpack.c.b16 %v216, %v214
    %v335 = vpack.c.b16 %v217, %v215
    %v336 = vpack.c.b16 %v220, %v218
    %v337 = vpack.c.b16 %v221, %v219
    %v338 = vpack.c.b16 %v224, %v222
    %v339 = vpack.c.b16 %v225, %v223
    %v340 = vpack.c.b16 %v228, %v226
    %v341 = vpack.c.b16 %v229, %v227
    %v342 = vpack.c.b16 %v232, %v230
    %v343 = vpack.c.b16 %v233, %v231
    %v344 = vpack.c.b16 %v236, %v234
    %v345 = vpack.c.b16 %v237, %v235
    %v346 = vpack.c.b16 %v240, %v238
    %v347 = vpack.c.b16 %v241, %v239
    %v348 = vpack.c.b16 %v244, %v242
    %v349 = vpack.c.b16 %v245, %v243
    %v350 = vpack.c.b16 %v248, %v246
    %v351 = vpack.c.b16 %v249, %v247
    %v352 = vpack.c.b16 %v252, %v250
    %v353 = vpack.c.b16 %v253, %v251
    %v354 = vpack.c.b16 %v256, %v254
    %v355 = vpack.c.b16 %v257, %v255
    %v356 = vpack.c.b16 %v260, %v258
    %v357 = vpack.c.b16 %v261, %v259
    %v358 = vpack.c.b16 %v264, %v262
    %v359 = vpack.c.b16 %v265, %v263
    %v360 = vpack.c.b16 %v268, %v266
    %v361 = vpack.c.b16 %v269, %v267
    %v362 = vpack.c.b16 %v272, %v270
    %v363 = vpack.c.b16 %v273, %v271
    %v364 = vpack.c.b16 %v276, %v274
    %v365 = vpack.c.b16 %v277, %v275
    %v366 = vpack.c.b16 %v280, %v278
    %v367 = vpack.c.b16 %v281, %v279
    %v368 = vpack.c.b16 %v284, %v282
    %v369 = vpack.c.b16 %v285, %v283
    %v370 = vpack.c.b16 %v288, %v286
    %v371 = vpack.c.b16 %v289, %v287
    %v372 = vpack.c.b16 %v292, %v290
    %v373 = vpack.c.b16 %v293, %v291
    %v374 = vpack.c.b16 %v296, %v294
    %v375 = vpack.c.b16 %v297, %v295
    %v376 = vpack.c.b16 %v300, %v298
    %v377 = vpack.c.b16 %v301, %v299
    %v378 = vpack.c.b16 %v304, %v302
    %v379 = vpack.c.b16 %v305, %v303
    %v380 = vpack.c.b16 %v308, %v306
    %v381 = vpack.c.b16 %v309, %v307
    %v382 = vpack.c.b16 %v312, %v310
    %v383 = vpack.c.b16 %v313, %v311
    %v384 = vpack.c.b16 %v316, %v314
    %v385 = vpack.c.b16 %v317, %v315
    %v386 = vpack.c.b16 %v320, %v318
    %v387 = vpack.c.b16 %v321, %v319
    %v388 = vpack.c.b16 %v324, %v322
    %v389 = vpack.c.b16 %v325, %v323
    %454 = vmatprep.subr.bf16.mxu0 %v341
    %455 = vmatpush1.bf16.msra.mxu0 %v340
    %456 = vmatprep.subr.bf16.mxu0 %v339
    %457 = vmatpush1.bf16.msra.mxu0 %v338
    %458 = vmatprep.subr.bf16.mxu0 %v337
    %459 = vmatpush1.bf16.msra.mxu0 %v336
    %460 = vmatprep.subr.bf16.mxu0 %v335
    %461 = vmatpush1.bf16.msra.mxu0 %v334
    %462 = vmatprep.subr.bf16.mxu0 %v333
    %463 = vmatpush1.bf16.msra.mxu0 %v332
    %464 = vmatprep.subr.bf16.mxu0 %v331
    %465 = vmatpush1.bf16.msra.mxu0 %v330
    %466 = vmatprep.subr.bf16.mxu0 %v329
    %467 = vmatpush1.bf16.msra.mxu0 %v328
    %468 = vmatprep.subr.bf16.mxu0 %v327
    %469 = vmatpush1.bf16.msra.mxu0 %v326
    %470 = vmatprep.subr.bf16.mxu0 %v357
    %471 = vmatpush2.bf16.msra.mxu0 %v356
    %472 = vmatprep.subr.bf16.mxu0 %v355
    %473 = vmatpush2.bf16.msra.mxu0 %v354
    %474 = vmatprep.subr.bf16.mxu0 %v353
    %475 = vmatpush2.bf16.msra.mxu0 %v352
    %476 = vmatprep.subr.bf16.mxu0 %v351
    %477 = vmatpush2.bf16.msra.mxu0 %v350
    %478 = vmatprep.subr.bf16.mxu0 %v349
    %479 = vmatpush2.bf16.msra.mxu0 %v348
    %480 = vmatprep.subr.bf16.mxu0 %v347
    %481 = vmatpush2.bf16.msra.mxu0 %v346
    %482 = vmatprep.subr.bf16.mxu0 %v345
    %483 = vmatpush2.bf16.msra.mxu0 %v344
    %484 = vmatprep.subr.bf16.mxu0 %v343
    %485 = vmatpush2.bf16.msra.mxu0 %v342
    %486 = vmatprep.mubr.bf16.mxu0 %v127
    %487 = vmatmul.mubr.bf16.gmra.mxu0 %v120
    %v488 = vpop.f32.mrf.mxu0
    %v489 = vadd.f32 %v98, %v488
    %v490 = vpop.f32.mrf.mxu0
    %v491 = vadd.f32 %v102, %v490
    %v492 = vpop.f32.mrf.mxu0
    %v493 = vpop.f32.mrf.mxu0
    %494 = vdwg.mxu0
    %495 = vmatprep.subr.bf16.mxu0 %v373
    %496 = vmatpush1.bf16.msra.mxu0 %v372
    %497 = vmatprep.subr.bf16.mxu0 %v371
    %498 = vmatpush1.bf16.msra.mxu0 %v370
    %499 = vmatprep.subr.bf16.mxu0 %v369
    %500 = vmatpush1.bf16.msra.mxu0 %v368
    %501 = vmatprep.subr.bf16.mxu0 %v367
    %502 = vmatpush1.bf16.msra.mxu0 %v366
    %503 = vmatprep.subr.bf16.mxu0 %v365
    %504 = vmatpush1.bf16.msra.mxu0 %v364
    %505 = vmatprep.subr.bf16.mxu0 %v363
    %506 = vmatpush1.bf16.msra.mxu0 %v362
    %507 = vmatprep.subr.bf16.mxu0 %v361
    %508 = vmatpush1.bf16.msra.mxu0 %v360
    %509 = vmatprep.subr.bf16.mxu0 %v359
    %510 = vmatpush1.bf16.msra.mxu0 %v358
    %511 = vmatprep.subr.bf16.mxu0 %v389
    %512 = vmatpush2.bf16.msra.mxu0 %v388
    %513 = vmatprep.subr.bf16.mxu0 %v387
    %514 = vmatpush2.bf16.msra.mxu0 %v386
    %515 = vmatprep.subr.bf16.mxu0 %v385
    %516 = vmatpush2.bf16.msra.mxu0 %v384
    %517 = vmatprep.subr.bf16.mxu0 %v383
    %518 = vmatpush2.bf16.msra.mxu0 %v382
    %519 = vmatprep.subr.bf16.mxu0 %v381
    %520 = vmatpush2.bf16.msra.mxu0 %v380
    %521 = vmatprep.subr.bf16.mxu0 %v379
    %522 = vmatpush2.bf16.msra.mxu0 %v378
    %523 = vmatprep.subr.bf16.mxu0 %v377
    %524 = vmatpush2.bf16.msra.mxu0 %v376
    %525 = vmatprep.subr.bf16.mxu0 %v375
    %526 = vmatpush2.bf16.msra.mxu0 %v374
    %527 = vmatprep.mubr.bf16.mxu0 %v129
    %528 = vmatmul.mubr.bf16.gmra.mxu0 %v128
    %v529 = vpop.f32.mrf.mxu0
    %v530 = vadd.f32 %v489, %v529
    %v531 = vpop.f32.mrf.mxu0
    %v532 = vadd.f32 %v491, %v531
    %v533 = vpop.f32.mrf.mxu0
    %v534 = vpop.f32.mrf.mxu0
    %535 = vdwg.mxu0
    %v536 = vpack.c.bf16 %v530, %v530
    %v537 = vpack.c.bf16 %v532, %v532
    %v538 = vld [vmem:[%s3] sm:$0xf]
    %v539 = vld [vmem:[%s3 + $0x4] sm:$0xf]
    %v540 = vld [vmem:[%s3 + $0x8] sm:$0xf]
    %v541 = vld [vmem:[%s3 + $0xc] sm:$0xf]
    %v542 = vld [vmem:[%s3 + $0x10] sm:$0xf]
    %v543 = vld [vmem:[%s3 + $0x14] sm:$0xf]
    %v544 = vld [vmem:[%s3 + $0x18] sm:$0xf]
    %v545 = vld [vmem:[%s3 + $0x1c] sm:$0xf]
    %v546 = vld [vmem:[%s3 + $0x20] sm:$0xf]
    %v547 = vld [vmem:[%s3 + $0x24] sm:$0xf]
    %v548 = vld [vmem:[%s3 + $0x28] sm:$0xf]
    %v549 = vld [vmem:[%s3 + $0x2c] sm:$0xf]
    %v550 = vld [vmem:[%s3 + $0x30] sm:$0xf]
    %v551 = vld [vmem:[%s3 + $0x34] sm:$0xf]
    %v552 = vld [vmem:[%s3 + $0x38] sm:$0xf]
    %v553 = vld [vmem:[%s3 + $0x3c] sm:$0xf]
    %v554 = vld [vmem:[%s3 + $0x40] sm:$0xf]
    %v555 = vld [vmem:[%s3 + $0x44] sm:$0xf]
    %v556 = vld [vmem:[%s3 + $0x48] sm:$0xf]
    %v557 = vld [vmem:[%s3 + $0x4c] sm:$0xf]
    %v558 = vld [vmem:[%s3 + $0x50] sm:$0xf]
    %v559 = vld [vmem:[%s3 + $0x54] sm:$0xf]
    %v560 = vld [vmem:[%s3 + $0x58] sm:$0xf]
    %v561 = vld [vmem:[%s3 + $0x5c] sm:$0xf]
    %v562 = vld [vmem:[%s3 + $0x60] sm:$0xf]
    %v563 = vld [vmem:[%s3 + $0x64] sm:$0xf]
    %v564 = vld [vmem:[%s3 + $0x68] sm:$0xf]
    %v565 = vld [vmem:[%s3 + $0x6c] sm:$0xf]
    %v566 = vld [vmem:[%s3 + $0x70] sm:$0xf]
    %v567 = vld [vmem:[%s3 + $0x74] sm:$0xf]
    %v568 = vld [vmem:[%s3 + $0x78] sm:$0xf]
    %v569 = vld [vmem:[%s3 + $0x7c] sm:$0xf]
    %v570 = vld [vmem:[%s4] sm:$0x1]
    %v572 = vlaneseq
    %v573 = vshrl.u32 %v572, 7
    %v574 = vsub.s32 0, %v573
    %v575 = vrot.slane %v570, %v574
    %v609 = vunpack.c.l.b16 %v538
    %v610 = vunpack.c.l.b16 %v539
    %v611 = vunpack.c.l.b16 %v540
    %v612 = vunpack.c.l.b16 %v541
    %v613 = vunpack.c.l.b16 %v542
    %v614 = vunpack.c.l.b16 %v543
    %v615 = vunpack.c.l.b16 %v544
    %v616 = vunpack.c.l.b16 %v545
    %v617 = vunpack.c.l.b16 %v546
    %v618 = vunpack.c.l.b16 %v547
    %v619 = vunpack.c.l.b16 %v548
    %v620 = vunpack.c.l.b16 %v549
    %v621 = vunpack.c.l.b16 %v550
    %v622 = vunpack.c.l.b16 %v551
    %v623 = vunpack.c.l.b16 %v552
    %v624 = vunpack.c.l.b16 %v553
    %v625 = vunpack.c.l.b16 %v554
    %v626 = vunpack.c.l.b16 %v555
    %v627 = vunpack.c.l.b16 %v556
    %v628 = vunpack.c.l.b16 %v557
    %v629 = vunpack.c.l.b16 %v558
    %v630 = vunpack.c.l.b16 %v559
    %v631 = vunpack.c.l.b16 %v560
    %v632 = vunpack.c.l.b16 %v561
    %v633 = vunpack.c.l.b16 %v562
    %v634 = vunpack.c.l.b16 %v563
    %v635 = vunpack.c.l.b16 %v564
    %v636 = vunpack.c.l.b16 %v565
    %v637 = vunpack.c.l.b16 %v566
    %v638 = vunpack.c.l.b16 %v567
    %v639 = vunpack.c.l.b16 %v568
    %v640 = vunpack.c.l.b16 %v569
    %v641 = vpack.c.b16 %v610, %v609
    %v642 = vpack.c.b16 %v612, %v611
    %v643 = vpack.c.b16 %v614, %v613
    %v644 = vpack.c.b16 %v616, %v615
    %v645 = vpack.c.b16 %v618, %v617
    %v646 = vpack.c.b16 %v620, %v619
    %v647 = vpack.c.b16 %v622, %v621
    %v648 = vpack.c.b16 %v624, %v623
    %v649 = vpack.c.b16 %v626, %v625
    %v650 = vpack.c.b16 %v628, %v627
    %v651 = vpack.c.b16 %v630, %v629
    %v652 = vpack.c.b16 %v632, %v631
    %v653 = vpack.c.b16 %v634, %v633
    %v654 = vpack.c.b16 %v636, %v635
    %v655 = vpack.c.b16 %v638, %v637
    %v656 = vpack.c.b16 %v640, %v639
    %673 = vmatprep.subr.bf16.mxu0 0
    %674 = vmatpush1.bf16.msra.mxu0 %v648
    %675 = vmatprep.subr.bf16.mxu0 0
    %676 = vmatpush1.bf16.msra.mxu0 %v647
    %677 = vmatprep.subr.bf16.mxu0 0
    %678 = vmatpush1.bf16.msra.mxu0 %v646
    %679 = vmatprep.subr.bf16.mxu0 0
    %680 = vmatpush1.bf16.msra.mxu0 %v645
    %681 = vmatprep.subr.bf16.mxu0 0
    %682 = vmatpush1.bf16.msra.mxu0 %v644
    %683 = vmatprep.subr.bf16.mxu0 0
    %684 = vmatpush1.bf16.msra.mxu0 %v643
    %685 = vmatprep.subr.bf16.mxu0 0
    %686 = vmatpush1.bf16.msra.mxu0 %v642
    %687 = vmatprep.subr.bf16.mxu0 0
    %688 = vmatpush1.bf16.msra.mxu0 %v641
    %689 = vmatprep.subr.bf16.mxu0 0
    %690 = vmatpush2.bf16.msra.mxu0 %v656
    %691 = vmatprep.subr.bf16.mxu0 0
    %692 = vmatpush2.bf16.msra.mxu0 %v655
    %693 = vmatprep.subr.bf16.mxu0 0
    %694 = vmatpush2.bf16.msra.mxu0 %v654
    %695 = vmatprep.subr.bf16.mxu0 0
    %696 = vmatpush2.bf16.msra.mxu0 %v653
    %697 = vmatprep.subr.bf16.mxu0 0
    %698 = vmatpush2.bf16.msra.mxu0 %v652
    %699 = vmatprep.subr.bf16.mxu0 0
    %700 = vmatpush2.bf16.msra.mxu0 %v651
    %701 = vmatprep.subr.bf16.mxu0 0
    %702 = vmatpush2.bf16.msra.mxu0 %v650
    %703 = vmatprep.subr.bf16.mxu0 0
    %704 = vmatpush2.bf16.msra.mxu0 %v649
    %705 = vmatprep.mubr.bf16.mxu0 %v537
    %706 = vmatmul.mubr.bf16.gmra.mxu0 %v536
    %v707 = vpop.f32.mrf.mxu0
    %v708 = vadd.f32 %v575, %v707
    %v709 = vpop.f32.mrf.mxu0
    %v710 = vpop.f32.mrf.mxu0
    %v711 = vpop.f32.mrf.mxu0
    %712 = vdwg.mxu0
    %v713 = vpack.c.bf16 %v708, %v708
    %v714 = vld [vmem:[%s5] sm:$0xf]
    %v715 = vld [vmem:[%s5 + $0x4] sm:$0xf]
    %v716 = vld [vmem:[%s5 + $0x8] sm:$0xf]
    %v717 = vld [vmem:[%s5 + $0xc] sm:$0xf]
    %v718 = vld [vmem:[%s5 + $0x10] sm:$0xf]
    %v719 = vld [vmem:[%s5 + $0x14] sm:$0xf]
    %v720 = vld [vmem:[%s5 + $0x18] sm:$0xf]
    %v721 = vld [vmem:[%s5 + $0x1c] sm:$0xf]
    %v722 = vld [vmem:[%s6] sm:$0x1]
    %v724 = vlaneseq
    %v725 = vshrl.u32 %v724, 7
    %v726 = vsub.s32 0, %v725
    %v727 = vrot.slane %v722, %v726
    %v737 = vunpack.c.l.b16 %v714
    %v738 = vunpack.c.l.b16 %v715
    %v739 = vunpack.c.l.b16 %v716
    %v740 = vunpack.c.l.b16 %v717
    %v741 = vunpack.c.l.b16 %v718
    %v742 = vunpack.c.l.b16 %v719
    %v743 = vunpack.c.l.b16 %v720
    %v744 = vunpack.c.l.b16 %v721
    %v745 = vpack.c.b16 %v738, %v737
    %v746 = vpack.c.b16 %v740, %v739
    %v747 = vpack.c.b16 %v742, %v741
    %v748 = vpack.c.b16 %v744, %v743
    %vm753 = vcmask 523264
    %v755 = vsel %vm753, %v713, 0
    %757 = vmatprep.subr.bf16.mxu0 0
    %758 = vmatpush1.bf16.msra.mxu0 0
    %759 = vmatprep.subr.bf16.mxu0 0
    %760 = vmatpush1.bf16.msra.mxu0 0
    %761 = vmatprep.subr.bf16.mxu0 0
    %762 = vmatpush1.bf16.msra.mxu0 0
    %763 = vmatprep.subr.bf16.mxu0 0
    %764 = vmatpush1.bf16.msra.mxu0 0
    %765 = vmatprep.subr.bf16.mxu0 0
    %766 = vmatpush1.bf16.msra.mxu0 %v748
    %767 = vmatprep.subr.bf16.mxu0 0
    %768 = vmatpush1.bf16.msra.mxu0 %v747
    %769 = vmatprep.subr.bf16.mxu0 0
    %770 = vmatpush1.bf16.msra.mxu0 %v746
    %771 = vmatprep.subr.bf16.mxu0 0
    %772 = vmatpush1.bf16.msra.mxu0 %v745
    %773 = vmatprep.subr.bf16.mxu0 0
    %774 = vmatpush2.bf16.msra.mxu0 0
    %775 = vmatprep.subr.bf16.mxu0 0
    %776 = vmatpush2.bf16.msra.mxu0 0
    %777 = vmatprep.subr.bf16.mxu0 0
    %778 = vmatpush2.bf16.msra.mxu0 0
    %779 = vmatprep.subr.bf16.mxu0 0
    %780 = vmatpush2.bf16.msra.mxu0 0
    %781 = vmatprep.subr.bf16.mxu0 0
    %782 = vmatpush2.bf16.msra.mxu0 0
    %783 = vmatprep.subr.bf16.mxu0 0
    %784 = vmatpush2.bf16.msra.mxu0 0
    %785 = vmatprep.subr.bf16.mxu0 0
    %786 = vmatpush2.bf16.msra.mxu0 0
    %787 = vmatprep.subr.bf16.mxu0 0
    %788 = vmatpush2.bf16.msra.mxu0 0
    %789 = vmatprep.mubr.bf16.mxu0 0
    %790 = vmatmul.mubr.bf16.gmra.mxu0 %v755
    %v791 = vpop.f32.mrf.mxu0
    %v792 = vadd.f32 %v727, %v791
    %v793 = vpop.f32.mrf.mxu0
    %v794 = vpop.f32.mrf.mxu0
    %v795 = vpop.f32.mrf.mxu0
    %796 = vdwg.mxu0
    %797 = vst [vmem:[#allocation2] sm:$0x3] %v792
    // Predicated region
    $region30: #{net_forward.5} parent=1 // pred_check
      _
    $region31: #{net_forward.5} parent=1 // pred_check_branch
      %799 = sbr.rel (0) target = $region33
    $region32: #{net_forward.5} parent=1 // pred_region
      %s801 = ssub.s32 32, 32
      %802 = vsyncadd [#allocation3], %s801
      %s804 = sshll.u32 [#allocation2], 4
      %s805 = int_to_ptr.vmem [resolvable:$true] %s804
      %807 = dma.vmem_to_hbm [thread:$0]  %s805, 32, %s7, [#allocation3]
    $region33: #{net_forward.5} parent=1 // pred_fallthru
      _
    // Predicated region
    $region34: #{net_forward.5} parent=1 // pred_check
      _
    $region35: #{net_forward.5} parent=1 // pred_check_branch
      %809 = sbr.rel (0) target = $region37
    $region36: #{net_forward.5} parent=1 // pred_region
      %810 = dma.done [#allocation3], 32
    $region37: #{net_forward.5} parent=1 // pred_fallthru
      _
    %811 = vsyncpa [#allocation3], 1

</llo_original>
